<compile_context>
chip_gen: v6e
topology: v6e:2x2x1
jax: 0.10.0
libtpu: 0.0.40
codegen_flags: <defaults>
</compile_context>

<pallas_src>
import functools

import jax
import jax.numpy as jnp
from jax.experimental import pallas as pl
from jax.experimental.pallas import tpu as pltpu


def _round_up(v, m):
    return (v + m - 1) // m * m


@functools.lru_cache(maxsize=1)
def _vmem_limit_bytes():
    cap = 128 * 1024 * 1024
    try:
        cap = int(pltpu.get_tpu_info().vmem_capacity_bytes)
    except Exception:
        pass
    # ~96 MiB on 128 MiB chips (v5e/v6e), ~48 MiB on 64 MiB chips (v7x).
    return int(min(100 * 1024 * 1024, (cap * 3) // 4))


# -----------------------------------------------------------------------------
# Kernel 1 (per GIN layer): tiled aggregation + MLP + masked BN partial stats.
#   grid = (row blocks [parallel], K blocks of A [arbitrary])
# -----------------------------------------------------------------------------
def _gin_layer_kernel(a_ref, x_ref, w1_ref, b1_ref, w2_ref, b2_ref, wm_ref,
                      h_ref, stats_ref, acc_ref):
    k = pl.program_id(1)

    @pl.when(k == 0)
    def _():
        acc_ref[...] = jnp.zeros_like(acc_ref)

    # (A + I) @ x accumulated over K blocks (bf16 operands, f32 accumulate).
    acc_ref[...] += jnp.dot(a_ref[...], x_ref[...],
                            preferred_element_type=jnp.float32)

    @pl.when(k == pl.num_programs(1) - 1)
    def _():
        agg = acc_ref[...].astype(jnp.bfloat16)
        # GIN MLP: Linear -> ReLU -> Linear, then F.relu(conv(...))
        h1 = jnp.dot(agg, w1_ref[...],
                     preferred_element_type=jnp.float32) + b1_ref[...]
        h1 = jnp.maximum(h1, 0.0).astype(jnp.bfloat16)
        h2 = jnp.dot(h1, w2_ref[...],
                     preferred_element_type=jnp.float32) + b2_ref[...]
        h2 = jnp.maximum(h2, 0.0)
        h_ref[...] = h2

        # Masked BN partial statistics (wm = valid_mask / N_valid).
        wm = wm_ref[...]                                     # [TM, 1] f32
        ps = jnp.sum(h2 * wm, axis=0, keepdims=True)         # sum(x)/N  partial
        pss = jnp.sum(h2 * h2 * wm, axis=0, keepdims=True)   # sum(x^2)/N partial
        pad = jnp.zeros((6, h2.shape[1]), jnp.float32)
        stats_ref[0] = jnp.concatenate([ps, pss, pad], axis=0)


# -----------------------------------------------------------------------------
# Kernel 2 (per GIN layer): reduce BN stats, normalize, accumulate add-pool.
#   grid = (row blocks [arbitrary])  -- pooled output is a resident accumulator.
# -----------------------------------------------------------------------------
def _bn_pool_kernel(h_ref, stats_ref, gamma_ref, beta_ref, pool_ref,
                    hbn_ref, pooled_ref):
    r = pl.program_id(0)
    stats = stats_ref[...]                                       # [NR, 8, DP]
    mean = jnp.sum(stats[:, 0, :], axis=0, keepdims=True)        # [1, DP]
    meansq = jnp.sum(stats[:, 1, :], axis=0, keepdims=True)
    var = meansq - mean * mean                                   # biased var
    scale = gamma_ref[...] * jax.lax.rsqrt(var + 1e-5)
    shift = beta_ref[...] - mean * scale

    h = h_ref[...] * scale + shift
    h_bf = h.astype(jnp.bfloat16)
    hbn_ref[...] = h_bf

    @pl.when(r == 0)
    def _():
        pooled_ref[...] = jnp.zeros_like(pooled_ref)

    # global_add_pool == P @ h  (padded-node columns of P are zero).
    pooled_ref[...] += jnp.dot(pool_ref[...], h_bf,
                               preferred_element_type=jnp.float32)


# -----------------------------------------------------------------------------
# Kernel 3: projection head + L2 normalize (tiny, gridless).
# wp1 is consumed as L row-blocks, so no 32-wide concatenation is needed.
# -----------------------------------------------------------------------------
def _proj_head_kernel(pooled_ref, wp1_ref, bp1_ref, wp2_ref, bp2_ref,
                      y_ref, emb_ref, *, num_layers, dp):
    hp = jnp.zeros(y_ref.shape, jnp.float32) + bp1_ref[...]
    sq = jnp.zeros((y_ref.shape[0], 1), jnp.float32)
    for i in range(num_layers):
        p_i = pooled_ref[i]                                   # [GP, DP] f32
        hp = hp + jnp.dot(p_i, wp1_ref[i],
                          preferred_element_type=jnp.float32)
        sq = sq + jnp.sum(p_i * p_i, axis=1, keepdims=True)
    hp = jnp.maximum(hp, 0.0)
    y = jnp.dot(hp, wp2_ref[...],
                preferred_element_type=jnp.float32) + bp2_ref[...]

    y_n = jnp.sqrt(jnp.sum(y * y, axis=1, keepdims=True))
    y_ref[...] = y / jnp.maximum(y_n, 1e-12)

    inv_emb = 1.0 / jnp.maximum(jnp.sqrt(sq), 1e-12)
    for i in range(num_layers):
        emb_ref[:, i * dp:(i + 1) * dp] = pooled_ref[i] * inv_emb


# -----------------------------------------------------------------------------
# Jitted padded forward (compiles once per (NP, EP, GP, dims) bucket).
# -----------------------------------------------------------------------------
@functools.partial(jax.jit, static_argnames=("tile_n", "gp"))
def _forward_padded(x_p, src_p, dst_p, batch_p, wmask, pparams, *, tile_n, gp):
    NP = x_p.shape[0]
    L = len(pparams["w1"])
    DP = pparams["w2"][0].shape[0]
    LDP = L * DP
    TM = TK = tile_n
    NR = NP // TM
    NK = NP // TK
    vmem_limit = _vmem_limit_bytes()

    # Dense (A + I) in bf16 (entries are exact small integers).
    a_hat = (jnp.zeros((NP, NP), jnp.float32).at[dst_p, src_p].add(1.0)
             + jnp.eye(NP, dtype=jnp.float32)).astype(jnp.bfloat16)
    # One-hot graph membership; padded nodes have batch id == gp -> all-zero column.
    pool = (batch_p[None, :] ==
            jnp.arange(gp, dtype=batch_p.dtype)[:, None]).astype(jnp.bfloat16)

    h = x_p
    pooled = []
    for i in range(L):
        fin = h.shape[1]
        h_pre, stats = pl.pallas_call(
            _gin_layer_kernel,
            out_shape=(jax.ShapeDtypeStruct((NP, DP), jnp.float32),
                       jax.ShapeDtypeStruct((NR, 8, DP), jnp.float32)),
            grid_spec=pltpu.PrefetchScalarGridSpec(
                num_scalar_prefetch=0,
                grid=(NR, NK),
                in_specs=[
                    pl.BlockSpec((TM, TK), lambda r, k: (r, k)),   # A tile
                    pl.BlockSpec((TK, fin), lambda r, k: (k, 0)),  # x K-rows
                    pl.BlockSpec((fin, DP), lambda r, k: (0, 0)),  # W1
                    pl.BlockSpec((1, DP), lambda r, k: (0, 0)),    # b1
                    pl.BlockSpec((DP, DP), lambda r, k: (0, 0)),   # W2
                    pl.BlockSpec((1, DP), lambda r, k: (0, 0)),    # b2
                    pl.BlockSpec((TM, 1), lambda r, k: (r, 0)),    # mask / N
                ],
                out_specs=(
                    pl.BlockSpec((TM, DP), lambda r, k: (r, 0)),
                    pl.BlockSpec((1, 8, DP), lambda r, k: (r, 0, 0)),
                ),
                scratch_shapes=[pltpu.VMEM((TM, fin), jnp.float32)],
            ),
            compiler_params=pltpu.CompilerParams(
                dimension_semantics=("parallel", "arbitrary"),
                vmem_limit_bytes=vmem_limit),
        )(a_hat, h, pparams["w1"][i], pparams["b1"][i],
          pparams["w2"][i], pparams["b2"][i], wmask)

        h, pooled_i = pl.pallas_call(
            _bn_pool_kernel,
            out_shape=(jax.ShapeDtypeStruct((NP, DP), jnp.bfloat16),
                       jax.ShapeDtypeStruct((gp, DP), jnp.float32)),
            grid_spec=pltpu.PrefetchScalarGridSpec(
                num_scalar_prefetch=0,
                grid=(NR,),
                in_specs=[
                    pl.BlockSpec((TM, DP), lambda r: (r, 0)),      # h_pre
                    pl.BlockSpec((NR, 8, DP), lambda r: (0, 0, 0)),
                    pl.BlockSpec((1, DP), lambda r: (0, 0)),       # gamma
                    pl.BlockSpec((1, DP), lambda r: (0, 0)),       # beta
                    pl.BlockSpec((gp, TM), lambda r: (0, r)),      # pool cols
                ],
                out_specs=(
                    pl.BlockSpec((TM, DP), lambda r: (r, 0)),
                    pl.BlockSpec((gp, DP), lambda r: (0, 0)),      # accumulator
                ),
            ),
            compiler_params=pltpu.CompilerParams(
                dimension_semantics=("arbitrary",),
                vmem_limit_bytes=vmem_limit),
        )(h_pre, stats, pparams["gamma"][i], pparams["beta"][i], pool)
        pooled.append(pooled_i)

    pooled_stack = jnp.stack(pooled, axis=0)                  # [L, GP, DP]
    vmem_full = pl.BlockSpec(memory_space=pltpu.MemorySpace.VMEM)
    y_p, emb_p = pl.pallas_call(
        functools.partial(_proj_head_kernel, num_layers=L, dp=DP),
        out_shape=(jax.ShapeDtypeStruct((gp, LDP), jnp.float32),
                   jax.ShapeDtypeStruct((gp, LDP), jnp.float32)),
        in_specs=[vmem_full] * 5,
        out_specs=(vmem_full, vmem_full),
        compiler_params=pltpu.CompilerParams(vmem_limit_bytes=vmem_limit),
    )(pooled_stack, pparams["wp1"], pparams["bp1"],
      pparams["wp2"], pparams["bp2"])
    return y_p, emb_p


# -----------------------------------------------------------------------------
# Public wrappers (Encoder_Core.in_forward / forward equivalents).
# -----------------------------------------------------------------------------
def encoder_core_in_forward(x, edge_index, batch, num_graphs, pparams,
                            *, num_gc_layers, dim):
    if x is None:
        x = jnp.ones((batch.shape[0], 1), jnp.float32)
    N, F_in = x.shape
    E = edge_index.shape[1]
    L, D = num_gc_layers, dim
    DP = pparams["gamma"][0].shape[1]
    FP = pparams["w1"][0].shape[0]

    # Fixed-size buckets so the jitted padded forward compiles once per bucket.
    tile_n = 256 if N <= 256 else 512
    NP = _round_up(max(N, 1), tile_n)
    EP = _round_up(max(E, 1), 256)
    GP = _round_up(max(num_graphs, 1), 8)

    x_p = jnp.zeros((NP, FP), jnp.bfloat16).at[:N, :F_in].set(
        x.astype(jnp.bfloat16))
    # Padding edges are self-loops on a padded node -> no effect on valid rows.
    src_p = jnp.full((EP,), NP - 1, jnp.int32).at[:E].set(
        edge_index[0].astype(jnp.int32))
    dst_p = jnp.full((EP,), NP - 1, jnp.int32).at[:E].set(
        edge_index[1].astype(jnp.int32))
    batch_p = jnp.full((NP,), GP, jnp.int32).at[:N].set(batch.astype(jnp.int32))
    # BN weights: 1/N for valid nodes, 0 for padded nodes.
    wmask = ((jnp.arange(NP) < N).astype(jnp.float32) / float(N)).reshape(NP, 1)

    y_p, emb_p = _forward_padded(x_p, src_p, dst_p, batch_p, wmask, pparams,
                                 tile_n=tile_n, gp=GP)

    # Strip lane padding (each layer's D real channels live at offset j*DP).
    y = jnp.concatenate([y_p[:num_graphs, j * DP:j * DP + D]
                         for j in range(L)], axis=1)
    emb = jnp.concatenate([emb_p[:num_graphs, j * DP:j * DP + D]
                           for j in range(L)], axis=1)
    return y, emb


def encoder_core_forward(loader, pparams, *, num_gc_layers, dim):
    rets, ys = [], []
    for data in loader:
        x, edge_index, batch, y_label, num_graphs = (
            data["x"], data["edge_index"], data["batch"], data["y"],
            data["num_graphs"])
        if x is None:
            x = jnp.ones((batch.shape[0], 1), jnp.float32)
        _, emb = encoder_core_in_forward(
            x, edge_index, batch, num_graphs, pparams,
            num_gc_layers=num_gc_layers, dim=dim)
        rets.append(emb)
        ys.append(y_label)
    return jnp.concatenate(rets, axis=0), jnp.concatenate(ys, axis=0)


# -----------------------------------------------------------------------------
# Parameters: torch-like init + one-time padding to lane-dense kernel layout.
# -----------------------------------------------------------------------------
def init_params(key, num_features, dim, num_gc_layers):
    LD = num_gc_layers * dim
    ks = jax.random.split(key, 8)
    s = 0.1
    return {
        "w1_first": jax.random.normal(ks[0], (num_features, dim), jnp.float32) * s,
        "b1_first": jnp.zeros((1, dim), jnp.float32),
        "w1_rest": jax.random.normal(ks[1], (num_gc_layers - 1, dim, dim), jnp.float32) * s,
        "b1_rest": jnp.zeros((num_gc_layers - 1, 1, dim), jnp.float32),
        "w2": jax.random.normal(ks[2], (num_gc_layers, dim, dim), jnp.float32) * s,
        "b2": jnp.zeros((num_gc_layers, 1, dim), jnp.float32),
        "bn_gamma": jnp.ones((num_gc_layers, 1, dim), jnp.float32),
        "bn_beta": jnp.zeros((num_gc_layers, 1, dim), jnp.float32),
        "wp1": jax.random.normal(ks[3], (LD, LD), jnp.float32) * s,
        "bp1": jnp.zeros((1, LD), jnp.float32),
        "wp2": jax.random.normal(ks[4], (LD, LD), jnp.float32) * s,
        "bp2": jnp.zeros((1, LD), jnp.float32),
    }


def prepare_params(params, *, num_features, dim, num_gc_layers):
    """Zero-pad feature dims to 128 lanes; bf16 weights for MXU operands."""
    L, D = num_gc_layers, dim
    DP = _round_up(D, 128)
    FP = _round_up(num_features, 128)
    LDP = L * DP

    def pad2(a, r, c, dtype=jnp.float32):
        out = jnp.zeros((r, c), dtype)
        return out.at[:a.shape[0], :a.shape[1]].set(a.astype(dtype))

    w1, b1, w2, b2, gamma, beta = [], [], [], [], [], []
    for i in range(L):
        if i == 0:
            w1.append(pad2(params["w1_first"], FP, DP, jnp.bfloat16))
            b1.append(pad2(params["b1_first"], 1, DP))
        else:
            w1.append(pad2(params["w1_rest"][i - 1], DP, DP, jnp.bfloat16))
            b1.append(pad2(params["b1_rest"][i - 1], 1, DP))
        w2.append(pad2(params["w2"][i], DP, DP, jnp.bfloat16))
        b2.append(pad2(params["b2"][i], 1, DP))
        gamma.append(pad2(params["bn_gamma"][i], 1, DP))
        beta.append(pad2(params["bn_beta"][i], 1, DP))

    wp1 = jnp.zeros((L, DP, LDP), jnp.float32)   # row-block split of proj wp1
    wp2 = jnp.zeros((LDP, LDP), jnp.float32)
    bp1 = jnp.zeros((1, LDP), jnp.float32)
    bp2 = jnp.zeros((1, LDP), jnp.float32)
    for i in range(L):
        for j in range(L):
            wp1 = wp1.at[i, :D, j * DP:j * DP + D].set(
                params["wp1"][i * D:(i + 1) * D, j * D:(j + 1) * D])
            wp2 = wp2.at[i * DP:i * DP + D, j * DP:j * DP + D].set(
                params["wp2"][i * D:(i + 1) * D, j * D:(j + 1) * D])
        bp1 = bp1.at[0, i * DP:i * DP + D].set(params["bp1"][0, i * D:(i + 1) * D])
        bp2 = bp2.at[0, i * DP:i * DP + D].set(params["bp2"][0, i * D:(i + 1) * D])

    return {"w1": w1, "b1": b1, "w2": w2, "b2": b2,
            "gamma": gamma, "beta": beta,
            "wp1": wp1, "bp1": bp1, "wp2": wp2, "bp2": bp2}


# -----------------------------------------------------------------------------
# Pure-JAX reference with the SAME bf16 cast points (validates the kernels).
# -----------------------------------------------------------------------------
def _reference_in_forward(x, edge_index, batch, num_graphs, params,
                          *, num_gc_layers, dim):
    bf = jnp.bfloat16
    hi = jax.lax.Precision.HIGHEST
    N = x.shape[0]
    A = (jnp.zeros((N, N), jnp.float32).at[edge_index[1], edge_index[0]].add(1.0)
         + jnp.eye(N, dtype=jnp.float32)).astype(bf)
    pool = (batch[None, :] == jnp.arange(num_graphs)[:, None]).astype(bf)
    h = x.astype(bf)
    pooled = []
    for i in range(num_gc_layers):
        agg = jnp.dot(A, h, preferred_element_type=jnp.float32)
        w1 = params["w1_first"] if i == 0 else params["w1_rest"][i - 1]
        b1 = params["b1_first"] if i == 0 else params["b1_rest"][i - 1]
        t = jnp.dot(agg.astype(bf), w1.astype(bf),
                    preferred_element_type=jnp.float32) + b1
        t = jnp.maximum(t, 0.0)
        t = jnp.dot(t.astype(bf), params["w2"][i].astype(bf),
                    preferred_element_type=jnp.float32) + params["b2"][i]
        t = jnp.maximum(t, 0.0)
        mean = jnp.mean(t, axis=0, keepdims=True)
        var = jnp.mean(t * t, axis=0, keepdims=True) - mean * mean
        t = (t - mean) * jax.lax.rsqrt(var + 1e-5) * params["bn_gamma"][i] \
            + params["bn_beta"][i]
        h = t.astype(bf)
        pooled.append(jnp.dot(pool, h, preferred_element_type=jnp.float32))
    xcat = jnp.concatenate(pooled, axis=1)
    hp = jnp.maximum(jnp.dot(xcat, params["wp1"], precision=hi) + params["bp1"], 0.0)
    y = jnp.dot(hp, params["wp2"], precision=hi) + params["bp2"]

    def l2n(v):
        n = jnp.sqrt(jnp.sum(v * v, axis=1, keepdims=True))
        return v / jnp.maximum(n, 1e-12)
    return l2n(y), l2n(xcat)


if __name__ == "__main__":
    # Small synthetic graph mini-batch: 2 graphs x 8 nodes, 4 input features,
    # dim = 32, num_gc_layers = 3.
    num_features, dim, num_gc_layers = 4, 32, 3
    nodes_per_graph, num_graphs = 8, 2
    N = nodes_per_graph * num_graphs

    key = jax.random.PRNGKey(0)
    k_x, k_p = jax.random.split(key)

    x = jax.random.normal(k_x, (N, num_features), jnp.float32)
    batch = jnp.repeat(jnp.arange(num_graphs), nodes_per_graph)

    # ring graph inside each component, edges in both directions
    src_list, dst_list = [], []
    for g in range(num_graphs):
        base = g * nodes_per_graph
        for i in range(nodes_per_graph):
            a = base + i
            b = base + (i + 1) % nodes_per_graph
            src_list += [a, b]
            dst_list += [b, a]
    edge_index = jnp.array([src_list, dst_list], dtype=jnp.int32)
    y_labels = jnp.arange(num_graphs, dtype=jnp.float32)

    params = init_params(k_p, num_features, dim, num_gc_layers)
    pparams = prepare_params(params, num_features=num_features, dim=dim,
                             num_gc_layers=num_gc_layers)

    # "loader" with a single mini-batch (forward loops and concatenates)
    loader = [{"x": x, "edge_index": edge_index, "batch": batch,
               "y": y_labels, "num_graphs": num_graphs}]

    ret, y_out = encoder_core_forward(loader, pparams,
                                      num_gc_layers=num_gc_layers, dim=dim)
    jax.block_until_ready((ret, y_out))
    assert ret.shape == (num_graphs, num_gc_layers * dim)
    assert y_out.shape == (num_graphs,)
    assert bool(jnp.all(jnp.isfinite(ret)))

    # Correctness check against a pure-JAX reference with identical bf16 casts.
    y_k, emb_k = encoder_core_in_forward(x, edge_index, batch, num_graphs,
                                         pparams, num_gc_layers=num_gc_layers,
                                         dim=dim)
    y_r, emb_r = _reference_in_forward(x, edge_index, batch, num_graphs, params,
                                       num_gc_layers=num_gc_layers, dim=dim)
    jax.block_until_ready((y_k, emb_k, y_r, emb_r))
    assert float(jnp.max(jnp.abs(y_k - y_r))) < 2e-2
    assert float(jnp.max(jnp.abs(emb_k - emb_r))) < 2e-2

    print("KERNEL_OK")
</pallas_src>

<mosaic_0001>
module attributes {stable_mosaic.version = 11 : i64} {
  func.func private @main(%arg0: i32) attributes {dimension_semantics = [#tpu.dimension_semantics<core_parallel>], iteration_bounds = array<i64: 2>, tpu.core_type = #tpu.core_type<sc_scalar_subcore>, window_params = []} {
    return
  }
}

module attributes {stable_mosaic.version = 11 : i64} {
  func.func private @main(%arg0: i32) attributes {dimension_semantics = [#tpu.dimension_semantics<core_parallel>], iteration_bounds = array<i64: 2>, tpu.core_type = #tpu.core_type<sc_scalar_subcore>, window_params = []} {
    return
  }
}

module attributes {stable_mosaic.version = 11 : i64} {
  func.func @_gin_layer_kernel(%arg0: i32, %arg1: i32, %arg2: memref<256x256xbf16, #tpu.memory_space<vmem>>, %arg3: memref<256x128xbf16, #tpu.memory_space<vmem>>, %arg4: memref<128x128xbf16, #tpu.memory_space<vmem>>, %arg5: memref<1x128xf32, #tpu.memory_space<vmem>>, %arg6: memref<128x128xbf16, #tpu.memory_space<vmem>>, %arg7: memref<1x128xf32, #tpu.memory_space<vmem>>, %arg8: memref<256x1xf32, #tpu.memory_space<vmem>>, %arg9: memref<256x128xf32, #tpu.memory_space<vmem>>, %arg10: memref<1x8x128xf32, #tpu.memory_space<vmem>>, %arg11: memref<256x128xf32, #tpu.memory_space<vmem>>) attributes {dimension_semantics = [#tpu.dimension_semantics<parallel>, #tpu.dimension_semantics<arbitrary>], iteration_bounds = array<i64: 1, 1>, scalar_prefetch = 0 : i64, scratch_operands = 1 : i64, tpu.core_type = #tpu.core_type<tc>, window_params = [{transform_indices = @transform_0, window_bounds = array<i64: 256, 256>}, {transform_indices = @transform_1, window_bounds = array<i64: 256, 128>}, {pipeline_mode = #tpu.pipeline_mode<synchronous>, transform_indices = @transform_2, window_bounds = array<i64: 128, 128>}, {pipeline_mode = #tpu.pipeline_mode<synchronous>, transform_indices = @transform_3, window_bounds = array<i64: 1, 128>}, {pipeline_mode = #tpu.pipeline_mode<synchronous>, transform_indices = @transform_4, window_bounds = array<i64: 128, 128>}, {pipeline_mode = #tpu.pipeline_mode<synchronous>, transform_indices = @transform_5, window_bounds = array<i64: 1, 128>}, {transform_indices = @transform_6, window_bounds = array<i64: 256, 1>}, {transform_indices = @transform_7, window_bounds = array<i64: 256, 128>}, {transform_indices = @transform_8, window_bounds = array<i64: 1, 8, 128>}]} {
    %c0_i32 = arith.constant 0 : i32
    %0 = arith.cmpi eq, %arg1, %c0_i32 : i32
    %1 = arith.extui %0 : i1 to i32
    %c0_i32_0 = arith.constant 0 : i32
    %2 = arith.cmpi ne, %1, %c0_i32_0 : i32
    scf.if %2 {
      %cst_10 = arith.constant 0.000000e+00 : f32
      %12 = vector.broadcast %cst_10 : f32 to vector<256x128xf32>
      %c0_11 = arith.constant 0 : index
      %c0_12 = arith.constant 0 : index
      %13 = vector.load %arg11[%c0_11, %c0_12] : memref<256x128xf32, #tpu.memory_space<vmem>>, vector<256x128xf32>
      tpu.vector_store %arg11[%c0_11, %c0_12], %12 {strides = array<i32>} : memref<256x128xf32, #tpu.memory_space<vmem>>, vector<256x128xf32>,
    } else {
    }
    %c0 = arith.constant 0 : index
    %c0_1 = arith.constant 0 : index
    %3 = vector.load %arg11[%c0, %c0_1] : memref<256x128xf32, #tpu.memory_space<vmem>>, vector<256x128xf32>
    %c0_2 = arith.constant 0 : index
    %c0_3 = arith.constant 0 : index
    %4 = vector.load %arg2[%c0_2, %c0_3] : memref<256x256xbf16, #tpu.memory_space<vmem>>, vector<256x256xbf16>
    %c0_4 = arith.constant 0 : index
    %c0_5 = arith.constant 0 : index
    %5 = vector.load %arg3[%c0_4, %c0_5] : memref<256x128xbf16, #tpu.memory_space<vmem>>, vector<256x128xbf16>
    %cst = arith.constant dense<0.000000e+00> : vector<256x128xf32>
    %6 = tpu.matmul %4, %5, %cst {dimension_numbers = #tpu.dot_dimension_numbers<[1], [0], [0], [1], [0, 0, 1, 1], [], []>} : vector<256x256xbf16>, vector<256x128xbf16>, vector<256x128xf32> -> vector<256x128xf32>
    %7 = arith.addf %3, %6 : vector<256x128xf32>
    %c0_6 = arith.constant 0 : index
    %c0_7 = arith.constant 0 : index
    %8 = vector.load %arg11[%c0_6, %c0_7] : memref<256x128xf32, #tpu.memory_space<vmem>>, vector<256x128xf32>
    tpu.vector_store %arg11[%c0_6, %c0_7], %7 {strides = array<i32>} : memref<256x128xf32, #tpu.memory_space<vmem>>, vector<256x128xf32>,
    %c0_i32_8 = arith.constant 0 : i32
    %9 = arith.cmpi eq, %arg1, %c0_i32_8 : i32
    %10 = arith.extui %9 : i1 to i32
    %c0_i32_9 = arith.constant 0 : i32
    %11 = arith.cmpi ne, %10, %c0_i32_9 : i32
    scf.if %11 {
      %c0_10 = arith.constant 0 : index
      %c0_11 = arith.constant 0 : index
      %12 = vector.load %arg11[%c0_10, %c0_11] : memref<256x128xf32, #tpu.memory_space<vmem>>, vector<256x128xf32>
      %13 = arith.truncf %12 : vector<256x128xf32> to vector<256x128xbf16>
      %c0_12 = arith.constant 0 : index
      %c0_13 = arith.constant 0 : index
      %14 = vector.load %arg4[%c0_12, %c0_13] : memref<128x128xbf16, #tpu.memory_space<vmem>>, vector<128x128xbf16>
      %cst_14 = arith.constant dense<0.000000e+00> : vector<256x128xf32>
      %15 = tpu.matmul %13, %14, %cst_14 {dimension_numbers = #tpu.dot_dimension_numbers<[1], [0], [0], [1], [0, 0, 1, 1], [], []>} : vector<256x128xbf16>, vector<128x128xbf16>, vector<256x128xf32> -> vector<256x128xf32>
      %c0_15 = arith.constant 0 : index
      %c0_16 = arith.constant 0 : index
      %16 = vector.load %arg5[%c0_15, %c0_16] : memref<1x128xf32, #tpu.memory_space<vmem>>, vector<1x128xf32>
      %17 = vector.broadcast %16 : vector<1x128xf32> to vector<256x128xf32>
      %18 = arith.addf %15, %17 : vector<256x128xf32>
      %cst_17 = arith.constant 0.000000e+00 : f32
      %19 = vector.broadcast %cst_17 : f32 to vector<256x128xf32>
      %20 = arith.maximumf %18, %19 : vector<256x128xf32>
      %21 = arith.truncf %20 : vector<256x128xf32> to vector<256x128xbf16>
      %c0_18 = arith.constant 0 : index
      %c0_19 = arith.constant 0 : index
      %22 = vector.load %arg6[%c0_18, %c0_19] : memref<128x128xbf16, #tpu.memory_space<vmem>>, vector<128x128xbf16>
      %cst_20 = arith.constant dense<0.000000e+00> : vector<256x128xf32>
      %23 = tpu.matmul %21, %22, %cst_20 {dimension_numbers = #tpu.dot_dimension_numbers<[1], [0], [0], [1], [0, 0, 1, 1], [], []>} : vector<256x128xbf16>, vector<128x128xbf16>, vector<256x128xf32> -> vector<256x128xf32>
      %c0_21 = arith.constant 0 : index
      %c0_22 = arith.constant 0 : index
      %24 = vector.load %arg7[%c0_21, %c0_22] : memref<1x128xf32, #tpu.memory_space<vmem>>, vector<1x128xf32>
      %25 = vector.broadcast %24 : vector<1x128xf32> to vector<256x128xf32>
      %26 = arith.addf %23, %25 : vector<256x128xf32>
      %cst_23 = arith.constant 0.000000e+00 : f32
      %27 = vector.broadcast %cst_23 : f32 to vector<256x128xf32>
      %28 = arith.maximumf %26, %27 : vector<256x128xf32>
      %c0_24 = arith.constant 0 : index
      %c0_25 = arith.constant 0 : index
      %29 = vector.load %arg9[%c0_24, %c0_25] : memref<256x128xf32, #tpu.memory_space<vmem>>, vector<256x128xf32>
      tpu.vector_store %arg9[%c0_24, %c0_25], %28 {strides = array<i32>} : memref<256x128xf32, #tpu.memory_space<vmem>>, vector<256x128xf32>,
      %c0_26 = arith.constant 0 : index
      %c0_27 = arith.constant 0 : index
      %30 = vector.load %arg8[%c0_26, %c0_27] : memref<256x1xf32, #tpu.memory_space<vmem>>, vector<256x1xf32>
      %31 = vector.broadcast %30 : vector<256x1xf32> to vector<256x128xf32>
      %32 = arith.mulf %28, %31 : vector<256x128xf32>
      %cst_28 = arith.constant dense<0.000000e+00> : vector<128xf32>
      %33 = vector.multi_reduction <add>, %32, %cst_28 [0] : vector<256x128xf32> to vector<128xf32>
      %34 = vector.shape_cast %33 : vector<128xf32> to vector<1x128xf32>
      %35 = arith.mulf %28, %28 : vector<256x128xf32>
      %36 = vector.broadcast %30 : vector<256x1xf32> to vector<256x128xf32>
      %37 = arith.mulf %35, %36 : vector<256x128xf32>
      %cst_29 = arith.constant dense<0.000000e+00> : vector<128xf32>
      %38 = vector.multi_reduction <add>, %37, %cst_29 [0] : vector<256x128xf32> to vector<128xf32>
      %39 = vector.shape_cast %38 : vector<128xf32> to vector<1x128xf32>
      %cst_30 = arith.constant 0.000000e+00 : f32
      %40 = vector.broadcast %cst_30 : f32 to vector<6x128xf32>
      %41 = tpu.concatenate %34, %39, %40 in 0 : vector<1x128xf32>, vector<1x128xf32>, vector<6x128xf32> -> vector<8x128xf32>
      %c0_31 = arith.constant 0 : index
      %c0_32 = arith.constant 0 : index
      %c0_33 = arith.constant 0 : index
      %42 = vector.load %arg10[%c0_31, %c0_32, %c0_33] : memref<1x8x128xf32, #tpu.memory_space<vmem>>, vector<1x8x128xf32>
      %43 = vector.shape_cast %42 : vector<1x8x128xf32> to vector<8x128xf32>
      %44 = vector.shape_cast %41 : vector<8x128xf32> to vector<1x8x128xf32>
      tpu.vector_store %arg10[%c0_31, %c0_32, %c0_33], %44 {strides = array<i32>} : memref<1x8x128xf32, #tpu.memory_space<vmem>>, vector<1x8x128xf32>,
    } else {
    }
    return
  }
  func.func @transform_0(%arg0: i32, %arg1: i32) -> (i32, i32) {
    %c0_i32 = arith.constant 0 : i32
    return %arg0, %arg1 : i32, i32
  }
  func.func @transform_1(%arg0: i32, %arg1: i32) -> (i32, i32) {
    %c0_i32 = arith.constant 0 : i32
    %c0_i32_0 = arith.constant 0 : i32
    return %arg1, %c0_i32 : i32, i32
  }
  func.func @transform_2(%arg0: i32, %arg1: i32) -> (i32, i32) {
    %c0_i32 = arith.constant 0 : i32
    %c0_i32_0 = arith.constant 0 : i32
    %c0_i32_1 = arith.constant 0 : i32
    return %c0_i32, %c0_i32_0 : i32, i32
  }
  func.func @transform_3(%arg0: i32, %arg1: i32) -> (i32, i32) {
    %c0_i32 = arith.constant 0 : i32
    %c0_i32_0 = arith.constant 0 : i32
    %c0_i32_1 = arith.constant 0 : i32
    return %c0_i32, %c0_i32_0 : i32, i32
  }
  func.func @transform_4(%arg0: i32, %arg1: i32) -> (i32, i32) {
    %c0_i32 = arith.constant 0 : i32
    %c0_i32_0 = arith.constant 0 : i32
    %c0_i32_1 = arith.constant 0 : i32
    return %c0_i32, %c0_i32_0 : i32, i32
  }
  func.func @transform_5(%arg0: i32, %arg1: i32) -> (i32, i32) {
    %c0_i32 = arith.constant 0 : i32
    %c0_i32_0 = arith.constant 0 : i32
    %c0_i32_1 = arith.constant 0 : i32
    return %c0_i32, %c0_i32_0 : i32, i32
  }
  func.func @transform_6(%arg0: i32, %arg1: i32) -> (i32, i32) {
    %c0_i32 = arith.constant 0 : i32
    %c0_i32_0 = arith.constant 0 : i32
    return %arg0, %c0_i32 : i32, i32
  }
  func.func @transform_7(%arg0: i32, %arg1: i32) -> (i32, i32) {
    %c0_i32 = arith.constant 0 : i32
    %c0_i32_0 = arith.constant 0 : i32
    return %arg0, %c0_i32 : i32, i32
  }
  func.func @transform_8(%arg0: i32, %arg1: i32) -> (i32, i32, i32) {
    %c0_i32 = arith.constant 0 : i32
    %c0_i32_0 = arith.constant 0 : i32
    %c0_i32_1 = arith.constant 0 : i32
    return %arg0, %c0_i32, %c0_i32_0 : i32, i32, i32
  }
}

module attributes {stable_mosaic.version = 11 : i64} {
  func.func @_bn_pool_kernel(%arg0: i32, %arg1: memref<256x128xf32, #tpu.memory_space<vmem>>, %arg2: memref<1x8x128xf32, #tpu.memory_space<vmem>>, %arg3: memref<1x128xf32, #tpu.memory_space<vmem>>, %arg4: memref<1x128xf32, #tpu.memory_space<vmem>>, %arg5: memref<8x256xbf16, #tpu.memory_space<vmem>>, %arg6: memref<256x128xbf16, #tpu.memory_space<vmem>>, %arg7: memref<8x128xf32, #tpu.memory_space<vmem>>) attributes {dimension_semantics = [#tpu.dimension_semantics<arbitrary>], iteration_bounds = array<i64: 1>, scalar_prefetch = 0 : i64, scratch_operands = 0 : i64, tpu.core_type = #tpu.core_type<tc>, window_params = [{transform_indices = @transform_0, window_bounds = array<i64: 256, 128>}, {pipeline_mode = #tpu.pipeline_mode<synchronous>, transform_indices = @transform_1, window_bounds = array<i64: 1, 8, 128>}, {pipeline_mode = #tpu.pipeline_mode<synchronous>, transform_indices = @transform_2, window_bounds = array<i64: 1, 128>}, {pipeline_mode = #tpu.pipeline_mode<synchronous>, transform_indices = @transform_3, window_bounds = array<i64: 1, 128>}, {transform_indices = @transform_4, window_bounds = array<i64: 8, 256>}, {transform_indices = @transform_5, window_bounds = array<i64: 256, 128>}, {pipeline_mode = #tpu.pipeline_mode<synchronous>, transform_indices = @transform_6, window_bounds = array<i64: 8, 128>}]} {
    %c0 = arith.constant 0 : index
    %c0_0 = arith.constant 0 : index
    %c0_1 = arith.constant 0 : index
    %0 = vector.load %arg2[%c0, %c0_0, %c0_1] : memref<1x8x128xf32, #tpu.memory_space<vmem>>, vector<1x8x128xf32>
    %1 = vector.extract_strided_slice %0 {offsets = [0, 0, 0], sizes = [1, 1, 128], strides = [1, 1, 1]} : vector<1x8x128xf32> to vector<1x1x128xf32>
    %2 = vector.shape_cast %1 : vector<1x1x128xf32> to vector<1x128xf32>
    %cst = arith.constant dense<0.000000e+00> : vector<128xf32>
    %3 = vector.multi_reduction <add>, %2, %cst [0] : vector<1x128xf32> to vector<128xf32>
    %4 = vector.shape_cast %3 : vector<128xf32> to vector<1x128xf32>
    %5 = vector.extract_strided_slice %0 {offsets = [0, 1, 0], sizes = [1, 1, 128], strides = [1, 1, 1]} : vector<1x8x128xf32> to vector<1x1x128xf32>
    %6 = vector.shape_cast %5 : vector<1x1x128xf32> to vector<1x128xf32>
    %cst_2 = arith.constant dense<0.000000e+00> : vector<128xf32>
    %7 = vector.multi_reduction <add>, %6, %cst_2 [0] : vector<1x128xf32> to vector<128xf32>
    %8 = vector.shape_cast %7 : vector<128xf32> to vector<1x128xf32>
    %9 = arith.mulf %4, %4 : vector<1x128xf32>
    %10 = arith.subf %8, %9 : vector<1x128xf32>
    %c0_3 = arith.constant 0 : index
    %c0_4 = arith.constant 0 : index
    %11 = vector.load %arg3[%c0_3, %c0_4] : memref<1x128xf32, #tpu.memory_space<vmem>>, vector<1x128xf32>
    %cst_5 = arith.constant 9.99999974E-6 : f32
    %12 = vector.broadcast %cst_5 : f32 to vector<1x128xf32>
    %13 = arith.addf %10, %12 : vector<1x128xf32>
    %14 = math.rsqrt %13 : vector<1x128xf32>
    %15 = arith.mulf %11, %14 : vector<1x128xf32>
    %c0_6 = arith.constant 0 : index
    %c0_7 = arith.constant 0 : index
    %16 = vector.load %arg4[%c0_6, %c0_7] : memref<1x128xf32, #tpu.memory_space<vmem>>, vector<1x128xf32>
    %17 = arith.mulf %4, %15 : vector<1x128xf32>
    %18 = arith.subf %16, %17 : vector<1x128xf32>
    %c0_8 = arith.constant 0 : index
    %c0_9 = arith.constant 0 : index
    %19 = vector.load %arg1[%c0_8, %c0_9] : memref<256x128xf32, #tpu.memory_space<vmem>>, vector<256x128xf32>
    %20 = vector.broadcast %15 : vector<1x128xf32> to vector<256x128xf32>
    %21 = arith.mulf %19, %20 : vector<256x128xf32>
    %22 = vector.broadcast %18 : vector<1x128xf32> to vector<256x128xf32>
    %23 = arith.addf %21, %22 : vector<256x128xf32>
    %24 = arith.truncf %23 : vector<256x128xf32> to vector<256x128xbf16>
    %c0_10 = arith.constant 0 : index
    %c0_11 = arith.constant 0 : index
    %25 = vector.load %arg6[%c0_10, %c0_11] : memref<256x128xbf16, #tpu.memory_space<vmem>>, vector<256x128xbf16>
    tpu.vector_store %arg6[%c0_10, %c0_11], %24 {strides = array<i32>} : memref<256x128xbf16, #tpu.memory_space<vmem>>, vector<256x128xbf16>,
    %c0_i32 = arith.constant 0 : i32
    %26 = arith.cmpi eq, %arg0, %c0_i32 : i32
    %27 = arith.extui %26 : i1 to i32
    %c0_i32_12 = arith.constant 0 : i32
    %28 = arith.cmpi ne, %27, %c0_i32_12 : i32
    scf.if %28 {
      %cst_20 = arith.constant 0.000000e+00 : f32
      %34 = vector.broadcast %cst_20 : f32 to vector<8x128xf32>
      %c0_21 = arith.constant 0 : index
      %c0_22 = arith.constant 0 : index
      %35 = vector.load %arg7[%c0_21, %c0_22] : memref<8x128xf32, #tpu.memory_space<vmem>>, vector<8x128xf32>
      tpu.vector_store %arg7[%c0_21, %c0_22], %34 {strides = array<i32>} : memref<8x128xf32, #tpu.memory_space<vmem>>, vector<8x128xf32>,
    } else {
    }
    %c0_13 = arith.constant 0 : index
    %c0_14 = arith.constant 0 : index
    %29 = vector.load %arg7[%c0_13, %c0_14] : memref<8x128xf32, #tpu.memory_space<vmem>>, vector<8x128xf32>
    %c0_15 = arith.constant 0 : index
    %c0_16 = arith.constant 0 : index
    %30 = vector.load %arg5[%c0_15, %c0_16] : memref<8x256xbf16, #tpu.memory_space<vmem>>, vector<8x256xbf16>
    %cst_17 = arith.constant dense<0.000000e+00> : vector<8x128xf32>
    %31 = tpu.matmul %30, %24, %cst_17 {dimension_numbers = #tpu.dot_dimension_numbers<[1], [0], [0], [1], [0, 0, 1, 1], [], []>} : vector<8x256xbf16>, vector<256x128xbf16>, vector<8x128xf32> -> vector<8x128xf32>
    %32 = arith.addf %29, %31 : vector<8x128xf32>
    %c0_18 = arith.constant 0 : index
    %c0_19 = arith.constant 0 : index
    %33 = vector.load %arg7[%c0_18, %c0_19] : memref<8x128xf32, #tpu.memory_space<vmem>>, vector<8x128xf32>
    tpu.vector_store %arg7[%c0_18, %c0_19], %32 {strides = array<i32>} : memref<8x128xf32, #tpu.memory_space<vmem>>, vector<8x128xf32>,
    return
  }
  func.func @transform_0(%arg0: i32) -> (i32, i32) {
    %c0_i32 = arith.constant 0 : i32
    %c0_i32_0 = arith.constant 0 : i32
    return %arg0, %c0_i32 : i32, i32
  }
  func.func @transform_1(%arg0: i32) -> (i32, i32, i32) {
    %c0_i32 = arith.constant 0 : i32
    %c0_i32_0 = arith.constant 0 : i32
    %c0_i32_1 = arith.constant 0 : i32
    %c0_i32_2 = arith.constant 0 : i32
    return %c0_i32, %c0_i32_0, %c0_i32_1 : i32, i32, i32
  }
  func.func @transform_2(%arg0: i32) -> (i32, i32) {
    %c0_i32 = arith.constant 0 : i32
    %c0_i32_0 = arith.constant 0 : i32
    %c0_i32_1 = arith.constant 0 : i32
    return %c0_i32, %c0_i32_0 : i32, i32
  }
  func.func @transform_3(%arg0: i32) -> (i32, i32) {
    %c0_i32 = arith.constant 0 : i32
    %c0_i32_0 = arith.constant 0 : i32
    %c0_i32_1 = arith.constant 0 : i32
    return %c0_i32, %c0_i32_0 : i32, i32
  }
  func.func @transform_4(%arg0: i32) -> (i32, i32) {
    %c0_i32 = arith.constant 0 : i32
    %c0_i32_0 = arith.constant 0 : i32
    return %c0_i32, %arg0 : i32, i32
  }
  func.func @transform_5(%arg0: i32) -> (i32, i32) {
    %c0_i32 = arith.constant 0 : i32
    %c0_i32_0 = arith.constant 0 : i32
    return %arg0, %c0_i32 : i32, i32
  }
  func.func @transform_6(%arg0: i32) -> (i32, i32) {
    %c0_i32 = arith.constant 0 : i32
    %c0_i32_0 = arith.constant 0 : i32
    %c0_i32_1 = arith.constant 0 : i32
    return %c0_i32, %c0_i32_0 : i32, i32
  }
}

module attributes {stable_mosaic.version = 11 : i64} {
  func.func @_bn_pool_kernel(%arg0: i32, %arg1: memref<256x128xf32, #tpu.memory_space<vmem>>, %arg2: memref<1x8x128xf32, #tpu.memory_space<vmem>>, %arg3: memref<1x128xf32, #tpu.memory_space<vmem>>, %arg4: memref<1x128xf32, #tpu.memory_space<vmem>>, %arg5: memref<8x256xbf16, #tpu.memory_space<vmem>>, %arg6: memref<256x128xbf16, #tpu.memory_space<vmem>>, %arg7: memref<8x128xf32, #tpu.memory_space<vmem>>) attributes {dimension_semantics = [#tpu.dimension_semantics<arbitrary>], iteration_bounds = array<i64: 1>, scalar_prefetch = 0 : i64, scratch_operands = 0 : i64, tpu.core_type = #tpu.core_type<tc>, window_params = [{transform_indices = @transform_0, window_bounds = array<i64: 256, 128>}, {pipeline_mode = #tpu.pipeline_mode<synchronous>, transform_indices = @transform_1, window_bounds = array<i64: 1, 8, 128>}, {pipeline_mode = #tpu.pipeline_mode<synchronous>, transform_indices = @transform_2, window_bounds = array<i64: 1, 128>}, {pipeline_mode = #tpu.pipeline_mode<synchronous>, transform_indices = @transform_3, window_bounds = array<i64: 1, 128>}, {transform_indices = @transform_4, window_bounds = array<i64: 8, 256>}, {transform_indices = @transform_5, window_bounds = array<i64: 256, 128>}, {pipeline_mode = #tpu.pipeline_mode<synchronous>, transform_indices = @transform_6, window_bounds = array<i64: 8, 128>}]} {
    %c0 = arith.constant 0 : index
    %c0_0 = arith.constant 0 : index
    %c0_1 = arith.constant 0 : index
    %0 = vector.load %arg2[%c0, %c0_0, %c0_1] : memref<1x8x128xf32, #tpu.memory_space<vmem>>, vector<1x8x128xf32>
    %1 = vector.extract_strided_slice %0 {offsets = [0, 0, 0], sizes = [1, 1, 128], strides = [1, 1, 1]} : vector<1x8x128xf32> to vector<1x1x128xf32>
    %2 = vector.shape_cast %1 : vector<1x1x128xf32> to vector<1x128xf32>
    %cst = arith.constant dense<0.000000e+00> : vector<128xf32>
    %3 = vector.multi_reduction <add>, %2, %cst [0] : vector<1x128xf32> to vector<128xf32>
    %4 = vector.shape_cast %3 : vector<128xf32> to vector<1x128xf32>
    %5 = vector.extract_strided_slice %0 {offsets = [0, 1, 0], sizes = [1, 1, 128], strides = [1, 1, 1]} : vector<1x8x128xf32> to vector<1x1x128xf32>
    %6 = vector.shape_cast %5 : vector<1x1x128xf32> to vector<1x128xf32>
    %cst_2 = arith.constant dense<0.000000e+00> : vector<128xf32>
    %7 = vector.multi_reduction <add>, %6, %cst_2 [0] : vector<1x128xf32> to vector<128xf32>
    %8 = vector.shape_cast %7 : vector<128xf32> to vector<1x128xf32>
    %9 = arith.mulf %4, %4 : vector<1x128xf32>
    %10 = arith.subf %8, %9 : vector<1x128xf32>
    %c0_3 = arith.constant 0 : index
    %c0_4 = arith.constant 0 : index
    %11 = vector.load %arg3[%c0_3, %c0_4] : memref<1x128xf32, #tpu.memory_space<vmem>>, vector<1x128xf32>
    %cst_5 = arith.constant 9.99999974E-6 : f32
    %12 = vector.broadcast %cst_5 : f32 to vector<1x128xf32>
    %13 = arith.addf %10, %12 : vector<1x128xf32>
    %14 = math.rsqrt %13 : vector<1x128xf32>
    %15 = arith.mulf %11, %14 : vector<1x128xf32>
    %c0_6 = arith.constant 0 : index
    %c0_7 = arith.constant 0 : index
    %16 = vector.load %arg4[%c0_6, %c0_7] : memref<1x128xf32, #tpu.memory_space<vmem>>, vector<1x128xf32>
    %17 = arith.mulf %4, %15 : vector<1x128xf32>
    %18 = arith.subf %16, %17 : vector<1x128xf32>
    %c0_8 = arith.constant 0 : index
    %c0_9 = arith.constant 0 : index
    %19 = vector.load %arg1[%c0_8, %c0_9] : memref<256x128xf32, #tpu.memory_space<vmem>>, vector<256x128xf32>
    %20 = vector.broadcast %15 : vector<1x128xf32> to vector<256x128xf32>
    %21 = arith.mulf %19, %20 : vector<256x128xf32>
    %22 = vector.broadcast %18 : vector<1x128xf32> to vector<256x128xf32>
    %23 = arith.addf %21, %22 : vector<256x128xf32>
    %24 = arith.truncf %23 : vector<256x128xf32> to vector<256x128xbf16>
    %c0_10 = arith.constant 0 : index
    %c0_11 = arith.constant 0 : index
    %25 = vector.load %arg6[%c0_10, %c0_11] : memref<256x128xbf16, #tpu.memory_space<vmem>>, vector<256x128xbf16>
    tpu.vector_store %arg6[%c0_10, %c0_11], %24 {strides = array<i32>} : memref<256x128xbf16, #tpu.memory_space<vmem>>, vector<256x128xbf16>,
    %c0_i32 = arith.constant 0 : i32
    %26 = arith.cmpi eq, %arg0, %c0_i32 : i32
    %27 = arith.extui %26 : i1 to i32
    %c0_i32_12 = arith.constant 0 : i32
    %28 = arith.cmpi ne, %27, %c0_i32_12 : i32
    scf.if %28 {
      %cst_20 = arith.constant 0.000000e+00 : f32
      %34 = vector.broadcast %cst_20 : f32 to vector<8x128xf32>
      %c0_21 = arith.constant 0 : index
      %c0_22 = arith.constant 0 : index
      %35 = vector.load %arg7[%c0_21, %c0_22] : memref<8x128xf32, #tpu.memory_space<vmem>>, vector<8x128xf32>
      tpu.vector_store %arg7[%c0_21, %c0_22], %34 {strides = array<i32>} : memref<8x128xf32, #tpu.memory_space<vmem>>, vector<8x128xf32>,
    } else {
    }
    %c0_13 = arith.constant 0 : index
    %c0_14 = arith.constant 0 : index
    %29 = vector.load %arg7[%c0_13, %c0_14] : memref<8x128xf32, #tpu.memory_space<vmem>>, vector<8x128xf32>
    %c0_15 = arith.constant 0 : index
    %c0_16 = arith.constant 0 : index
    %30 = vector.load %arg5[%c0_15, %c0_16] : memref<8x256xbf16, #tpu.memory_space<vmem>>, vector<8x256xbf16>
    %cst_17 = arith.constant dense<0.000000e+00> : vector<8x128xf32>
    %31 = tpu.matmul %30, %24, %cst_17 {dimension_numbers = #tpu.dot_dimension_numbers<[1], [0], [0], [1], [0, 0, 1, 1], [], []>} : vector<8x256xbf16>, vector<256x128xbf16>, vector<8x128xf32> -> vector<8x128xf32>
    %32 = arith.addf %29, %31 : vector<8x128xf32>
    %c0_18 = arith.constant 0 : index
    %c0_19 = arith.constant 0 : index
    %33 = vector.load %arg7[%c0_18, %c0_19] : memref<8x128xf32, #tpu.memory_space<vmem>>, vector<8x128xf32>
    tpu.vector_store %arg7[%c0_18, %c0_19], %32 {strides = array<i32>} : memref<8x128xf32, #tpu.memory_space<vmem>>, vector<8x128xf32>,
    return
  }
  func.func @transform_0(%arg0: i32) -> (i32, i32) {
    %c0_i32 = arith.constant 0 : i32
    %c0_i32_0 = arith.constant 0 : i32
    return %arg0, %c0_i32 : i32, i32
  }
  func.func @transform_1(%arg0: i32) -> (i32, i32, i32) {
    %c0_i32 = arith.constant 0 : i32
    %c0_i32_0 = arith.constant 0 : i32
    %c0_i32_1 = arith.constant 0 : i32
    %c0_i32_2 = arith.constant 0 : i32
    return %c0_i32, %c0_i32_0, %c0_i32_1 : i32, i32, i32
  }
  func.func @transform_2(%arg0: i32) -> (i32, i32) {
    %c0_i32 = arith.constant 0 : i32
    %c0_i32_0 = arith.constant 0 : i32
    %c0_i32_1 = arith.constant 0 : i32
    return %c0_i32, %c0_i32_0 : i32, i32
  }
  func.func @transform_3(%arg0: i32) -> (i32, i32) {
    %c0_i32 = arith.constant 0 : i32
    %c0_i32_0 = arith.constant 0 : i32
    %c0_i32_1 = arith.constant 0 : i32
    return %c0_i32, %c0_i32_0 : i32, i32
  }
  func.func @transform_4(%arg0: i32) -> (i32, i32) {
    %c0_i32 = arith.constant 0 : i32
    %c0_i32_0 = arith.constant 0 : i32
    return %c0_i32, %arg0 : i32, i32
  }
  func.func @transform_5(%arg0: i32) -> (i32, i32) {
    %c0_i32 = arith.constant 0 : i32
    %c0_i32_0 = arith.constant 0 : i32
    return %arg0, %c0_i32 : i32, i32
  }
  func.func @transform_6(%arg0: i32) -> (i32, i32) {
    %c0_i32 = arith.constant 0 : i32
    %c0_i32_0 = arith.constant 0 : i32
    %c0_i32_1 = arith.constant 0 : i32
    return %c0_i32, %c0_i32_0 : i32, i32
  }
}

module attributes {stable_mosaic.version = 11 : i64} {
  func.func @_proj_head_kernel(%arg0: memref<3x8x128xf32, #tpu.memory_space<vmem>>, %arg1: memref<3x128x384xf32, #tpu.memory_space<vmem>>, %arg2: memref<1x384xf32, #tpu.memory_space<vmem>>, %arg3: memref<384x384xf32, #tpu.memory_space<vmem>>, %arg4: memref<1x384xf32, #tpu.memory_space<vmem>>, %arg5: memref<8x384xf32, #tpu.memory_space<vmem>>, %arg6: memref<8x384xf32, #tpu.memory_space<vmem>>) attributes {dimension_semantics = [], scalar_prefetch = 0 : i64, scratch_operands = 0 : i64, tpu.core_type = #tpu.core_type<tc>} {
    %cst = arith.constant 0.000000e+00 : f32
    %0 = vector.broadcast %cst : f32 to vector<8x384xf32>
    %c0 = arith.constant 0 : index
    %c0_0 = arith.constant 0 : index
    %1 = vector.load %arg2[%c0, %c0_0] : memref<1x384xf32, #tpu.memory_space<vmem>>, vector<1x384xf32>
    %2 = vector.broadcast %1 : vector<1x384xf32> to vector<8x384xf32>
    %3 = arith.addf %0, %2 : vector<8x384xf32>
    %cst_1 = arith.constant 0.000000e+00 : f32
    %4 = vector.broadcast %cst_1 : f32 to vector<8x1xf32>
    %c0_2 = arith.constant 0 : index
    %c0_3 = arith.constant 0 : index
    %c0_4 = arith.constant 0 : index
    %5 = vector.load %arg0[%c0_2, %c0_3, %c0_4] : memref<3x8x128xf32, #tpu.memory_space<vmem>>, vector<1x8x128xf32>
    %6 = vector.shape_cast %5 : vector<1x8x128xf32> to vector<8x128xf32>
    %c0_5 = arith.constant 0 : index
    %c0_6 = arith.constant 0 : index
    %c0_7 = arith.constant 0 : index
    %7 = vector.load %arg1[%c0_5, %c0_6, %c0_7] : memref<3x128x384xf32, #tpu.memory_space<vmem>>, vector<1x128x384xf32>
    %8 = vector.shape_cast %7 : vector<1x128x384xf32> to vector<128x384xf32>
    %cst_8 = arith.constant dense<0.000000e+00> : vector<8x384xf32>
    %9 = tpu.matmul %6, %8, %cst_8 {dimension_numbers = #tpu.dot_dimension_numbers<[1], [0], [0], [1], [0, 0, 1, 1], [], []>} : vector<8x128xf32>, vector<128x384xf32>, vector<8x384xf32> -> vector<8x384xf32>
    %10 = arith.addf %3, %9 : vector<8x384xf32>
    %11 = arith.mulf %6, %6 : vector<8x128xf32>
    %cst_9 = arith.constant dense<0.000000e+00> : vector<8xf32>
    %12 = vector.multi_reduction <add>, %11, %cst_9 [1] : vector<8x128xf32> to vector<8xf32>
    %13 = vector.shape_cast %12 : vector<8xf32> to vector<8x1xf32>
    %14 = arith.addf %4, %13 : vector<8x1xf32>
    %c1 = arith.constant 1 : index
    %c0_10 = arith.constant 0 : index
    %c0_11 = arith.constant 0 : index
    %15 = vector.load %arg0[%c1, %c0_10, %c0_11] : memref<3x8x128xf32, #tpu.memory_space<vmem>>, vector<1x8x128xf32>
    %16 = vector.shape_cast %15 : vector<1x8x128xf32> to vector<8x128xf32>
    %c1_12 = arith.constant 1 : index
    %c0_13 = arith.constant 0 : index
    %c0_14 = arith.constant 0 : index
    %17 = vector.load %arg1[%c1_12, %c0_13, %c0_14] : memref<3x128x384xf32, #tpu.memory_space<vmem>>, vector<1x128x384xf32>
    %18 = vector.shape_cast %17 : vector<1x128x384xf32> to vector<128x384xf32>
    %cst_15 = arith.constant dense<0.000000e+00> : vector<8x384xf32>
    %19 = tpu.matmul %16, %18, %cst_15 {dimension_numbers = #tpu.dot_dimension_numbers<[1], [0], [0], [1], [0, 0, 1, 1], [], []>} : vector<8x128xf32>, vector<128x384xf32>, vector<8x384xf32> -> vector<8x384xf32>
    %20 = arith.addf %10, %19 : vector<8x384xf32>
    %21 = arith.mulf %16, %16 : vector<8x128xf32>
    %cst_16 = arith.constant dense<0.000000e+00> : vector<8xf32>
    %22 = vector.multi_reduction <add>, %21, %cst_16 [1] : vector<8x128xf32> to vector<8xf32>
    %23 = vector.shape_cast %22 : vector<8xf32> to vector<8x1xf32>
    %24 = arith.addf %14, %23 : vector<8x1xf32>
    %c2 = arith.constant 2 : index
    %c0_17 = arith.constant 0 : index
    %c0_18 = arith.constant 0 : index
    %25 = vector.load %arg0[%c2, %c0_17, %c0_18] : memref<3x8x128xf32, #tpu.memory_space<vmem>>, vector<1x8x128xf32>
    %26 = vector.shape_cast %25 : vector<1x8x128xf32> to vector<8x128xf32>
    %c2_19 = arith.constant 2 : index
    %c0_20 = arith.constant 0 : index
    %c0_21 = arith.constant 0 : index
    %27 = vector.load %arg1[%c2_19, %c0_20, %c0_21] : memref<3x128x384xf32, #tpu.memory_space<vmem>>, vector<1x128x384xf32>
    %28 = vector.shape_cast %27 : vector<1x128x384xf32> to vector<128x384xf32>
    %cst_22 = arith.constant dense<0.000000e+00> : vector<8x384xf32>
    %29 = tpu.matmul %26, %28, %cst_22 {dimension_numbers = #tpu.dot_dimension_numbers<[1], [0], [0], [1], [0, 0, 1, 1], [], []>} : vector<8x128xf32>, vector<128x384xf32>, vector<8x384xf32> -> vector<8x384xf32>
    %30 = arith.addf %20, %29 : vector<8x384xf32>
    %31 = arith.mulf %26, %26 : vector<8x128xf32>
    %cst_23 = arith.constant dense<0.000000e+00> : vector<8xf32>
    %32 = vector.multi_reduction <add>, %31, %cst_23 [1] : vector<8x128xf32> to vector<8xf32>
    %33 = vector.shape_cast %32 : vector<8xf32> to vector<8x1xf32>
    %34 = arith.addf %24, %33 : vector<8x1xf32>
    %cst_24 = arith.constant 0.000000e+00 : f32
    %35 = vector.broadcast %cst_24 : f32 to vector<8x384xf32>
    %36 = arith.maximumf %30, %35 : vector<8x384xf32>
    %c0_25 = arith.constant 0 : index
    %c0_26 = arith.constant 0 : index
    %37 = vector.load %arg3[%c0_25, %c0_26] : memref<384x384xf32, #tpu.memory_space<vmem>>, vector<384x384xf32>
    %cst_27 = arith.constant dense<0.000000e+00> : vector<8x384xf32>
    %38 = tpu.matmul %36, %37, %cst_27 {dimension_numbers = #tpu.dot_dimension_numbers<[1], [0], [0], [1], [0, 0, 1, 1], [], []>} : vector<8x384xf32>, vector<384x384xf32>, vector<8x384xf32> -> vector<8x384xf32>
    %c0_28 = arith.constant 0 : index
    %c0_29 = arith.constant 0 : index
    %39 = vector.load %arg4[%c0_28, %c0_29] : memref<1x384xf32, #tpu.memory_space<vmem>>, vector<1x384xf32>
    %40 = vector.broadcast %39 : vector<1x384xf32> to vector<8x384xf32>
    %41 = arith.addf %38, %40 : vector<8x384xf32>
    %42 = arith.mulf %41, %41 : vector<8x384xf32>
    %cst_30 = arith.constant dense<0.000000e+00> : vector<8xf32>
    %43 = vector.multi_reduction <add>, %42, %cst_30 [1] : vector<8x384xf32> to vector<8xf32>
    %44 = vector.shape_cast %43 : vector<8xf32> to vector<8x1xf32>
    %45 = math.sqrt %44 : vector<8x1xf32>
    %cst_31 = arith.constant 9.99999996E-13 : f32
    %46 = vector.broadcast %cst_31 : f32 to vector<8x1xf32>
    %47 = arith.maximumf %45, %46 : vector<8x1xf32>
    %48 = vector.broadcast %47 : vector<8x1xf32> to vector<8x384xf32>
    %49 = arith.divf %41, %48 : vector<8x384xf32>
    %c0_32 = arith.constant 0 : index
    %c0_33 = arith.constant 0 : index
    %50 = vector.load %arg5[%c0_32, %c0_33] : memref<8x384xf32, #tpu.memory_space<vmem>>, vector<8x384xf32>
    tpu.vector_store %arg5[%c0_32, %c0_33], %49 {strides = array<i32>} : memref<8x384xf32, #tpu.memory_space<vmem>>, vector<8x384xf32>,
    %51 = math.sqrt %34 : vector<8x1xf32>
    %cst_34 = arith.constant 9.99999996E-13 : f32
    %52 = vector.broadcast %cst_34 : f32 to vector<8x1xf32>
    %53 = arith.maximumf %51, %52 : vector<8x1xf32>
    %cst_35 = arith.constant 1.000000e+00 : f32
    %54 = vector.broadcast %cst_35 : f32 to vector<8x1xf32>
    %55 = arith.divf %54, %53 : vector<8x1xf32>
    %c0_36 = arith.constant 0 : index
    %c0_37 = arith.constant 0 : index
    %c0_38 = arith.constant 0 : index
    %56 = vector.load %arg0[%c0_36, %c0_37, %c0_38] : memref<3x8x128xf32, #tpu.memory_space<vmem>>, vector<1x8x128xf32>
    %57 = vector.shape_cast %56 : vector<1x8x128xf32> to vector<8x128xf32>
    %58 = vector.broadcast %55 : vector<8x1xf32> to vector<8x128xf32>
    %59 = arith.mulf %57, %58 : vector<8x128xf32>
    %c0_39 = arith.constant 0 : index
    %c0_40 = arith.constant 0 : index
    %60 = vector.load %arg6[%c0_39, %c0_40] : memref<8x384xf32, #tpu.memory_space<vmem>>, vector<8x128xf32>
    tpu.vector_store %arg6[%c0_39, %c0_40], %59 {strides = array<i32>} : memref<8x384xf32, #tpu.memory_space<vmem>>, vector<8x128xf32>,
    %c1_41 = arith.constant 1 : index
    %c0_42 = arith.constant 0 : index
    %c0_43 = arith.constant 0 : index
    %61 = vector.load %arg0[%c1_41, %c0_42, %c0_43] : memref<3x8x128xf32, #tpu.memory_space<vmem>>, vector<1x8x128xf32>
    %62 = vector.shape_cast %61 : vector<1x8x128xf32> to vector<8x128xf32>
    %63 = vector.broadcast %55 : vector<8x1xf32> to vector<8x128xf32>
    %64 = arith.mulf %62, %63 : vector<8x128xf32>
    %c0_44 = arith.constant 0 : index
    %c128 = arith.constant 128 : index
    %65 = vector.load %arg6[%c0_44, %c128] : memref<8x384xf32, #tpu.memory_space<vmem>>, vector<8x128xf32>
    tpu.vector_store %arg6[%c0_44, %c128], %64 {strides = array<i32>} : memref<8x384xf32, #tpu.memory_space<vmem>>, vector<8x128xf32>,
    %c2_45 = arith.constant 2 : index
    %c0_46 = arith.constant 0 : index
    %c0_47 = arith.constant 0 : index
    %66 = vector.load %arg0[%c2_45, %c0_46, %c0_47] : memref<3x8x128xf32, #tpu.memory_space<vmem>>, vector<1x8x128xf32>
    %67 = vector.shape_cast %66 : vector<1x8x128xf32> to vector<8x128xf32>
    %68 = vector.broadcast %55 : vector<8x1xf32> to vector<8x128xf32>
    %69 = arith.mulf %67, %68 : vector<8x128xf32>
    %c0_48 = arith.constant 0 : index
    %c256 = arith.constant 256 : index
    %70 = vector.load %arg6[%c0_48, %c256] : memref<8x384xf32, #tpu.memory_space<vmem>>, vector<8x128xf32>
    tpu.vector_store %arg6[%c0_48, %c256], %69 {strides = array<i32>} : memref<8x384xf32, #tpu.memory_space<vmem>>, vector<8x128xf32>,
    return
  }
}

</mosaic_0001>

<llo_original>
// kernel: _forward_padded.8
$region0: #{_forward_padded.8}
  #allocation0 [shape = 'u32[]', space=smem, size = 0x4, offset = 0x4, fixed_abs, tag = 'smem constant byte address 0x4 - core index']
  #allocation1 [shape = 'u32[144,128]{1,0:T(1,128)}', space=vmem, size = 0x12000, scoped, tag = 'internal scratch']
  %s0 = inlined_call_operand.vmem [shape: f32[256,128], index: 0, kind: input, shape index: {}]
  %s1 = inlined_call_operand.vmem [shape: f32[1,8,128], index: 1, kind: input, shape index: {}]
  %s2 = inlined_call_operand.vmem [shape: f32[1,128], index: 2, kind: input, shape index: {}]
  %s3 = inlined_call_operand.vmem [shape: f32[1,128], index: 3, kind: input, shape index: {}]
  %s4 = inlined_call_operand.vmem [shape: bf16[8,256], index: 4, kind: input, shape index: {}]
  %s5 = inlined_call_operand.vmem [shape: bf16[256,128], index: 5, kind: output, shape index: {0}]
  %s6 = inlined_call_operand.vmem [shape: f32[8,128], index: 6, kind: output, shape index: {1}]
  %7 = xla_tuple %s5, %s6
  %s8 = sld [smem:[#allocation0]]
  $region42: #{_forward_padded.8} parent=0
    _
  %s10 = ssub.s32 1, %s8
  %s11 = scalar_select 0, %s10, %s8
  // Predicated region
  $region2: #{_forward_padded.8} parent=0 // pred_check
    _
  $region3: #{_forward_padded.8} parent=0 // pred_check_branch
    %13 = sbr.rel (0) target = $region5
  $region4: #{_forward_padded.8} parent=0 // pred_region
    _
  $region5: #{_forward_padded.8} parent=0 // pred_fallthru
    _
  // Predicated region
  $region6: #{_forward_padded.8} parent=0 // pred_check
    _
  $region7: #{_forward_padded.8} parent=0 // pred_check_branch
    %15 = sbr.rel (0) target = $region9
  $region8: #{_forward_padded.8} parent=0 // pred_region
    _
  $region9: #{_forward_padded.8} parent=0 // pred_fallthru
    _
  // Predicated region
  $region10: #{_forward_padded.8} parent=0 // pred_check
    _
  $region11: #{_forward_padded.8} parent=0 // pred_check_branch
    %17 = sbr.rel (0) target = $region13
  $region12: #{_forward_padded.8} parent=0 // pred_region
    _
  $region13: #{_forward_padded.8} parent=0 // pred_fallthru
    _
  // Predicated region
  $region14: #{_forward_padded.8} parent=0 // pred_check
    _
  $region15: #{_forward_padded.8} parent=0 // pred_check_branch
    %19 = sbr.rel (0) target = $region17
  $region16: #{_forward_padded.8} parent=0 // pred_region
    _
  $region17: #{_forward_padded.8} parent=0 // pred_fallthru
    _
  // Predicated region
  $region18: #{_forward_padded.8} parent=0 // pred_check
    _
  $region19: #{_forward_padded.8} parent=0 // pred_check_branch
    %21 = sbr.rel (0) target = $region21
  $region20: #{_forward_padded.8} parent=0 // pred_region
    _
  $region21: #{_forward_padded.8} parent=0 // pred_fallthru
    _
  %v23 = vld [vmem:[%s1] sm:$0xff]
  %v24 = vadd.f32 %v23, 0.0
  %v25 = vmul.f32 %v24, %v24
  %v27 = vrot.slane %v25, 7
  %v29 = vsub.f32 %v24, %v27
  %v30 = vld [vmem:[%s2] sm:$0x1]
  %v31 = vadd.f32 %v29, 1e-05
  %v32 = vrsqrt.pop %v31
  %v35 = vunpack.c.l.s4 1966171168
  %v36 = vunpack.c.0.s8 %v35
  %v37 = vlaneseq
  %v38 = vshrl.u32 %v37, 7
  %v39 = vsub.s32 %v36, %v38
  %v40 = vrot.slane %v32, %v39
  %v41 = vcombine.high %v40, %v40
  %v43 = vunpack.c.l.s4 1966171168
  %v44 = vunpack.c.0.s8 %v43
  %v45 = vlaneseq
  %v46 = vshrl.u32 %v45, 7
  %v47 = vsub.s32 %v44, %v46
  %v48 = vrot.slane %v41, %v47
  %v50 = vmul.f32 %v30, %v48
  %v51 = vld [vmem:[%s3] sm:$0x1]
  %v52 = vmul.f32 %v24, %v50
  %v53 = vsub.f32 %v51, %v52
  %v54 = vld [vmem:[%s0] sm:$0xff]
  %v55 = vld [vmem:[%s0 + $0x8] sm:$0xff]
  %v56 = vld [vmem:[%s0 + $0x10] sm:$0xff]
  %v57 = vld [vmem:[%s0 + $0x18] sm:$0xff]
  %v58 = vld [vmem:[%s0 + $0x20] sm:$0xff]
  %v59 = vld [vmem:[%s0 + $0x28] sm:$0xff]
  %v60 = vld [vmem:[%s0 + $0x30] sm:$0xff]
  %v61 = vld [vmem:[%s0 + $0x38] sm:$0xff]
  %v62 = vld [vmem:[%s0 + $0x40] sm:$0xff]
  %v63 = vld [vmem:[%s0 + $0x48] sm:$0xff]
  %v64 = vld [vmem:[%s0 + $0x50] sm:$0xff]
  %v65 = vld [vmem:[%s0 + $0x58] sm:$0xff]
  %v66 = vld [vmem:[%s0 + $0x60] sm:$0xff]
  %v67 = vld [vmem:[%s0 + $0x68] sm:$0xff]
  %v68 = vld [vmem:[%s0 + $0x70] sm:$0xff]
  %v69 = vld [vmem:[%s0 + $0x78] sm:$0xff]
  %v70 = vld [vmem:[%s0 + $0x80] sm:$0xff]
  %v71 = vld [vmem:[%s0 + $0x88] sm:$0xff]
  %v72 = vld [vmem:[%s0 + $0x90] sm:$0xff]
  %v73 = vld [vmem:[%s0 + $0x98] sm:$0xff]
  %v74 = vld [vmem:[%s0 + $0xa0] sm:$0xff]
  %v75 = vld [vmem:[%s0 + $0xa8] sm:$0xff]
  %v76 = vld [vmem:[%s0 + $0xb0] sm:$0xff]
  %v77 = vld [vmem:[%s0 + $0xb8] sm:$0xff]
  %v78 = vld [vmem:[%s0 + $0xc0] sm:$0xff]
  %v79 = vld [vmem:[%s0 + $0xc8] sm:$0xff]
  %v80 = vld [vmem:[%s0 + $0xd0] sm:$0xff]
  %v81 = vld [vmem:[%s0 + $0xd8] sm:$0xff]
  %v82 = vld [vmem:[%s0 + $0xe0] sm:$0xff]
  %v83 = vld [vmem:[%s0 + $0xe8] sm:$0xff]
  %v84 = vld [vmem:[%s0 + $0xf0] sm:$0xff]
  %v85 = vld [vmem:[%s0 + $0xf8] sm:$0xff]
  %v87 = vlaneseq
  %v88 = vshrl.u32 %v87, 7
  %v89 = vsub.s32 0, %v88
  %v90 = vrot.slane %v50, %v89
  %v92 = vmul.f32 %v54, %v90
  %v93 = vmul.f32 %v55, %v90
  %v94 = vmul.f32 %v56, %v90
  %v95 = vmul.f32 %v57, %v90
  %v96 = vmul.f32 %v58, %v90
  %v97 = vmul.f32 %v59, %v90
  %v98 = vmul.f32 %v60, %v90
  %v99 = vmul.f32 %v61, %v90
  %v100 = vmul.f32 %v62, %v90
  %v101 = vmul.f32 %v63, %v90
  %v102 = vmul.f32 %v64, %v90
  %v103 = vmul.f32 %v65, %v90
  %v104 = vmul.f32 %v66, %v90
  %v105 = vmul.f32 %v67, %v90
  %v106 = vmul.f32 %v68, %v90
  %v107 = vmul.f32 %v69, %v90
  %v108 = vmul.f32 %v70, %v90
  %v109 = vmul.f32 %v71, %v90
  %v110 = vmul.f32 %v72, %v90
  %v111 = vmul.f32 %v73, %v90
  %v112 = vmul.f32 %v74, %v90
  %v113 = vmul.f32 %v75, %v90
  %v114 = vmul.f32 %v76, %v90
  %v115 = vmul.f32 %v77, %v90
  %v116 = vmul.f32 %v78, %v90
  %v117 = vmul.f32 %v79, %v90
  %v118 = vmul.f32 %v80, %v90
  %v119 = vmul.f32 %v81, %v90
  %v120 = vmul.f32 %v82, %v90
  %v121 = vmul.f32 %v83, %v90
  %v122 = vmul.f32 %v84, %v90
  %v123 = vmul.f32 %v85, %v90
  %v125 = vlaneseq
  %v126 = vshrl.u32 %v125, 7
  %v127 = vsub.s32 0, %v126
  %v128 = vrot.slane %v53, %v127
  %v130 = vadd.f32 %v92, %v128
  %v131 = vadd.f32 %v93, %v128
  %v132 = vadd.f32 %v94, %v128
  %v133 = vadd.f32 %v95, %v128
  %v134 = vadd.f32 %v96, %v128
  %v135 = vadd.f32 %v97, %v128
  %v136 = vadd.f32 %v98, %v128
  %v137 = vadd.f32 %v99, %v128
  %v138 = vadd.f32 %v100, %v128
  %v139 = vadd.f32 %v101, %v128
  %v140 = vadd.f32 %v102, %v128
  %v141 = vadd.f32 %v103, %v128
  %v142 = vadd.f32 %v104, %v128
  %v143 = vadd.f32 %v105, %v128
  %v144 = vadd.f32 %v106, %v128
  %v145 = vadd.f32 %v107, %v128
  %v146 = vadd.f32 %v108, %v128
  %v147 = vadd.f32 %v109, %v128
  %v148 = vadd.f32 %v110, %v128
  %v149 = vadd.f32 %v111, %v128
  %v150 = vadd.f32 %v112, %v128
  %v151 = vadd.f32 %v113, %v128
  %v152 = vadd.f32 %v114, %v128
  %v153 = vadd.f32 %v115, %v128
  %v154 = vadd.f32 %v116, %v128
  %v155 = vadd.f32 %v117, %v128
  %v156 = vadd.f32 %v118, %v128
  %v157 = vadd.f32 %v119, %v128
  %v158 = vadd.f32 %v120, %v128
  %v159 = vadd.f32 %v121, %v128
  %v160 = vadd.f32 %v122, %v128
  %v161 = vadd.f32 %v123, %v128
  %v162 = vpack.c.bf16 %v131, %v130
  %v163 = vpack.c.bf16 %v133, %v132
  %v164 = vpack.c.bf16 %v135, %v134
  %v165 = vpack.c.bf16 %v137, %v136
  %v166 = vpack.c.bf16 %v139, %v138
  %v167 = vpack.c.bf16 %v141, %v140
  %v168 = vpack.c.bf16 %v143, %v142
  %v169 = vpack.c.bf16 %v145, %v144
  %v170 = vpack.c.bf16 %v147, %v146
  %v171 = vpack.c.bf16 %v149, %v148
  %v172 = vpack.c.bf16 %v151, %v150
  %v173 = vpack.c.bf16 %v153, %v152
  %v174 = vpack.c.bf16 %v155, %v154
  %v175 = vpack.c.bf16 %v157, %v156
  %v176 = vpack.c.bf16 %v159, %v158
  %v177 = vpack.c.bf16 %v161, %v160
  %v194 = vunpack.c.l.b16 %v162
  %v195 = vunpack.c.h.b16 %v162
  %v196 = vunpack.c.l.b16 %v163
  %v197 = vunpack.c.h.b16 %v163
  %v198 = vunpack.c.l.b16 %v164
  %v199 = vunpack.c.h.b16 %v164
  %v200 = vunpack.c.l.b16 %v165
  %v201 = vunpack.c.h.b16 %v165
  %v202 = vunpack.c.l.b16 %v166
  %v203 = vunpack.c.h.b16 %v166
  %v204 = vunpack.c.l.b16 %v167
  %v205 = vunpack.c.h.b16 %v167
  %v206 = vunpack.c.l.b16 %v168
  %v207 = vunpack.c.h.b16 %v168
  %v208 = vunpack.c.l.b16 %v169
  %v209 = vunpack.c.h.b16 %v169
  %v210 = vunpack.c.l.b16 %v170
  %v211 = vunpack.c.h.b16 %v170
  %v212 = vunpack.c.l.b16 %v171
  %v213 = vunpack.c.h.b16 %v171
  %v214 = vunpack.c.l.b16 %v172
  %v215 = vunpack.c.h.b16 %v172
  %v216 = vunpack.c.l.b16 %v173
  %v217 = vunpack.c.h.b16 %v173
  %v218 = vunpack.c.l.b16 %v174
  %v219 = vunpack.c.h.b16 %v174
  %v220 = vunpack.c.l.b16 %v175
  %v221 = vunpack.c.h.b16 %v175
  %v222 = vunpack.c.l.b16 %v176
  %v223 = vunpack.c.h.b16 %v176
  %v224 = vunpack.c.l.b16 %v177
  %v225 = vunpack.c.h.b16 %v177
  %v226 = vpack.c.b16 %v194, %v194
  %v227 = vpack.c.b16 %v195, %v195
  %v228 = vpack.c.b16 %v196, %v196
  %v229 = vpack.c.b16 %v197, %v197
  %v230 = vpack.c.b16 %v198, %v198
  %v231 = vpack.c.b16 %v199, %v199
  %v232 = vpack.c.b16 %v200, %v200
  %v233 = vpack.c.b16 %v201, %v201
  %v234 = vpack.c.b16 %v202, %v202
  %v235 = vpack.c.b16 %v203, %v203
  %v236 = vpack.c.b16 %v204, %v204
  %v237 = vpack.c.b16 %v205, %v205
  %v238 = vpack.c.b16 %v206, %v206
  %v239 = vpack.c.b16 %v207, %v207
  %v240 = vpack.c.b16 %v208, %v208
  %v241 = vpack.c.b16 %v209, %v209
  %v242 = vpack.c.b16 %v210, %v210
  %v243 = vpack.c.b16 %v211, %v211
  %v244 = vpack.c.b16 %v212, %v212
  %v245 = vpack.c.b16 %v213, %v213
  %v246 = vpack.c.b16 %v214, %v214
  %v247 = vpack.c.b16 %v215, %v215
  %v248 = vpack.c.b16 %v216, %v216
  %v249 = vpack.c.b16 %v217, %v217
  %v250 = vpack.c.b16 %v218, %v218
  %v251 = vpack.c.b16 %v219, %v219
  %v252 = vpack.c.b16 %v220, %v220
  %v253 = vpack.c.b16 %v221, %v221
  %v254 = vpack.c.b16 %v222, %v222
  %v255 = vpack.c.b16 %v223, %v223
  %v256 = vpack.c.b16 %v224, %v224
  %v257 = vpack.c.b16 %v225, %v225
  %290 = vst [vmem:[%s5] sm:$0xf] %v226
  %291 = vst [vmem:[%s5 + $0x4] sm:$0xf] %v227
  %292 = vst [vmem:[%s5 + $0x8] sm:$0xf] %v228
  %293 = vst [vmem:[%s5 + $0xc] sm:$0xf] %v229
  %294 = vst [vmem:[%s5 + $0x10] sm:$0xf] %v230
  %295 = vst [vmem:[%s5 + $0x14] sm:$0xf] %v231
  %296 = vst [vmem:[%s5 + $0x18] sm:$0xf] %v232
  %297 = vst [vmem:[%s5 + $0x1c] sm:$0xf] %v233
  %298 = vst [vmem:[%s5 + $0x20] sm:$0xf] %v234
  %299 = vst [vmem:[%s5 + $0x24] sm:$0xf] %v235
  %300 = vst [vmem:[%s5 + $0x28] sm:$0xf] %v236
  %301 = vst [vmem:[%s5 + $0x2c] sm:$0xf] %v237
  %302 = vst [vmem:[%s5 + $0x30] sm:$0xf] %v238
  %303 = vst [vmem:[%s5 + $0x34] sm:$0xf] %v239
  %304 = vst [vmem:[%s5 + $0x38] sm:$0xf] %v240
  %305 = vst [vmem:[%s5 + $0x3c] sm:$0xf] %v241
  %306 = vst [vmem:[%s5 + $0x40] sm:$0xf] %v242
  %307 = vst [vmem:[%s5 + $0x44] sm:$0xf] %v243
  %308 = vst [vmem:[%s5 + $0x48] sm:$0xf] %v244
  %309 = vst [vmem:[%s5 + $0x4c] sm:$0xf] %v245
  %310 = vst [vmem:[%s5 + $0x50] sm:$0xf] %v246
  %311 = vst [vmem:[%s5 + $0x54] sm:$0xf] %v247
  %312 = vst [vmem:[%s5 + $0x58] sm:$0xf] %v248
  %313 = vst [vmem:[%s5 + $0x5c] sm:$0xf] %v249
  %314 = vst [vmem:[%s5 + $0x60] sm:$0xf] %v250
  %315 = vst [vmem:[%s5 + $0x64] sm:$0xf] %v251
  %316 = vst [vmem:[%s5 + $0x68] sm:$0xf] %v252
  %317 = vst [vmem:[%s5 + $0x6c] sm:$0xf] %v253
  %318 = vst [vmem:[%s5 + $0x70] sm:$0xf] %v254
  %319 = vst [vmem:[%s5 + $0x74] sm:$0xf] %v255
  %320 = vst [vmem:[%s5 + $0x78] sm:$0xf] %v256
  %321 = vst [vmem:[%s5 + $0x7c] sm:$0xf] %v257
  %p322 = scmp.eq.s32.totalorder 0, 0
  // Predicated region
  $region22: #{_forward_padded.8} parent=0 // pred_check
    %p323 = pneg %p322
  $region23: #{_forward_padded.8} parent=0 // pred_check_branch
    %325 = sbr.rel (%p323) target = $region25
  $region24: #{_forward_padded.8} parent=0 // pred_region
    %326 = vst [vmem:[%s6] sm:$0xff] 0.0
  $region25: #{_forward_padded.8} parent=0 // pred_fallthru
    _
  %v327 = vld [vmem:[%s6] sm:$0xff]
  %v328 = vld [vmem:[%s4] sm:$0xff]
  %v330 = vunpack.c.l.b16 %v328
  %v331 = vunpack.c.h.b16 %v328
  %v332 = vpack.c.b16 %v330, %v330
  %v333 = vpack.c.b16 %v331, %v331
  %336 = vmatprep.subr.bf16.mxu0 0
  %337 = vmatpush1.bf16.msra.mxu0 %v169
  %338 = vmatprep.subr.bf16.mxu0 0
  %339 = vmatpush1.bf16.msra.mxu0 %v168
  %340 = vmatprep.subr.bf16.mxu0 0
  %341 = vmatpush1.bf16.msra.mxu0 %v167
  %342 = vmatprep.subr.bf16.mxu0 0
  %343 = vmatpush1.bf16.msra.mxu0 %v166
  %344 = vmatprep.subr.bf16.mxu0 0
  %345 = vmatpush1.bf16.msra.mxu0 %v165
  %346 = vmatprep.subr.bf16.mxu0 0
  %347 = vmatpush1.bf16.msra.mxu0 %v164
  %348 = vmatprep.subr.bf16.mxu0 0
  %349 = vmatpush1.bf16.msra.mxu0 %v163
  %350 = vmatprep.subr.bf16.mxu0 0
  %351 = vmatpush1.bf16.msra.mxu0 %v162
  %352 = vmatprep.subr.bf16.mxu0 0
  %353 = vmatpush2.bf16.msra.mxu0 %v177
  %354 = vmatprep.subr.bf16.mxu0 0
  %355 = vmatpush2.bf16.msra.mxu0 %v176
  %356 = vmatprep.subr.bf16.mxu0 0
  %357 = vmatpush2.bf16.msra.mxu0 %v175
  %358 = vmatprep.subr.bf16.mxu0 0
  %359 = vmatpush2.bf16.msra.mxu0 %v174
  %360 = vmatprep.subr.bf16.mxu0 0
  %361 = vmatpush2.bf16.msra.mxu0 %v173
  %362 = vmatprep.subr.bf16.mxu0 0
  %363 = vmatpush2.bf16.msra.mxu0 %v172
  %364 = vmatprep.subr.bf16.mxu0 0
  %365 = vmatpush2.bf16.msra.mxu0 %v171
  %366 = vmatprep.subr.bf16.mxu0 0
  %367 = vmatpush2.bf16.msra.mxu0 %v170
  %368 = vmatprep.mubr.bf16.mxu0 %v333
  %369 = vmatmul.mubr.bf16.gmra.mxu0 %v332
  %v370 = vpop.f32.mrf.mxu0
  %v371 = vadd.f32 0.0, %v370
  %v372 = vpop.f32.mrf.mxu0
  %v373 = vpop.f32.mrf.mxu0
  %v374 = vpop.f32.mrf.mxu0
  %375 = vdwg.mxu0
  %v376 = vadd.f32 %v327, %v371
  %377 = vst [vmem:[%s6] sm:$0xff] %v376
  // Predicated region
  $region26: #{_forward_padded.8} parent=0 // pred_check
    _
  $region27: #{_forward_padded.8} parent=0 // pred_check_branch
    %379 = sbr.rel (0) target = $region29
  $region28: #{_forward_padded.8} parent=0 // pred_region
    _
  $region29: #{_forward_padded.8} parent=0 // pred_fallthru
    _
  // Predicated region
  $region30: #{_forward_padded.8} parent=0 // pred_check
    _
  $region31: #{_forward_padded.8} parent=0 // pred_check_branch
    %381 = sbr.rel (0) target = $region33
  $region32: #{_forward_padded.8} parent=0 // pred_region
    _
  $region33: #{_forward_padded.8} parent=0 // pred_fallthru
    _
  // Predicated region
  $region34: #{_forward_padded.8} parent=0 // pred_check
    _
  $region35: #{_forward_padded.8} parent=0 // pred_check_branch
    %383 = sbr.rel (0) target = $region37
  $region36: #{_forward_padded.8} parent=0 // pred_region
    _
  $region37: #{_forward_padded.8} parent=0 // pred_fallthru
    _
  // Predicated region
  $region38: #{_forward_padded.8} parent=0 // pred_check
    _
  $region39: #{_forward_padded.8} parent=0 // pred_check_branch
    %385 = sbr.rel (0) target = $region41
  $region40: #{_forward_padded.8} parent=0 // pred_region
    _
  $region41: #{_forward_padded.8} parent=0 // pred_fallthru
    _

// kernel: _forward_padded.12
$region0: #{_forward_padded.12}
  #allocation0 [shape = 'u32[]', space=smem, size = 0x4, offset = 0x4, fixed_abs, tag = 'smem constant byte address 0x4 - core index']
  #allocation1 [shape = 'u32[144,128]{1,0:T(1,128)}', space=vmem, size = 0x12000, scoped, tag = 'internal scratch']
  %s0 = inlined_call_operand.vmem [shape: f32[256,128], index: 0, kind: input, shape index: {}]
  %s1 = inlined_call_operand.vmem [shape: f32[1,8,128], index: 1, kind: input, shape index: {}]
  %s2 = inlined_call_operand.vmem [shape: f32[1,128], index: 2, kind: input, shape index: {}]
  %s3 = inlined_call_operand.vmem [shape: f32[1,128], index: 3, kind: input, shape index: {}]
  %s4 = inlined_call_operand.vmem [shape: bf16[8,256], index: 4, kind: input, shape index: {}]
  %s5 = inlined_call_operand.hbm [shape: bf16[256,128], index: 5, kind: output, shape index: {0}]
  %s6 = inlined_call_operand.vmem [shape: f32[8,128], index: 6, kind: output, shape index: {1}]
  %7 = xla_tuple %s5, %s6
  %s8 = sld [smem:[#allocation0]]
  $region42: #{_forward_padded.12} parent=0
    _
  %s10 = ssub.s32 1, %s8
  %s11 = scalar_select 0, %s10, %s8
  $region1: #{_forward_padded.12} parent=0
    #allocation2 [shape = 'u8[65536]{0}', space=vmem, size = 0x10000, scoped, tag = 'output window, operand 0, single buffered']
    #allocation3 [shape = 's32[1]{0}', space=sflag, size = 0x4, scoped, tag = 'scoped memory for _forward_padded.12']
    %12 = vsyncpa [#allocation3], 0
    // Predicated region
    $region2: #{_forward_padded.12} parent=1 // pred_check
      _
    $region3: #{_forward_padded.12} parent=1 // pred_check_branch
      %14 = sbr.rel (0) target = $region5
    $region4: #{_forward_padded.12} parent=1 // pred_region
      _
    $region5: #{_forward_padded.12} parent=1 // pred_fallthru
      _
    // Predicated region
    $region6: #{_forward_padded.12} parent=1 // pred_check
      _
    $region7: #{_forward_padded.12} parent=1 // pred_check_branch
      %16 = sbr.rel (0) target = $region9
    $region8: #{_forward_padded.12} parent=1 // pred_region
      _
    $region9: #{_forward_padded.12} parent=1 // pred_fallthru
      _
    // Predicated region
    $region10: #{_forward_padded.12} parent=1 // pred_check
      _
    $region11: #{_forward_padded.12} parent=1 // pred_check_branch
      %18 = sbr.rel (0) target = $region13
    $region12: #{_forward_padded.12} parent=1 // pred_region
      _
    $region13: #{_forward_padded.12} parent=1 // pred_fallthru
      _
    // Predicated region
    $region14: #{_forward_padded.12} parent=1 // pred_check
      _
    $region15: #{_forward_padded.12} parent=1 // pred_check_branch
      %20 = sbr.rel (0) target = $region17
    $region16: #{_forward_padded.12} parent=1 // pred_region
      _
    $region17: #{_forward_padded.12} parent=1 // pred_fallthru
      _
    // Predicated region
    $region18: #{_forward_padded.12} parent=1 // pred_check
      _
    $region19: #{_forward_padded.12} parent=1 // pred_check_branch
      %22 = sbr.rel (0) target = $region21
    $region20: #{_forward_padded.12} parent=1 // pred_region
      _
    $region21: #{_forward_padded.12} parent=1 // pred_fallthru
      _
    %v24 = vld [vmem:[%s1] sm:$0xff]
    %v25 = vadd.f32 %v24, 0.0
    %v26 = vmul.f32 %v25, %v25
    %v28 = vrot.slane %v26, 7
    %v30 = vsub.f32 %v25, %v28
    %v31 = vld [vmem:[%s2] sm:$0x1]
    %v32 = vadd.f32 %v30, 1e-05
    %v33 = vrsqrt.pop %v32
    %v36 = vunpack.c.l.s4 1966171168
    %v37 = vunpack.c.0.s8 %v36
    %v38 = vlaneseq
    %v39 = vshrl.u32 %v38, 7
    %v40 = vsub.s32 %v37, %v39
    %v41 = vrot.slane %v33, %v40
    %v42 = vcombine.high %v41, %v41
    %v44 = vunpack.c.l.s4 1966171168
    %v45 = vunpack.c.0.s8 %v44
    %v46 = vlaneseq
    %v47 = vshrl.u32 %v46, 7
    %v48 = vsub.s32 %v45, %v47
    %v49 = vrot.slane %v42, %v48
    %v51 = vmul.f32 %v31, %v49
    %v52 = vld [vmem:[%s3] sm:$0x1]
    %v53 = vmul.f32 %v25, %v51
    %v54 = vsub.f32 %v52, %v53
    %v55 = vld [vmem:[%s0] sm:$0xff]
    %v56 = vld [vmem:[%s0 + $0x8] sm:$0xff]
    %v57 = vld [vmem:[%s0 + $0x10] sm:$0xff]
    %v58 = vld [vmem:[%s0 + $0x18] sm:$0xff]
    %v59 = vld [vmem:[%s0 + $0x20] sm:$0xff]
    %v60 = vld [vmem:[%s0 + $0x28] sm:$0xff]
    %v61 = vld [vmem:[%s0 + $0x30] sm:$0xff]
    %v62 = vld [vmem:[%s0 + $0x38] sm:$0xff]
    %v63 = vld [vmem:[%s0 + $0x40] sm:$0xff]
    %v64 = vld [vmem:[%s0 + $0x48] sm:$0xff]
    %v65 = vld [vmem:[%s0 + $0x50] sm:$0xff]
    %v66 = vld [vmem:[%s0 + $0x58] sm:$0xff]
    %v67 = vld [vmem:[%s0 + $0x60] sm:$0xff]
    %v68 = vld [vmem:[%s0 + $0x68] sm:$0xff]
    %v69 = vld [vmem:[%s0 + $0x70] sm:$0xff]
    %v70 = vld [vmem:[%s0 + $0x78] sm:$0xff]
    %v71 = vld [vmem:[%s0 + $0x80] sm:$0xff]
    %v72 = vld [vmem:[%s0 + $0x88] sm:$0xff]
    %v73 = vld [vmem:[%s0 + $0x90] sm:$0xff]
    %v74 = vld [vmem:[%s0 + $0x98] sm:$0xff]
    %v75 = vld [vmem:[%s0 + $0xa0] sm:$0xff]
    %v76 = vld [vmem:[%s0 + $0xa8] sm:$0xff]
    %v77 = vld [vmem:[%s0 + $0xb0] sm:$0xff]
    %v78 = vld [vmem:[%s0 + $0xb8] sm:$0xff]
    %v79 = vld [vmem:[%s0 + $0xc0] sm:$0xff]
    %v80 = vld [vmem:[%s0 + $0xc8] sm:$0xff]
    %v81 = vld [vmem:[%s0 + $0xd0] sm:$0xff]
    %v82 = vld [vmem:[%s0 + $0xd8] sm:$0xff]
    %v83 = vld [vmem:[%s0 + $0xe0] sm:$0xff]
    %v84 = vld [vmem:[%s0 + $0xe8] sm:$0xff]
    %v85 = vld [vmem:[%s0 + $0xf0] sm:$0xff]
    %v86 = vld [vmem:[%s0 + $0xf8] sm:$0xff]
    %v88 = vlaneseq
    %v89 = vshrl.u32 %v88, 7
    %v90 = vsub.s32 0, %v89
    %v91 = vrot.slane %v51, %v90
    %v93 = vmul.f32 %v55, %v91
    %v94 = vmul.f32 %v56, %v91
    %v95 = vmul.f32 %v57, %v91
    %v96 = vmul.f32 %v58, %v91
    %v97 = vmul.f32 %v59, %v91
    %v98 = vmul.f32 %v60, %v91
    %v99 = vmul.f32 %v61, %v91
    %v100 = vmul.f32 %v62, %v91
    %v101 = vmul.f32 %v63, %v91
    %v102 = vmul.f32 %v64, %v91
    %v103 = vmul.f32 %v65, %v91
    %v104 = vmul.f32 %v66, %v91
    %v105 = vmul.f32 %v67, %v91
    %v106 = vmul.f32 %v68, %v91
    %v107 = vmul.f32 %v69, %v91
    %v108 = vmul.f32 %v70, %v91
    %v109 = vmul.f32 %v71, %v91
    %v110 = vmul.f32 %v72, %v91
    %v111 = vmul.f32 %v73, %v91
    %v112 = vmul.f32 %v74, %v91
    %v113 = vmul.f32 %v75, %v91
    %v114 = vmul.f32 %v76, %v91
    %v115 = vmul.f32 %v77, %v91
    %v116 = vmul.f32 %v78, %v91
    %v117 = vmul.f32 %v79, %v91
    %v118 = vmul.f32 %v80, %v91
    %v119 = vmul.f32 %v81, %v91
    %v120 = vmul.f32 %v82, %v91
    %v121 = vmul.f32 %v83, %v91
    %v122 = vmul.f32 %v84, %v91
    %v123 = vmul.f32 %v85, %v91
    %v124 = vmul.f32 %v86, %v91
    %v126 = vlaneseq
    %v127 = vshrl.u32 %v126, 7
    %v128 = vsub.s32 0, %v127
    %v129 = vrot.slane %v54, %v128
    %v131 = vadd.f32 %v93, %v129
    %v132 = vadd.f32 %v94, %v129
    %v133 = vadd.f32 %v95, %v129
    %v134 = vadd.f32 %v96, %v129
    %v135 = vadd.f32 %v97, %v129
    %v136 = vadd.f32 %v98, %v129
    %v137 = vadd.f32 %v99, %v129
    %v138 = vadd.f32 %v100, %v129
    %v139 = vadd.f32 %v101, %v129
    %v140 = vadd.f32 %v102, %v129
    %v141 = vadd.f32 %v103, %v129
    %v142 = vadd.f32 %v104, %v129
    %v143 = vadd.f32 %v105, %v129
    %v144 = vadd.f32 %v106, %v129
    %v145 = vadd.f32 %v107, %v129
    %v146 = vadd.f32 %v108, %v129
    %v147 = vadd.f32 %v109, %v129
    %v148 = vadd.f32 %v110, %v129
    %v149 = vadd.f32 %v111, %v129
    %v150 = vadd.f32 %v112, %v129
    %v151 = vadd.f32 %v113, %v129
    %v152 = vadd.f32 %v114, %v129
    %v153 = vadd.f32 %v115, %v129
    %v154 = vadd.f32 %v116, %v129
    %v155 = vadd.f32 %v117, %v129
    %v156 = vadd.f32 %v118, %v129
    %v157 = vadd.f32 %v119, %v129
    %v158 = vadd.f32 %v120, %v129
    %v159 = vadd.f32 %v121, %v129
    %v160 = vadd.f32 %v122, %v129
    %v161 = vadd.f32 %v123, %v129
    %v162 = vadd.f32 %v124, %v129
    %v163 = vpack.c.bf16 %v132, %v131
    %v164 = vpack.c.bf16 %v134, %v133
    %v165 = vpack.c.bf16 %v136, %v135
    %v166 = vpack.c.bf16 %v138, %v137
    %v167 = vpack.c.bf16 %v140, %v139
    %v168 = vpack.c.bf16 %v142, %v141
    %v169 = vpack.c.bf16 %v144, %v143
    %v170 = vpack.c.bf16 %v146, %v145
    %v171 = vpack.c.bf16 %v148, %v147
    %v172 = vpack.c.bf16 %v150, %v149
    %v173 = vpack.c.bf16 %v152, %v151
    %v174 = vpack.c.bf16 %v154, %v153
    %v175 = vpack.c.bf16 %v156, %v155
    %v176 = vpack.c.bf16 %v158, %v157
    %v177 = vpack.c.bf16 %v160, %v159
    %v178 = vpack.c.bf16 %v162, %v161
    %v195 = vunpack.c.l.b16 %v163
    %v196 = vunpack.c.h.b16 %v163
    %v197 = vunpack.c.l.b16 %v164
    %v198 = vunpack.c.h.b16 %v164
    %v199 = vunpack.c.l.b16 %v165
    %v200 = vunpack.c.h.b16 %v165
    %v201 = vunpack.c.l.b16 %v166
    %v202 = vunpack.c.h.b16 %v166
    %v203 = vunpack.c.l.b16 %v167
    %v204 = vunpack.c.h.b16 %v167
    %v205 = vunpack.c.l.b16 %v168
    %v206 = vunpack.c.h.b16 %v168
    %v207 = vunpack.c.l.b16 %v169
    %v208 = vunpack.c.h.b16 %v169
    %v209 = vunpack.c.l.b16 %v170
    %v210 = vunpack.c.h.b16 %v170
    %v211 = vunpack.c.l.b16 %v171
    %v212 = vunpack.c.h.b16 %v171
    %v213 = vunpack.c.l.b16 %v172
    %v214 = vunpack.c.h.b16 %v172
    %v215 = vunpack.c.l.b16 %v173
    %v216 = vunpack.c.h.b16 %v173
    %v217 = vunpack.c.l.b16 %v174
    %v218 = vunpack.c.h.b16 %v174
    %v219 = vunpack.c.l.b16 %v175
    %v220 = vunpack.c.h.b16 %v175
    %v221 = vunpack.c.l.b16 %v176
    %v222 = vunpack.c.h.b16 %v176
    %v223 = vunpack.c.l.b16 %v177
    %v224 = vunpack.c.h.b16 %v177
    %v225 = vunpack.c.l.b16 %v178
    %v226 = vunpack.c.h.b16 %v178
    %v227 = vpack.c.b16 %v195, %v195
    %v228 = vpack.c.b16 %v196, %v196
    %v229 = vpack.c.b16 %v197, %v197
    %v230 = vpack.c.b16 %v198, %v198
    %v231 = vpack.c.b16 %v199, %v199
    %v232 = vpack.c.b16 %v200, %v200
    %v233 = vpack.c.b16 %v201, %v201
    %v234 = vpack.c.b16 %v202, %v202
    %v235 = vpack.c.b16 %v203, %v203
    %v236 = vpack.c.b16 %v204, %v204
    %v237 = vpack.c.b16 %v205, %v205
    %v238 = vpack.c.b16 %v206, %v206
    %v239 = vpack.c.b16 %v207, %v207
    %v240 = vpack.c.b16 %v208, %v208
    %v241 = vpack.c.b16 %v209, %v209
    %v242 = vpack.c.b16 %v210, %v210
    %v243 = vpack.c.b16 %v211, %v211
    %v244 = vpack.c.b16 %v212, %v212
    %v245 = vpack.c.b16 %v213, %v213
    %v246 = vpack.c.b16 %v214, %v214
    %v247 = vpack.c.b16 %v215, %v215
    %v248 = vpack.c.b16 %v216, %v216
    %v249 = vpack.c.b16 %v217, %v217
    %v250 = vpack.c.b16 %v218, %v218
    %v251 = vpack.c.b16 %v219, %v219
    %v252 = vpack.c.b16 %v220, %v220
    %v253 = vpack.c.b16 %v221, %v221
    %v254 = vpack.c.b16 %v222, %v222
    %v255 = vpack.c.b16 %v223, %v223
    %v256 = vpack.c.b16 %v224, %v224
    %v257 = vpack.c.b16 %v225, %v225
    %v258 = vpack.c.b16 %v226, %v226
    %291 = vst [vmem:[#allocation2] sm:$0xf] %v227
    %292 = vst [vmem:[#allocation2 + $0x4] sm:$0xf] %v228
    %293 = vst [vmem:[#allocation2 + $0x8] sm:$0xf] %v229
    %294 = vst [vmem:[#allocation2 + $0xc] sm:$0xf] %v230
    %295 = vst [vmem:[#allocation2 + $0x10] sm:$0xf] %v231
    %296 = vst [vmem:[#allocation2 + $0x14] sm:$0xf] %v232
    %297 = vst [vmem:[#allocation2 + $0x18] sm:$0xf] %v233
    %298 = vst [vmem:[#allocation2 + $0x1c] sm:$0xf] %v234
    %299 = vst [vmem:[#allocation2 + $0x20] sm:$0xf] %v235
    %300 = vst [vmem:[#allocation2 + $0x24] sm:$0xf] %v236
    %301 = vst [vmem:[#allocation2 + $0x28] sm:$0xf] %v237
    %302 = vst [vmem:[#allocation2 + $0x2c] sm:$0xf] %v238
    %303 = vst [vmem:[#allocation2 + $0x30] sm:$0xf] %v239
    %304 = vst [vmem:[#allocation2 + $0x34] sm:$0xf] %v240
    %305 = vst [vmem:[#allocation2 + $0x38] sm:$0xf] %v241
    %306 = vst [vmem:[#allocation2 + $0x3c] sm:$0xf] %v242
    %307 = vst [vmem:[#allocation2 + $0x40] sm:$0xf] %v243
    %308 = vst [vmem:[#allocation2 + $0x44] sm:$0xf] %v244
    %309 = vst [vmem:[#allocation2 + $0x48] sm:$0xf] %v245
    %310 = vst [vmem:[#allocation2 + $0x4c] sm:$0xf] %v246
    %311 = vst [vmem:[#allocation2 + $0x50] sm:$0xf] %v247
    %312 = vst [vmem:[#allocation2 + $0x54] sm:$0xf] %v248
    %313 = vst [vmem:[#allocation2 + $0x58] sm:$0xf] %v249
    %314 = vst [vmem:[#allocation2 + $0x5c] sm:$0xf] %v250
    %315 = vst [vmem:[#allocation2 + $0x60] sm:$0xf] %v251
    %316 = vst [vmem:[#allocation2 + $0x64] sm:$0xf] %v252
    %317 = vst [vmem:[#allocation2 + $0x68] sm:$0xf] %v253
    %318 = vst [vmem:[#allocation2 + $0x6c] sm:$0xf] %v254
    %319 = vst [vmem:[#allocation2 + $0x70] sm:$0xf] %v255
    %320 = vst [vmem:[#allocation2 + $0x74] sm:$0xf] %v256
    %321 = vst [vmem:[#allocation2 + $0x78] sm:$0xf] %v257
    %322 = vst [vmem:[#allocation2 + $0x7c] sm:$0xf] %v258
    %p323 = scmp.eq.s32.totalorder 0, 0
    // Predicated region
    $region22: #{_forward_padded.12} parent=1 // pred_check
      %p324 = pneg %p323
    $region23: #{_forward_padded.12} parent=1 // pred_check_branch
      %326 = sbr.rel (%p324) target = $region25
    $region24: #{_forward_padded.12} parent=1 // pred_region
      %327 = vst [vmem:[%s6] sm:$0xff] 0.0
    $region25: #{_forward_padded.12} parent=1 // pred_fallthru
      _
    %v328 = vld [vmem:[%s6] sm:$0xff]
    %v329 = vld [vmem:[%s4] sm:$0xff]
    %v331 = vunpack.c.l.b16 %v329
    %v332 = vunpack.c.h.b16 %v329
    %v333 = vpack.c.b16 %v331, %v331
    %v334 = vpack.c.b16 %v332, %v332
    %337 = vmatprep.subr.bf16.mxu0 0
    %338 = vmatpush1.bf16.msra.mxu0 %v170
    %339 = vmatprep.subr.bf16.mxu0 0
    %340 = vmatpush1.bf16.msra.mxu0 %v169
    %341 = vmatprep.subr.bf16.mxu0 0
    %342 = vmatpush1.bf16.msra.mxu0 %v168
    %343 = vmatprep.subr.bf16.mxu0 0
    %344 = vmatpush1.bf16.msra.mxu0 %v167
    %345 = vmatprep.subr.bf16.mxu0 0
    %346 = vmatpush1.bf16.msra.mxu0 %v166
    %347 = vmatprep.subr.bf16.mxu0 0
    %348 = vmatpush1.bf16.msra.mxu0 %v165
    %349 = vmatprep.subr.bf16.mxu0 0
    %350 = vmatpush1.bf16.msra.mxu0 %v164
    %351 = vmatprep.subr.bf16.mxu0 0
    %352 = vmatpush1.bf16.msra.mxu0 %v163
    %353 = vmatprep.subr.bf16.mxu0 0
    %354 = vmatpush2.bf16.msra.mxu0 %v178
    %355 = vmatprep.subr.bf16.mxu0 0
    %356 = vmatpush2.bf16.msra.mxu0 %v177
    %357 = vmatprep.subr.bf16.mxu0 0
    %358 = vmatpush2.bf16.msra.mxu0 %v176
    %359 = vmatprep.subr.bf16.mxu0 0
    %360 = vmatpush2.bf16.msra.mxu0 %v175
    %361 = vmatprep.subr.bf16.mxu0 0
    %362 = vmatpush2.bf16.msra.mxu0 %v174
    %363 = vmatprep.subr.bf16.mxu0 0
    %364 = vmatpush2.bf16.msra.mxu0 %v173
    %365 = vmatprep.subr.bf16.mxu0 0
    %366 = vmatpush2.bf16.msra.mxu0 %v172
    %367 = vmatprep.subr.bf16.mxu0 0
    %368 = vmatpush2.bf16.msra.mxu0 %v171
    %369 = vmatprep.mubr.bf16.mxu0 %v334
    %370 = vmatmul.mubr.bf16.gmra.mxu0 %v333
    %v371 = vpop.f32.mrf.mxu0
    %v372 = vadd.f32 0.0, %v371
    %v373 = vpop.f32.mrf.mxu0
    %v374 = vpop.f32.mrf.mxu0
    %v375 = vpop.f32.mrf.mxu0
    %376 = vdwg.mxu0
    %v377 = vadd.f32 %v328, %v372
    %378 = vst [vmem:[%s6] sm:$0xff] %v377
    // Predicated region
    $region26: #{_forward_padded.12} parent=1 // pred_check
      _
    $region27: #{_forward_padded.12} parent=1 // pred_check_branch
      %380 = sbr.rel (0) target = $region29
    $region28: #{_forward_padded.12} parent=1 // pred_region
      %s382 = ssub.s32 2048, 2048
      %383 = vsyncadd [#allocation3], %s382
      %s384 = sshll.u32 [#allocation2], 4
      %s385 = int_to_ptr.vmem [resolvable:$true] %s384
      %390 = dma.vmem_to_hbm [thread:$0]  %s385, 2048, %s5, [#allocation3], 64, 64, 4
    $region29: #{_forward_padded.12} parent=1 // pred_fallthru
      _
    // Predicated region
    $region30: #{_forward_padded.12} parent=1 // pred_check
      _
    $region31: #{_forward_padded.12} parent=1 // pred_check_branch
      %392 = sbr.rel (0) target = $region33
    $region32: #{_forward_padded.12} parent=1 // pred_region
      _
    $region33: #{_forward_padded.12} parent=1 // pred_fallthru
      _
    // Predicated region
    $region34: #{_forward_padded.12} parent=1 // pred_check
      _
    $region35: #{_forward_padded.12} parent=1 // pred_check_branch
      %394 = sbr.rel (0) target = $region37
    $region36: #{_forward_padded.12} parent=1 // pred_region
      %395 = dma.done [#allocation3], 2048
    $region37: #{_forward_padded.12} parent=1 // pred_fallthru
      _
    // Predicated region
    $region38: #{_forward_padded.12} parent=1 // pred_check
      _
    $region39: #{_forward_padded.12} parent=1 // pred_check_branch
      %397 = sbr.rel (0) target = $region41
    $region40: #{_forward_padded.12} parent=1 // pred_region
      _
    $region41: #{_forward_padded.12} parent=1 // pred_fallthru
      _
    %398 = vsyncpa [#allocation3], 1

// kernel: _forward_padded.13
$region0: #{_forward_padded.13}
  #allocation0 [shape = 'u32[]', space=smem, size = 0x4, offset = 0x4, fixed_abs, tag = 'smem constant byte address 0x4 - core index']
  #allocation1 [shape = 'u32[144,128]{1,0:T(1,128)}', space=vmem, size = 0x12000, scoped, tag = 'internal scratch']
  %s0 = inlined_call_operand.vmem [shape: f32[3,8,128], index: 0, kind: input, shape index: {}]
  %s1 = inlined_call_operand.vmem [shape: f32[3,128,384], index: 1, kind: input, shape index: {}]
  %s2 = inlined_call_operand.vmem [shape: f32[1,384], index: 2, kind: input, shape index: {}]
  %s3 = inlined_call_operand.vmem [shape: f32[384,384], index: 3, kind: input, shape index: {}]
  %s4 = inlined_call_operand.vmem [shape: f32[1,384], index: 4, kind: input, shape index: {}]
  %s5 = inlined_call_operand.hbm [shape: f32[8,384], index: 5, kind: output, shape index: {0}]
  %s6 = inlined_call_operand.hbm [shape: f32[8,384], index: 6, kind: output, shape index: {1}]
  %7 = xla_tuple %s5, %s6
  %s8 = sld [smem:[#allocation0]]
  $region38: #{_forward_padded.13} parent=0
    _
  %s10 = ssub.s32 1, %s8
  %s11 = scalar_select 0, %s10, %s8
  $region1: #{_forward_padded.13} parent=0
    #allocation2 [shape = 'u8[12288]{0}', space=vmem, size = 0x3000, scoped, tag = 'output window, operand 0, single buffered']
    #allocation3 [shape = 's32[1]{0}', space=sflag, size = 0x4, scoped, tag = 'scoped memory for _forward_padded.13']
    #allocation4 [shape = 'u8[12288]{0}', space=vmem, size = 0x3000, scoped, tag = 'output window, operand 1, single buffered']
    #allocation5 [shape = 's32[1]{0}', space=sflag, size = 0x4, scoped, tag = 'scoped memory for _forward_padded.13']
    %12 = vsyncpa [#allocation3], 0
    %13 = vsyncpa [#allocation5], 0
    // Predicated region
    $region2: #{_forward_padded.13} parent=1 // pred_check
      _
    $region3: #{_forward_padded.13} parent=1 // pred_check_branch
      %15 = sbr.rel (0) target = $region5
    $region4: #{_forward_padded.13} parent=1 // pred_region
      _
    $region5: #{_forward_padded.13} parent=1 // pred_fallthru
      _
    // Predicated region
    $region6: #{_forward_padded.13} parent=1 // pred_check
      _
    $region7: #{_forward_padded.13} parent=1 // pred_check_branch
      %17 = sbr.rel (0) target = $region9
    $region8: #{_forward_padded.13} parent=1 // pred_region
      _
    $region9: #{_forward_padded.13} parent=1 // pred_fallthru
      _
    // Predicated region
    $region10: #{_forward_padded.13} parent=1 // pred_check
      _
    $region11: #{_forward_padded.13} parent=1 // pred_check_branch
      %19 = sbr.rel (0) target = $region13
    $region12: #{_forward_padded.13} parent=1 // pred_region
      _
    $region13: #{_forward_padded.13} parent=1 // pred_fallthru
      _
    // Predicated region
    $region14: #{_forward_padded.13} parent=1 // pred_check
      _
    $region15: #{_forward_padded.13} parent=1 // pred_check_branch
      %21 = sbr.rel (0) target = $region17
    $region16: #{_forward_padded.13} parent=1 // pred_region
      _
    $region17: #{_forward_padded.13} parent=1 // pred_fallthru
      _
    // Predicated region
    $region18: #{_forward_padded.13} parent=1 // pred_check
      _
    $region19: #{_forward_padded.13} parent=1 // pred_check_branch
      %23 = sbr.rel (0) target = $region21
    $region20: #{_forward_padded.13} parent=1 // pred_region
      _
    $region21: #{_forward_padded.13} parent=1 // pred_fallthru
      _
    %v24 = vld [vmem:[%s2] sm:$0x7]
    %v26 = vlaneseq
    %v27 = vshrl.u32 %v26, 7
    %v28 = vsub.s32 0, %v27
    %v29 = vrot.slane %v24, %v28
    %v30 = vlaneseq
    %v31 = vshrl.u32 %v30, 7
    %v32 = vsub.s32 1, %v31
    %v33 = vrot.slane %v24, %v32
    %v34 = vlaneseq
    %v35 = vshrl.u32 %v34, 7
    %v36 = vsub.s32 2, %v35
    %v37 = vrot.slane %v24, %v36
    %v41 = vadd.f32 %v29, 0.0
    %v42 = vadd.f32 %v33, 0.0
    %v43 = vadd.f32 %v37, 0.0
    %v44 = vld [vmem:[%s0] sm:$0xff]
    %v45 = vld [vmem:[%s1] sm:$0xff]
    %v46 = vld [vmem:[%s1 + $0x8] sm:$0xff]
    %v47 = vld [vmem:[%s1 + $0x10] sm:$0xff]
    %v48 = vld [vmem:[%s1 + $0x18] sm:$0xff]
    %v49 = vld [vmem:[%s1 + $0x20] sm:$0xff]
    %v50 = vld [vmem:[%s1 + $0x28] sm:$0xff]
    %v51 = vld [vmem:[%s1 + $0x30] sm:$0xff]
    %v52 = vld [vmem:[%s1 + $0x38] sm:$0xff]
    %v53 = vld [vmem:[%s1 + $0x40] sm:$0xff]
    %v54 = vld [vmem:[%s1 + $0x48] sm:$0xff]
    %v55 = vld [vmem:[%s1 + $0x50] sm:$0xff]
    %v56 = vld [vmem:[%s1 + $0x58] sm:$0xff]
    %v57 = vld [vmem:[%s1 + $0x60] sm:$0xff]
    %v58 = vld [vmem:[%s1 + $0x68] sm:$0xff]
    %v59 = vld [vmem:[%s1 + $0x70] sm:$0xff]
    %v60 = vld [vmem:[%s1 + $0x78] sm:$0xff]
    %v61 = vld [vmem:[%s1 + $0x80] sm:$0xff]
    %v62 = vld [vmem:[%s1 + $0x88] sm:$0xff]
    %v63 = vld [vmem:[%s1 + $0x90] sm:$0xff]
    %v64 = vld [vmem:[%s1 + $0x98] sm:$0xff]
    %v65 = vld [vmem:[%s1 + $0xa0] sm:$0xff]
    %v66 = vld [vmem:[%s1 + $0xa8] sm:$0xff]
    %v67 = vld [vmem:[%s1 + $0xb0] sm:$0xff]
    %v68 = vld [vmem:[%s1 + $0xb8] sm:$0xff]
    %v69 = vld [vmem:[%s1 + $0xc0] sm:$0xff]
    %v70 = vld [vmem:[%s1 + $0xc8] sm:$0xff]
    %v71 = vld [vmem:[%s1 + $0xd0] sm:$0xff]
    %v72 = vld [vmem:[%s1 + $0xd8] sm:$0xff]
    %v73 = vld [vmem:[%s1 + $0xe0] sm:$0xff]
    %v74 = vld [vmem:[%s1 + $0xe8] sm:$0xff]
    %v75 = vld [vmem:[%s1 + $0xf0] sm:$0xff]
    %v76 = vld [vmem:[%s1 + $0xf8] sm:$0xff]
    %v77 = vld [vmem:[%s1 + $0x100] sm:$0xff]
    %v78 = vld [vmem:[%s1 + $0x108] sm:$0xff]
    %v79 = vld [vmem:[%s1 + $0x110] sm:$0xff]
    %v80 = vld [vmem:[%s1 + $0x118] sm:$0xff]
    %v81 = vld [vmem:[%s1 + $0x120] sm:$0xff]
    %v82 = vld [vmem:[%s1 + $0x128] sm:$0xff]
    %v83 = vld [vmem:[%s1 + $0x130] sm:$0xff]
    %v84 = vld [vmem:[%s1 + $0x138] sm:$0xff]
    %v85 = vld [vmem:[%s1 + $0x140] sm:$0xff]
    %v86 = vld [vmem:[%s1 + $0x148] sm:$0xff]
    %v87 = vld [vmem:[%s1 + $0x150] sm:$0xff]
    %v88 = vld [vmem:[%s1 + $0x158] sm:$0xff]
    %v89 = vld [vmem:[%s1 + $0x160] sm:$0xff]
    %v90 = vld [vmem:[%s1 + $0x168] sm:$0xff]
    %v91 = vld [vmem:[%s1 + $0x170] sm:$0xff]
    %v92 = vld [vmem:[%s1 + $0x178] sm:$0xff]
    %93 = vmatprep.subr.mxu0 %v91
    %94 = vmatpush1.msra.mxu0 %v90
    %95 = vmatprep.subr.mxu0 %v88
    %96 = vmatpush1.msra.mxu0 %v87
    %97 = vmatprep.subr.mxu0 %v85
    %98 = vmatpush1.msra.mxu0 %v84
    %99 = vmatprep.subr.mxu0 %v82
    %100 = vmatpush1.msra.mxu0 %v81
    %101 = vmatprep.subr.mxu0 %v79
    %102 = vmatpush1.msra.mxu0 %v78
    %103 = vmatprep.subr.mxu0 %v76
    %104 = vmatpush1.msra.mxu0 %v75
    %105 = vmatprep.subr.mxu0 %v73
    %106 = vmatpush1.msra.mxu0 %v72
    %107 = vmatprep.subr.mxu0 %v70
    %108 = vmatpush1.msra.mxu0 %v69
    %109 = vmatprep.subr.mxu0 %v67
    %110 = vmatpush1.msra.mxu0 %v66
    %111 = vmatprep.subr.mxu0 %v64
    %112 = vmatpush1.msra.mxu0 %v63
    %113 = vmatprep.subr.mxu0 %v61
    %114 = vmatpush1.msra.mxu0 %v60
    %115 = vmatprep.subr.mxu0 %v58
    %116 = vmatpush1.msra.mxu0 %v57
    %117 = vmatprep.subr.mxu0 %v55
    %118 = vmatpush1.msra.mxu0 %v54
    %119 = vmatprep.subr.mxu0 %v52
    %120 = vmatpush1.msra.mxu0 %v51
    %121 = vmatprep.subr.mxu0 %v49
    %122 = vmatpush1.msra.mxu0 %v48
    %123 = vmatprep.subr.mxu0 %v46
    %124 = vmatpush1.msra.mxu0 %v45
    %125 = vmatprep.subr.mxu0 0.0
    %126 = vmatpush2.msra.mxu0 0.0
    %127 = vmatprep.subr.mxu0 0.0
    %128 = vmatpush2.msra.mxu0 0.0
    %129 = vmatprep.subr.mxu0 0.0
    %130 = vmatpush2.msra.mxu0 0.0
    %131 = vmatprep.subr.mxu0 0.0
    %132 = vmatpush2.msra.mxu0 0.0
    %133 = vmatprep.subr.mxu0 0.0
    %134 = vmatpush2.msra.mxu0 0.0
    %135 = vmatprep.subr.mxu0 0.0
    %136 = vmatpush2.msra.mxu0 0.0
    %137 = vmatprep.subr.mxu0 0.0
    %138 = vmatpush2.msra.mxu0 0.0
    %139 = vmatprep.subr.mxu0 0.0
    %140 = vmatpush2.msra.mxu0 0.0
    %141 = vmatprep.subr.mxu0 0.0
    %142 = vmatpush2.msra.mxu0 0.0
    %143 = vmatprep.subr.mxu0 0.0
    %144 = vmatpush2.msra.mxu0 0.0
    %145 = vmatprep.subr.mxu0 0.0
    %146 = vmatpush2.msra.mxu0 0.0
    %147 = vmatprep.subr.mxu0 0.0
    %148 = vmatpush2.msra.mxu0 0.0
    %149 = vmatprep.subr.mxu0 0.0
    %150 = vmatpush2.msra.mxu0 0.0
    %151 = vmatprep.subr.mxu0 0.0
    %152 = vmatpush2.msra.mxu0 0.0
    %153 = vmatprep.subr.mxu0 0.0
    %154 = vmatpush2.msra.mxu0 0.0
    %155 = vmatprep.subr.mxu0 0.0
    %156 = vmatpush2.msra.mxu0 0.0
    %157 = vmatprep.mubr.f32.mxu0 0.0
    %158 = vmatmul.mubr.f32.gmra.mxu0 %v44
    %v159 = vpop.f32.mrf.mxu0
    %v160 = vadd.f32 0.0, %v159
    %v161 = vpop.f32.mrf.mxu0
    %v162 = vadd.f32 0.0, %v161
    %163 = vdwg.mxu0
    %164 = vmatprep.subr.mxu0 0.0
    %165 = vmatpush1.msra.mxu0 %v92
    %166 = vmatprep.subr.mxu0 0.0
    %167 = vmatpush1.msra.mxu0 %v89
    %168 = vmatprep.subr.mxu0 0.0
    %169 = vmatpush1.msra.mxu0 %v86
    %170 = vmatprep.subr.mxu0 0.0
    %171 = vmatpush1.msra.mxu0 %v83
    %172 = vmatprep.subr.mxu0 0.0
    %173 = vmatpush1.msra.mxu0 %v80
    %174 = vmatprep.subr.mxu0 0.0
    %175 = vmatpush1.msra.mxu0 %v77
    %176 = vmatprep.subr.mxu0 0.0
    %177 = vmatpush1.msra.mxu0 %v74
    %178 = vmatprep.subr.mxu0 0.0
    %179 = vmatpush1.msra.mxu0 %v71
    %180 = vmatprep.subr.mxu0 0.0
    %181 = vmatpush1.msra.mxu0 %v68
    %182 = vmatprep.subr.mxu0 0.0
    %183 = vmatpush1.msra.mxu0 %v65
    %184 = vmatprep.subr.mxu0 0.0
    %185 = vmatpush1.msra.mxu0 %v62
    %186 = vmatprep.subr.mxu0 0.0
    %187 = vmatpush1.msra.mxu0 %v59
    %188 = vmatprep.subr.mxu0 0.0
    %189 = vmatpush1.msra.mxu0 %v56
    %190 = vmatprep.subr.mxu0 0.0
    %191 = vmatpush1.msra.mxu0 %v53
    %192 = vmatprep.subr.mxu0 0.0
    %193 = vmatpush1.msra.mxu0 %v50
    %194 = vmatprep.subr.mxu0 0.0
    %195 = vmatpush1.msra.mxu0 %v47
    %196 = vmatprep.subr.mxu0 0.0
    %197 = vmatpush2.msra.mxu0 0.0
    %198 = vmatprep.subr.mxu0 0.0
    %199 = vmatpush2.msra.mxu0 0.0
    %200 = vmatprep.subr.mxu0 0.0
    %201 = vmatpush2.msra.mxu0 0.0
    %202 = vmatprep.subr.mxu0 0.0
    %203 = vmatpush2.msra.mxu0 0.0
    %204 = vmatprep.subr.mxu0 0.0
    %205 = vmatpush2.msra.mxu0 0.0
    %206 = vmatprep.subr.mxu0 0.0
    %207 = vmatpush2.msra.mxu0 0.0
    %208 = vmatprep.subr.mxu0 0.0
    %209 = vmatpush2.msra.mxu0 0.0
    %210 = vmatprep.subr.mxu0 0.0
    %211 = vmatpush2.msra.mxu0 0.0
    %212 = vmatprep.subr.mxu0 0.0
    %213 = vmatpush2.msra.mxu0 0.0
    %214 = vmatprep.subr.mxu0 0.0
    %215 = vmatpush2.msra.mxu0 0.0
    %216 = vmatprep.subr.mxu0 0.0
    %217 = vmatpush2.msra.mxu0 0.0
    %218 = vmatprep.subr.mxu0 0.0
    %219 = vmatpush2.msra.mxu0 0.0
    %220 = vmatprep.subr.mxu0 0.0
    %221 = vmatpush2.msra.mxu0 0.0
    %222 = vmatprep.subr.mxu0 0.0
    %223 = vmatpush2.msra.mxu0 0.0
    %224 = vmatprep.subr.mxu0 0.0
    %225 = vmatpush2.msra.mxu0 0.0
    %226 = vmatprep.subr.mxu0 0.0
    %227 = vmatpush2.msra.mxu0 0.0
    %228 = vmatprep.mubr.f32.mxu0 0.0
    %229 = vmatmul.mubr.f32.gmra.mxu0 %v44
    %v230 = vpop.f32.mrf.mxu0
    %v231 = vadd.f32 0.0, %v230
    %v232 = vpop.f32.mrf.mxu0
    %233 = vdwg.mxu0
    %v234 = vadd.f32 %v41, %v160
    %v235 = vadd.f32 %v42, %v162
    %v236 = vadd.f32 %v43, %v231
    %v237 = vmul.f32 %v44, %v44
    %238 = vadd.xlane.f32.xlu0 %v237
    %v239 = vpop.xlane.xlu0 %238
    %v240 = vadd.f32 %v239, 0.0
    %s241 = scalar_lea.vmem %s0, 8
    %v242 = vld [vmem:[%s241] sm:$0xff]
    %s243 = scalar_lea.vmem %s1, 384
    %v244 = vld [vmem:[%s243] sm:$0xff]
    %v245 = vld [vmem:[%s243 + $0x8] sm:$0xff]
    %v246 = vld [vmem:[%s243 + $0x10] sm:$0xff]
    %v247 = vld [vmem:[%s243 + $0x18] sm:$0xff]
    %v248 = vld [vmem:[%s243 + $0x20] sm:$0xff]
    %v249 = vld [vmem:[%s243 + $0x28] sm:$0xff]
    %v250 = vld [vmem:[%s243 + $0x30] sm:$0xff]
    %v251 = vld [vmem:[%s243 + $0x38] sm:$0xff]
    %v252 = vld [vmem:[%s243 + $0x40] sm:$0xff]
    %v253 = vld [vmem:[%s243 + $0x48] sm:$0xff]
    %v254 = vld [vmem:[%s243 + $0x50] sm:$0xff]
    %v255 = vld [vmem:[%s243 + $0x58] sm:$0xff]
    %v256 = vld [vmem:[%s243 + $0x60] sm:$0xff]
    %v257 = vld [vmem:[%s243 + $0x68] sm:$0xff]
    %v258 = vld [vmem:[%s243 + $0x70] sm:$0xff]
    %v259 = vld [vmem:[%s243 + $0x78] sm:$0xff]
    %v260 = vld [vmem:[%s243 + $0x80] sm:$0xff]
    %v261 = vld [vmem:[%s243 + $0x88] sm:$0xff]
    %v262 = vld [vmem:[%s243 + $0x90] sm:$0xff]
    %v263 = vld [vmem:[%s243 + $0x98] sm:$0xff]
    %v264 = vld [vmem:[%s243 + $0xa0] sm:$0xff]
    %v265 = vld [vmem:[%s243 + $0xa8] sm:$0xff]
    %v266 = vld [vmem:[%s243 + $0xb0] sm:$0xff]
    %v267 = vld [vmem:[%s243 + $0xb8] sm:$0xff]
    %v268 = vld [vmem:[%s243 + $0xc0] sm:$0xff]
    %v269 = vld [vmem:[%s243 + $0xc8] sm:$0xff]
    %v270 = vld [vmem:[%s243 + $0xd0] sm:$0xff]
    %v271 = vld [vmem:[%s243 + $0xd8] sm:$0xff]
    %v272 = vld [vmem:[%s243 + $0xe0] sm:$0xff]
    %v273 = vld [vmem:[%s243 + $0xe8] sm:$0xff]
    %v274 = vld [vmem:[%s243 + $0xf0] sm:$0xff]
    %v275 = vld [vmem:[%s243 + $0xf8] sm:$0xff]
    %v276 = vld [vmem:[%s243 + $0x100] sm:$0xff]
    %v277 = vld [vmem:[%s243 + $0x108] sm:$0xff]
    %v278 = vld [vmem:[%s243 + $0x110] sm:$0xff]
    %v279 = vld [vmem:[%s243 + $0x118] sm:$0xff]
    %v280 = vld [vmem:[%s243 + $0x120] sm:$0xff]
    %v281 = vld [vmem:[%s243 + $0x128] sm:$0xff]
    %v282 = vld [vmem:[%s243 + $0x130] sm:$0xff]
    %v283 = vld [vmem:[%s243 + $0x138] sm:$0xff]
    %v284 = vld [vmem:[%s243 + $0x140] sm:$0xff]
    %v285 = vld [vmem:[%s243 + $0x148] sm:$0xff]
    %v286 = vld [vmem:[%s243 + $0x150] sm:$0xff]
    %v287 = vld [vmem:[%s243 + $0x158] sm:$0xff]
    %v288 = vld [vmem:[%s243 + $0x160] sm:$0xff]
    %v289 = vld [vmem:[%s243 + $0x168] sm:$0xff]
    %v290 = vld [vmem:[%s243 + $0x170] sm:$0xff]
    %v291 = vld [vmem:[%s243 + $0x178] sm:$0xff]
    %292 = vmatprep.subr.mxu0 %v290
    %293 = vmatpush1.msra.mxu0 %v289
    %294 = vmatprep.subr.mxu0 %v287
    %295 = vmatpush1.msra.mxu0 %v286
    %296 = vmatprep.subr.mxu0 %v284
    %297 = vmatpush1.msra.mxu0 %v283
    %298 = vmatprep.subr.mxu0 %v281
    %299 = vmatpush1.msra.mxu0 %v280
    %300 = vmatprep.subr.mxu0 %v278
    %301 = vmatpush1.msra.mxu0 %v277
    %302 = vmatprep.subr.mxu0 %v275
    %303 = vmatpush1.msra.mxu0 %v274
    %304 = vmatprep.subr.mxu0 %v272
    %305 = vmatpush1.msra.mxu0 %v271
    %306 = vmatprep.subr.mxu0 %v269
    %307 = vmatpush1.msra.mxu0 %v268
    %308 = vmatprep.subr.mxu0 %v266
    %309 = vmatpush1.msra.mxu0 %v265
    %310 = vmatprep.subr.mxu0 %v263
    %311 = vmatpush1.msra.mxu0 %v262
    %312 = vmatprep.subr.mxu0 %v260
    %313 = vmatpush1.msra.mxu0 %v259
    %314 = vmatprep.subr.mxu0 %v257
    %315 = vmatpush1.msra.mxu0 %v256
    %316 = vmatprep.subr.mxu0 %v254
    %317 = vmatpush1.msra.mxu0 %v253
    %318 = vmatprep.subr.mxu0 %v251
    %319 = vmatpush1.msra.mxu0 %v250
    %320 = vmatprep.subr.mxu0 %v248
    %321 = vmatpush1.msra.mxu0 %v247
    %322 = vmatprep.subr.mxu0 %v245
    %323 = vmatpush1.msra.mxu0 %v244
    %324 = vmatprep.subr.mxu0 0.0
    %325 = vmatpush2.msra.mxu0 0.0
    %326 = vmatprep.subr.mxu0 0.0
    %327 = vmatpush2.msra.mxu0 0.0
    %328 = vmatprep.subr.mxu0 0.0
    %329 = vmatpush2.msra.mxu0 0.0
    %330 = vmatprep.subr.mxu0 0.0
    %331 = vmatpush2.msra.mxu0 0.0
    %332 = vmatprep.subr.mxu0 0.0
    %333 = vmatpush2.msra.mxu0 0.0
    %334 = vmatprep.subr.mxu0 0.0
    %335 = vmatpush2.msra.mxu0 0.0
    %336 = vmatprep.subr.mxu0 0.0
    %337 = vmatpush2.msra.mxu0 0.0
    %338 = vmatprep.subr.mxu0 0.0
    %339 = vmatpush2.msra.mxu0 0.0
    %340 = vmatprep.subr.mxu0 0.0
    %341 = vmatpush2.msra.mxu0 0.0
    %342 = vmatprep.subr.mxu0 0.0
    %343 = vmatpush2.msra.mxu0 0.0
    %344 = vmatprep.subr.mxu0 0.0
    %345 = vmatpush2.msra.mxu0 0.0
    %346 = vmatprep.subr.mxu0 0.0
    %347 = vmatpush2.msra.mxu0 0.0
    %348 = vmatprep.subr.mxu0 0.0
    %349 = vmatpush2.msra.mxu0 0.0
    %350 = vmatprep.subr.mxu0 0.0
    %351 = vmatpush2.msra.mxu0 0.0
    %352 = vmatprep.subr.mxu0 0.0
    %353 = vmatpush2.msra.mxu0 0.0
    %354 = vmatprep.subr.mxu0 0.0
    %355 = vmatpush2.msra.mxu0 0.0
    %356 = vmatprep.mubr.f32.mxu0 0.0
    %357 = vmatmul.mubr.f32.gmra.mxu0 %v242
    %v358 = vpop.f32.mrf.mxu0
    %v359 = vadd.f32 0.0, %v358
    %v360 = vpop.f32.mrf.mxu0
    %v361 = vadd.f32 0.0, %v360
    %362 = vdwg.mxu0
    %363 = vmatprep.subr.mxu0 0.0
    %364 = vmatpush1.msra.mxu0 %v291
    %365 = vmatprep.subr.mxu0 0.0
    %366 = vmatpush1.msra.mxu0 %v288
    %367 = vmatprep.subr.mxu0 0.0
    %368 = vmatpush1.msra.mxu0 %v285
    %369 = vmatprep.subr.mxu0 0.0
    %370 = vmatpush1.msra.mxu0 %v282
    %371 = vmatprep.subr.mxu0 0.0
    %372 = vmatpush1.msra.mxu0 %v279
    %373 = vmatprep.subr.mxu0 0.0
    %374 = vmatpush1.msra.mxu0 %v276
    %375 = vmatprep.subr.mxu0 0.0
    %376 = vmatpush1.msra.mxu0 %v273
    %377 = vmatprep.subr.mxu0 0.0
    %378 = vmatpush1.msra.mxu0 %v270
    %379 = vmatprep.subr.mxu0 0.0
    %380 = vmatpush1.msra.mxu0 %v267
    %381 = vmatprep.subr.mxu0 0.0
    %382 = vmatpush1.msra.mxu0 %v264
    %383 = vmatprep.subr.mxu0 0.0
    %384 = vmatpush1.msra.mxu0 %v261
    %385 = vmatprep.subr.mxu0 0.0
    %386 = vmatpush1.msra.mxu0 %v258
    %387 = vmatprep.subr.mxu0 0.0
    %388 = vmatpush1.msra.mxu0 %v255
    %389 = vmatprep.subr.mxu0 0.0
    %390 = vmatpush1.msra.mxu0 %v252
    %391 = vmatprep.subr.mxu0 0.0
    %392 = vmatpush1.msra.mxu0 %v249
    %393 = vmatprep.subr.mxu0 0.0
    %394 = vmatpush1.msra.mxu0 %v246
    %395 = vmatprep.subr.mxu0 0.0
    %396 = vmatpush2.msra.mxu0 0.0
    %397 = vmatprep.subr.mxu0 0.0
    %398 = vmatpush2.msra.mxu0 0.0
    %399 = vmatprep.subr.mxu0 0.0
    %400 = vmatpush2.msra.mxu0 0.0
    %401 = vmatprep.subr.mxu0 0.0
    %402 = vmatpush2.msra.mxu0 0.0
    %403 = vmatprep.subr.mxu0 0.0
    %404 = vmatpush2.msra.mxu0 0.0
    %405 = vmatprep.subr.mxu0 0.0
    %406 = vmatpush2.msra.mxu0 0.0
    %407 = vmatprep.subr.mxu0 0.0
    %408 = vmatpush2.msra.mxu0 0.0
    %409 = vmatprep.subr.mxu0 0.0
    %410 = vmatpush2.msra.mxu0 0.0
    %411 = vmatprep.subr.mxu0 0.0
    %412 = vmatpush2.msra.mxu0 0.0
    %413 = vmatprep.subr.mxu0 0.0
    %414 = vmatpush2.msra.mxu0 0.0
    %415 = vmatprep.subr.mxu0 0.0
    %416 = vmatpush2.msra.mxu0 0.0
    %417 = vmatprep.subr.mxu0 0.0
    %418 = vmatpush2.msra.mxu0 0.0
    %419 = vmatprep.subr.mxu0 0.0
    %420 = vmatpush2.msra.mxu0 0.0
    %421 = vmatprep.subr.mxu0 0.0
    %422 = vmatpush2.msra.mxu0 0.0
    %423 = vmatprep.subr.mxu0 0.0
    %424 = vmatpush2.msra.mxu0 0.0
    %425 = vmatprep.subr.mxu0 0.0
    %426 = vmatpush2.msra.mxu0 0.0
    %427 = vmatprep.mubr.f32.mxu0 0.0
    %428 = vmatmul.mubr.f32.gmra.mxu0 %v242
    %v429 = vpop.f32.mrf.mxu0
    %v430 = vadd.f32 0.0, %v429
    %v431 = vpop.f32.mrf.mxu0
    %432 = vdwg.mxu0
    %v433 = vadd.f32 %v234, %v359
    %v434 = vadd.f32 %v235, %v361
    %v435 = vadd.f32 %v236, %v430
    %v436 = vmul.f32 %v242, %v242
    %437 = vadd.xlane.f32.xlu0 %v436
    %v438 = vpop.xlane.xlu0 %437
    %v439 = vadd.f32 %v240, %v438
    %s440 = scalar_lea.vmem %s0, 16
    %v441 = vld [vmem:[%s440] sm:$0xff]
    %s442 = scalar_lea.vmem %s1, 768
    %v443 = vld [vmem:[%s442] sm:$0xff]
    %v444 = vld [vmem:[%s442 + $0x8] sm:$0xff]
    %v445 = vld [vmem:[%s442 + $0x10] sm:$0xff]
    %v446 = vld [vmem:[%s442 + $0x18] sm:$0xff]
    %v447 = vld [vmem:[%s442 + $0x20] sm:$0xff]
    %v448 = vld [vmem:[%s442 + $0x28] sm:$0xff]
    %v449 = vld [vmem:[%s442 + $0x30] sm:$0xff]
    %v450 = vld [vmem:[%s442 + $0x38] sm:$0xff]
    %v451 = vld [vmem:[%s442 + $0x40] sm:$0xff]
    %v452 = vld [vmem:[%s442 + $0x48] sm:$0xff]
    %v453 = vld [vmem:[%s442 + $0x50] sm:$0xff]
    %v454 = vld [vmem:[%s442 + $0x58] sm:$0xff]
    %v455 = vld [vmem:[%s442 + $0x60] sm:$0xff]
    %v456 = vld [vmem:[%s442 + $0x68] sm:$0xff]
    %v457 = vld [vmem:[%s442 + $0x70] sm:$0xff]
    %v458 = vld [vmem:[%s442 + $0x78] sm:$0xff]
    %v459 = vld [vmem:[%s442 + $0x80] sm:$0xff]
    %v460 = vld [vmem:[%s442 + $0x88] sm:$0xff]
    %v461 = vld [vmem:[%s442 + $0x90] sm:$0xff]
    %v462 = vld [vmem:[%s442 + $0x98] sm:$0xff]
    %v463 = vld [vmem:[%s442 + $0xa0] sm:$0xff]
    %v464 = vld [vmem:[%s442 + $0xa8] sm:$0xff]
    %v465 = vld [vmem:[%s442 + $0xb0] sm:$0xff]
    %v466 = vld [vmem:[%s442 + $0xb8] sm:$0xff]
    %v467 = vld [vmem:[%s442 + $0xc0] sm:$0xff]
    %v468 = vld [vmem:[%s442 + $0xc8] sm:$0xff]
    %v469 = vld [vmem:[%s442 + $0xd0] sm:$0xff]
    %v470 = vld [vmem:[%s442 + $0xd8] sm:$0xff]
    %v471 = vld [vmem:[%s442 + $0xe0] sm:$0xff]
    %v472 = vld [vmem:[%s442 + $0xe8] sm:$0xff]
    %v473 = vld [vmem:[%s442 + $0xf0] sm:$0xff]
    %v474 = vld [vmem:[%s442 + $0xf8] sm:$0xff]
    %v475 = vld [vmem:[%s442 + $0x100] sm:$0xff]
    %v476 = vld [vmem:[%s442 + $0x108] sm:$0xff]
    %v477 = vld [vmem:[%s442 + $0x110] sm:$0xff]
    %v478 = vld [vmem:[%s442 + $0x118] sm:$0xff]
    %v479 = vld [vmem:[%s442 + $0x120] sm:$0xff]
    %v480 = vld [vmem:[%s442 + $0x128] sm:$0xff]
    %v481 = vld [vmem:[%s442 + $0x130] sm:$0xff]
    %v482 = vld [vmem:[%s442 + $0x138] sm:$0xff]
    %v483 = vld [vmem:[%s442 + $0x140] sm:$0xff]
    %v484 = vld [vmem:[%s442 + $0x148] sm:$0xff]
    %v485 = vld [vmem:[%s442 + $0x150] sm:$0xff]
    %v486 = vld [vmem:[%s442 + $0x158] sm:$0xff]
    %v487 = vld [vmem:[%s442 + $0x160] sm:$0xff]
    %v488 = vld [vmem:[%s442 + $0x168] sm:$0xff]
    %v489 = vld [vmem:[%s442 + $0x170] sm:$0xff]
    %v490 = vld [vmem:[%s442 + $0x178] sm:$0xff]
    %491 = vmatprep.subr.mxu0 %v489
    %492 = vmatpush1.msra.mxu0 %v488
    %493 = vmatprep.subr.mxu0 %v486
    %494 = vmatpush1.msra.mxu0 %v485
    %495 = vmatprep.subr.mxu0 %v483
    %496 = vmatpush1.msra.mxu0 %v482
    %497 = vmatprep.subr.mxu0 %v480
    %498 = vmatpush1.msra.mxu0 %v479
    %499 = vmatprep.subr.mxu0 %v477
    %500 = vmatpush1.msra.mxu0 %v476
    %501 = vmatprep.subr.mxu0 %v474
    %502 = vmatpush1.msra.mxu0 %v473
    %503 = vmatprep.subr.mxu0 %v471
    %504 = vmatpush1.msra.mxu0 %v470
    %505 = vmatprep.subr.mxu0 %v468
    %506 = vmatpush1.msra.mxu0 %v467
    %507 = vmatprep.subr.mxu0 %v465
    %508 = vmatpush1.msra.mxu0 %v464
    %509 = vmatprep.subr.mxu0 %v462
    %510 = vmatpush1.msra.mxu0 %v461
    %511 = vmatprep.subr.mxu0 %v459
    %512 = vmatpush1.msra.mxu0 %v458
    %513 = vmatprep.subr.mxu0 %v456
    %514 = vmatpush1.msra.mxu0 %v455
    %515 = vmatprep.subr.mxu0 %v453
    %516 = vmatpush1.msra.mxu0 %v452
    %517 = vmatprep.subr.mxu0 %v450
    %518 = vmatpush1.msra.mxu0 %v449
    %519 = vmatprep.subr.mxu0 %v447
    %520 = vmatpush1.msra.mxu0 %v446
    %521 = vmatprep.subr.mxu0 %v444
    %522 = vmatpush1.msra.mxu0 %v443
    %523 = vmatprep.subr.mxu0 0.0
    %524 = vmatpush2.msra.mxu0 0.0
    %525 = vmatprep.subr.mxu0 0.0
    %526 = vmatpush2.msra.mxu0 0.0
    %527 = vmatprep.subr.mxu0 0.0
    %528 = vmatpush2.msra.mxu0 0.0
    %529 = vmatprep.subr.mxu0 0.0
    %530 = vmatpush2.msra.mxu0 0.0
    %531 = vmatprep.subr.mxu0 0.0
    %532 = vmatpush2.msra.mxu0 0.0
    %533 = vmatprep.subr.mxu0 0.0
    %534 = vmatpush2.msra.mxu0 0.0
    %535 = vmatprep.subr.mxu0 0.0
    %536 = vmatpush2.msra.mxu0 0.0
    %537 = vmatprep.subr.mxu0 0.0
    %538 = vmatpush2.msra.mxu0 0.0
    %539 = vmatprep.subr.mxu0 0.0
    %540 = vmatpush2.msra.mxu0 0.0
    %541 = vmatprep.subr.mxu0 0.0
    %542 = vmatpush2.msra.mxu0 0.0
    %543 = vmatprep.subr.mxu0 0.0
    %544 = vmatpush2.msra.mxu0 0.0
    %545 = vmatprep.subr.mxu0 0.0
    %546 = vmatpush2.msra.mxu0 0.0
    %547 = vmatprep.subr.mxu0 0.0
    %548 = vmatpush2.msra.mxu0 0.0
    %549 = vmatprep.subr.mxu0 0.0
    %550 = vmatpush2.msra.mxu0 0.0
    %551 = vmatprep.subr.mxu0 0.0
    %552 = vmatpush2.msra.mxu0 0.0
    %553 = vmatprep.subr.mxu0 0.0
    %554 = vmatpush2.msra.mxu0 0.0
    %555 = vmatprep.mubr.f32.mxu0 0.0
    %556 = vmatmul.mubr.f32.gmra.mxu0 %v441
    %v557 = vpop.f32.mrf.mxu0
    %v558 = vadd.f32 0.0, %v557
    %v559 = vpop.f32.mrf.mxu0
    %v560 = vadd.f32 0.0, %v559
    %561 = vdwg.mxu0
    %562 = vmatprep.subr.mxu0 0.0
    %563 = vmatpush1.msra.mxu0 %v490
    %564 = vmatprep.subr.mxu0 0.0
    %565 = vmatpush1.msra.mxu0 %v487
    %566 = vmatprep.subr.mxu0 0.0
    %567 = vmatpush1.msra.mxu0 %v484
    %568 = vmatprep.subr.mxu0 0.0
    %569 = vmatpush1.msra.mxu0 %v481
    %570 = vmatprep.subr.mxu0 0.0
    %571 = vmatpush1.msra.mxu0 %v478
    %572 = vmatprep.subr.mxu0 0.0
    %573 = vmatpush1.msra.mxu0 %v475
    %574 = vmatprep.subr.mxu0 0.0
    %575 = vmatpush1.msra.mxu0 %v472
    %576 = vmatprep.subr.mxu0 0.0
    %577 = vmatpush1.msra.mxu0 %v469
    %578 = vmatprep.subr.mxu0 0.0
    %579 = vmatpush1.msra.mxu0 %v466
    %580 = vmatprep.subr.mxu0 0.0
    %581 = vmatpush1.msra.mxu0 %v463
    %582 = vmatprep.subr.mxu0 0.0
    %583 = vmatpush1.msra.mxu0 %v460
    %584 = vmatprep.subr.mxu0 0.0
    %585 = vmatpush1.msra.mxu0 %v457
    %586 = vmatprep.subr.mxu0 0.0
    %587 = vmatpush1.msra.mxu0 %v454
    %588 = vmatprep.subr.mxu0 0.0
    %589 = vmatpush1.msra.mxu0 %v451
    %590 = vmatprep.subr.mxu0 0.0
    %591 = vmatpush1.msra.mxu0 %v448
    %592 = vmatprep.subr.mxu0 0.0
    %593 = vmatpush1.msra.mxu0 %v445
    %594 = vmatprep.subr.mxu0 0.0
    %595 = vmatpush2.msra.mxu0 0.0
    %596 = vmatprep.subr.mxu0 0.0
    %597 = vmatpush2.msra.mxu0 0.0
    %598 = vmatprep.subr.mxu0 0.0
    %599 = vmatpush2.msra.mxu0 0.0
    %600 = vmatprep.subr.mxu0 0.0
    %601 = vmatpush2.msra.mxu0 0.0
    %602 = vmatprep.subr.mxu0 0.0
    %603 = vmatpush2.msra.mxu0 0.0
    %604 = vmatprep.subr.mxu0 0.0
    %605 = vmatpush2.msra.mxu0 0.0
    %606 = vmatprep.subr.mxu0 0.0
    %607 = vmatpush2.msra.mxu0 0.0
    %608 = vmatprep.subr.mxu0 0.0
    %609 = vmatpush2.msra.mxu0 0.0
    %610 = vmatprep.subr.mxu0 0.0
    %611 = vmatpush2.msra.mxu0 0.0
    %612 = vmatprep.subr.mxu0 0.0
    %613 = vmatpush2.msra.mxu0 0.0
    %614 = vmatprep.subr.mxu0 0.0
    %615 = vmatpush2.msra.mxu0 0.0
    %616 = vmatprep.subr.mxu0 0.0
    %617 = vmatpush2.msra.mxu0 0.0
    %618 = vmatprep.subr.mxu0 0.0
    %619 = vmatpush2.msra.mxu0 0.0
    %620 = vmatprep.subr.mxu0 0.0
    %621 = vmatpush2.msra.mxu0 0.0
    %622 = vmatprep.subr.mxu0 0.0
    %623 = vmatpush2.msra.mxu0 0.0
    %624 = vmatprep.subr.mxu0 0.0
    %625 = vmatpush2.msra.mxu0 0.0
    %626 = vmatprep.mubr.f32.mxu0 0.0
    %627 = vmatmul.mubr.f32.gmra.mxu0 %v441
    %v628 = vpop.f32.mrf.mxu0
    %v629 = vadd.f32 0.0, %v628
    %v630 = vpop.f32.mrf.mxu0
    %631 = vdwg.mxu0
    %v632 = vadd.f32 %v433, %v558
    %v633 = vadd.f32 %v434, %v560
    %v634 = vadd.f32 %v435, %v629
    %v635 = vmul.f32 %v441, %v441
    %636 = vadd.xlane.f32.xlu0 %v635
    %v637 = vpop.xlane.xlu0 %636
    %v638 = vadd.f32 %v439, %v637
    %v639 = vmax.f32 %v632, 0.0
    %v640 = vmax.f32 %v633, 0.0
    %v641 = vmax.f32 %v634, 0.0
    %v642 = vld [vmem:[%s3] sm:$0xff]
    %v643 = vld [vmem:[%s3 + $0x8] sm:$0xff]
    %v644 = vld [vmem:[%s3 + $0x10] sm:$0xff]
    %v645 = vld [vmem:[%s3 + $0x18] sm:$0xff]
    %v646 = vld [vmem:[%s3 + $0x20] sm:$0xff]
    %v647 = vld [vmem:[%s3 + $0x28] sm:$0xff]
    %v648 = vld [vmem:[%s3 + $0x30] sm:$0xff]
    %v649 = vld [vmem:[%s3 + $0x38] sm:$0xff]
    %v650 = vld [vmem:[%s3 + $0x40] sm:$0xff]
    %v651 = vld [vmem:[%s3 + $0x48] sm:$0xff]
    %v652 = vld [vmem:[%s3 + $0x50] sm:$0xff]
    %v653 = vld [vmem:[%s3 + $0x58] sm:$0xff]
    %v654 = vld [vmem:[%s3 + $0x60] sm:$0xff]
    %v655 = vld [vmem:[%s3 + $0x68] sm:$0xff]
    %v656 = vld [vmem:[%s3 + $0x70] sm:$0xff]
    %v657 = vld [vmem:[%s3 + $0x78] sm:$0xff]
    %v658 = vld [vmem:[%s3 + $0x80] sm:$0xff]
    %v659 = vld [vmem:[%s3 + $0x88] sm:$0xff]
    %v660 = vld [vmem:[%s3 + $0x90] sm:$0xff]
    %v661 = vld [vmem:[%s3 + $0x98] sm:$0xff]
    %v662 = vld [vmem:[%s3 + $0xa0] sm:$0xff]
    %v663 = vld [vmem:[%s3 + $0xa8] sm:$0xff]
    %v664 = vld [vmem:[%s3 + $0xb0] sm:$0xff]
    %v665 = vld [vmem:[%s3 + $0xb8] sm:$0xff]
    %v666 = vld [vmem:[%s3 + $0xc0] sm:$0xff]
    %v667 = vld [vmem:[%s3 + $0xc8] sm:$0xff]
    %v668 = vld [vmem:[%s3 + $0xd0] sm:$0xff]
    %v669 = vld [vmem:[%s3 + $0xd8] sm:$0xff]
    %v670 = vld [vmem:[%s3 + $0xe0] sm:$0xff]
    %v671 = vld [vmem:[%s3 + $0xe8] sm:$0xff]
    %v672 = vld [vmem:[%s3 + $0xf0] sm:$0xff]
    %v673 = vld [vmem:[%s3 + $0xf8] sm:$0xff]
    %v674 = vld [vmem:[%s3 + $0x100] sm:$0xff]
    %v675 = vld [vmem:[%s3 + $0x108] sm:$0xff]
    %v676 = vld [vmem:[%s3 + $0x110] sm:$0xff]
    %v677 = vld [vmem:[%s3 + $0x118] sm:$0xff]
    %v678 = vld [vmem:[%s3 + $0x120] sm:$0xff]
    %v679 = vld [vmem:[%s3 + $0x128] sm:$0xff]
    %v680 = vld [vmem:[%s3 + $0x130] sm:$0xff]
    %v681 = vld [vmem:[%s3 + $0x138] sm:$0xff]
    %v682 = vld [vmem:[%s3 + $0x140] sm:$0xff]
    %v683 = vld [vmem:[%s3 + $0x148] sm:$0xff]
    %v684 = vld [vmem:[%s3 + $0x150] sm:$0xff]
    %v685 = vld [vmem:[%s3 + $0x158] sm:$0xff]
    %v686 = vld [vmem:[%s3 + $0x160] sm:$0xff]
    %v687 = vld [vmem:[%s3 + $0x168] sm:$0xff]
    %v688 = vld [vmem:[%s3 + $0x170] sm:$0xff]
    %v689 = vld [vmem:[%s3 + $0x178] sm:$0xff]
    %v690 = vld [vmem:[%s3 + $0x180] sm:$0xff]
    %v691 = vld [vmem:[%s3 + $0x188] sm:$0xff]
    %v692 = vld [vmem:[%s3 + $0x190] sm:$0xff]
    %v693 = vld [vmem:[%s3 + $0x198] sm:$0xff]
    %v694 = vld [vmem:[%s3 + $0x1a0] sm:$0xff]
    %v695 = vld [vmem:[%s3 + $0x1a8] sm:$0xff]
    %v696 = vld [vmem:[%s3 + $0x1b0] sm:$0xff]
    %v697 = vld [vmem:[%s3 + $0x1b8] sm:$0xff]
    %v698 = vld [vmem:[%s3 + $0x1c0] sm:$0xff]
    %v699 = vld [vmem:[%s3 + $0x1c8] sm:$0xff]
    %v700 = vld [vmem:[%s3 + $0x1d0] sm:$0xff]
    %v701 = vld [vmem:[%s3 + $0x1d8] sm:$0xff]
    %v702 = vld [vmem:[%s3 + $0x1e0] sm:$0xff]
    %v703 = vld [vmem:[%s3 + $0x1e8] sm:$0xff]
    %v704 = vld [vmem:[%s3 + $0x1f0] sm:$0xff]
    %v705 = vld [vmem:[%s3 + $0x1f8] sm:$0xff]
    %v706 = vld [vmem:[%s3 + $0x200] sm:$0xff]
    %v707 = vld [vmem:[%s3 + $0x208] sm:$0xff]
    %v708 = vld [vmem:[%s3 + $0x210] sm:$0xff]
    %v709 = vld [vmem:[%s3 + $0x218] sm:$0xff]
    %v710 = vld [vmem:[%s3 + $0x220] sm:$0xff]
    %v711 = vld [vmem:[%s3 + $0x228] sm:$0xff]
    %v712 = vld [vmem:[%s3 + $0x230] sm:$0xff]
    %v713 = vld [vmem:[%s3 + $0x238] sm:$0xff]
    %v714 = vld [vmem:[%s3 + $0x240] sm:$0xff]
    %v715 = vld [vmem:[%s3 + $0x248] sm:$0xff]
    %v716 = vld [vmem:[%s3 + $0x250] sm:$0xff]
    %v717 = vld [vmem:[%s3 + $0x258] sm:$0xff]
    %v718 = vld [vmem:[%s3 + $0x260] sm:$0xff]
    %v719 = vld [vmem:[%s3 + $0x268] sm:$0xff]
    %v720 = vld [vmem:[%s3 + $0x270] sm:$0xff]
    %v721 = vld [vmem:[%s3 + $0x278] sm:$0xff]
    %v722 = vld [vmem:[%s3 + $0x280] sm:$0xff]
    %v723 = vld [vmem:[%s3 + $0x288] sm:$0xff]
    %v724 = vld [vmem:[%s3 + $0x290] sm:$0xff]
    %v725 = vld [vmem:[%s3 + $0x298] sm:$0xff]
    %v726 = vld [vmem:[%s3 + $0x2a0] sm:$0xff]
    %v727 = vld [vmem:[%s3 + $0x2a8] sm:$0xff]
    %v728 = vld [vmem:[%s3 + $0x2b0] sm:$0xff]
    %v729 = vld [vmem:[%s3 + $0x2b8] sm:$0xff]
    %v730 = vld [vmem:[%s3 + $0x2c0] sm:$0xff]
    %v731 = vld [vmem:[%s3 + $0x2c8] sm:$0xff]
    %v732 = vld [vmem:[%s3 + $0x2d0] sm:$0xff]
    %v733 = vld [vmem:[%s3 + $0x2d8] sm:$0xff]
    %v734 = vld [vmem:[%s3 + $0x2e0] sm:$0xff]
    %v735 = vld [vmem:[%s3 + $0x2e8] sm:$0xff]
    %v736 = vld [vmem:[%s3 + $0x2f0] sm:$0xff]
    %v737 = vld [vmem:[%s3 + $0x2f8] sm:$0xff]
    %v738 = vld [vmem:[%s3 + $0x300] sm:$0xff]
    %v739 = vld [vmem:[%s3 + $0x308] sm:$0xff]
    %v740 = vld [vmem:[%s3 + $0x310] sm:$0xff]
    %v741 = vld [vmem:[%s3 + $0x318] sm:$0xff]
    %v742 = vld [vmem:[%s3 + $0x320] sm:$0xff]
    %v743 = vld [vmem:[%s3 + $0x328] sm:$0xff]
    %v744 = vld [vmem:[%s3 + $0x330] sm:$0xff]
    %v745 = vld [vmem:[%s3 + $0x338] sm:$0xff]
    %v746 = vld [vmem:[%s3 + $0x340] sm:$0xff]
    %v747 = vld [vmem:[%s3 + $0x348] sm:$0xff]
    %v748 = vld [vmem:[%s3 + $0x350] sm:$0xff]
    %v749 = vld [vmem:[%s3 + $0x358] sm:$0xff]
    %v750 = vld [vmem:[%s3 + $0x360] sm:$0xff]
    %v751 = vld [vmem:[%s3 + $0x368] sm:$0xff]
    %v752 = vld [vmem:[%s3 + $0x370] sm:$0xff]
    %v753 = vld [vmem:[%s3 + $0x378] sm:$0xff]
    %v754 = vld [vmem:[%s3 + $0x380] sm:$0xff]
    %v755 = vld [vmem:[%s3 + $0x388] sm:$0xff]
    %v756 = vld [vmem:[%s3 + $0x390] sm:$0xff]
    %v757 = vld [vmem:[%s3 + $0x398] sm:$0xff]
    %v758 = vld [vmem:[%s3 + $0x3a0] sm:$0xff]
    %v759 = vld [vmem:[%s3 + $0x3a8] sm:$0xff]
    %v760 = vld [vmem:[%s3 + $0x3b0] sm:$0xff]
    %v761 = vld [vmem:[%s3 + $0x3b8] sm:$0xff]
    %v762 = vld [vmem:[%s3 + $0x3c0] sm:$0xff]
    %v763 = vld [vmem:[%s3 + $0x3c8] sm:$0xff]
    %v764 = vld [vmem:[%s3 + $0x3d0] sm:$0xff]
    %v765 = vld [vmem:[%s3 + $0x3d8] sm:$0xff]
    %v766 = vld [vmem:[%s3 + $0x3e0] sm:$0xff]
    %v767 = vld [vmem:[%s3 + $0x3e8] sm:$0xff]
    %v768 = vld [vmem:[%s3 + $0x3f0] sm:$0xff]
    %v769 = vld [vmem:[%s3 + $0x3f8] sm:$0xff]
    %v770 = vld [vmem:[%s3 + $0x400] sm:$0xff]
    %v771 = vld [vmem:[%s3 + $0x408] sm:$0xff]
    %v772 = vld [vmem:[%s3 + $0x410] sm:$0xff]
    %v773 = vld [vmem:[%s3 + $0x418] sm:$0xff]
    %v774 = vld [vmem:[%s3 + $0x420] sm:$0xff]
    %v775 = vld [vmem:[%s3 + $0x428] sm:$0xff]
    %v776 = vld [vmem:[%s3 + $0x430] sm:$0xff]
    %v777 = vld [vmem:[%s3 + $0x438] sm:$0xff]
    %v778 = vld [vmem:[%s3 + $0x440] sm:$0xff]
    %v779 = vld [vmem:[%s3 + $0x448] sm:$0xff]
    %v780 = vld [vmem:[%s3 + $0x450] sm:$0xff]
    %v781 = vld [vmem:[%s3 + $0x458] sm:$0xff]
    %v782 = vld [vmem:[%s3 + $0x460] sm:$0xff]
    %v783 = vld [vmem:[%s3 + $0x468] sm:$0xff]
    %v784 = vld [vmem:[%s3 + $0x470] sm:$0xff]
    %v785 = vld [vmem:[%s3 + $0x478] sm:$0xff]
    %v786 = vld [vmem:[%s4] sm:$0x7]
    %v788 = vlaneseq
    %v789 = vshrl.u32 %v788, 7
    %v790 = vsub.s32 0, %v789
    %v791 = vrot.slane %v786, %v790
    %v792 = vlaneseq
    %v793 = vshrl.u32 %v792, 7
    %v794 = vsub.s32 1, %v793
    %v795 = vrot.slane %v786, %v794
    %v796 = vlaneseq
    %v797 = vshrl.u32 %v796, 7
    %v798 = vsub.s32 2, %v797
    %v799 = vrot.slane %v786, %v798
    %803 = vmatprep.subr.mxu0 %v688
    %804 = vmatpush1.msra.mxu0 %v687
    %805 = vmatprep.subr.mxu0 %v685
    %806 = vmatpush1.msra.mxu0 %v684
    %807 = vmatprep.subr.mxu0 %v682
    %808 = vmatpush1.msra.mxu0 %v681
    %809 = vmatprep.subr.mxu0 %v679
    %810 = vmatpush1.msra.mxu0 %v678
    %811 = vmatprep.subr.mxu0 %v676
    %812 = vmatpush1.msra.mxu0 %v675
    %813 = vmatprep.subr.mxu0 %v673
    %814 = vmatpush1.msra.mxu0 %v672
    %815 = vmatprep.subr.mxu0 %v670
    %816 = vmatpush1.msra.mxu0 %v669
    %817 = vmatprep.subr.mxu0 %v667
    %818 = vmatpush1.msra.mxu0 %v666
    %819 = vmatprep.subr.mxu0 %v664
    %820 = vmatpush1.msra.mxu0 %v663
    %821 = vmatprep.subr.mxu0 %v661
    %822 = vmatpush1.msra.mxu0 %v660
    %823 = vmatprep.subr.mxu0 %v658
    %824 = vmatpush1.msra.mxu0 %v657
    %825 = vmatprep.subr.mxu0 %v655
    %826 = vmatpush1.msra.mxu0 %v654
    %827 = vmatprep.subr.mxu0 %v652
    %828 = vmatpush1.msra.mxu0 %v651
    %829 = vmatprep.subr.mxu0 %v649
    %830 = vmatpush1.msra.mxu0 %v648
    %831 = vmatprep.subr.mxu0 %v646
    %832 = vmatpush1.msra.mxu0 %v645
    %833 = vmatprep.subr.mxu0 %v643
    %834 = vmatpush1.msra.mxu0 %v642
    %835 = vmatprep.subr.mxu0 %v736
    %836 = vmatpush2.msra.mxu0 %v735
    %837 = vmatprep.subr.mxu0 %v733
    %838 = vmatpush2.msra.mxu0 %v732
    %839 = vmatprep.subr.mxu0 %v730
    %840 = vmatpush2.msra.mxu0 %v729
    %841 = vmatprep.subr.mxu0 %v727
    %842 = vmatpush2.msra.mxu0 %v726
    %843 = vmatprep.subr.mxu0 %v724
    %844 = vmatpush2.msra.mxu0 %v723
    %845 = vmatprep.subr.mxu0 %v721
    %846 = vmatpush2.msra.mxu0 %v720
    %847 = vmatprep.subr.mxu0 %v718
    %848 = vmatpush2.msra.mxu0 %v717
    %849 = vmatprep.subr.mxu0 %v715
    %850 = vmatpush2.msra.mxu0 %v714
    %851 = vmatprep.subr.mxu0 %v712
    %852 = vmatpush2.msra.mxu0 %v711
    %853 = vmatprep.subr.mxu0 %v709
    %854 = vmatpush2.msra.mxu0 %v708
    %855 = vmatprep.subr.mxu0 %v706
    %856 = vmatpush2.msra.mxu0 %v705
    %857 = vmatprep.subr.mxu0 %v703
    %858 = vmatpush2.msra.mxu0 %v702
    %859 = vmatprep.subr.mxu0 %v700
    %860 = vmatpush2.msra.mxu0 %v699
    %861 = vmatprep.subr.mxu0 %v697
    %862 = vmatpush2.msra.mxu0 %v696
    %863 = vmatprep.subr.mxu0 %v694
    %864 = vmatpush2.msra.mxu0 %v693
    %865 = vmatprep.subr.mxu0 %v691
    %866 = vmatpush2.msra.mxu0 %v690
    %867 = vmatprep.mubr.f32.mxu0 %v640
    %868 = vmatmul.mubr.f32.gmra.mxu0 %v639
    %v869 = vpop.f32.mrf.mxu0
    %v870 = vadd.f32 %v791, %v869
    %v871 = vpop.f32.mrf.mxu0
    %v872 = vadd.f32 %v795, %v871
    %873 = vdwg.mxu0
    %874 = vmatprep.subr.mxu0 %v784
    %875 = vmatpush1.msra.mxu0 %v783
    %876 = vmatprep.subr.mxu0 %v781
    %877 = vmatpush1.msra.mxu0 %v780
    %878 = vmatprep.subr.mxu0 %v778
    %879 = vmatpush1.msra.mxu0 %v777
    %880 = vmatprep.subr.mxu0 %v775
    %881 = vmatpush1.msra.mxu0 %v774
    %882 = vmatprep.subr.mxu0 %v772
    %883 = vmatpush1.msra.mxu0 %v771
    %884 = vmatprep.subr.mxu0 %v769
    %885 = vmatpush1.msra.mxu0 %v768
    %886 = vmatprep.subr.mxu0 %v766
    %887 = vmatpush1.msra.mxu0 %v765
    %888 = vmatprep.subr.mxu0 %v763
    %889 = vmatpush1.msra.mxu0 %v762
    %890 = vmatprep.subr.mxu0 %v760
    %891 = vmatpush1.msra.mxu0 %v759
    %892 = vmatprep.subr.mxu0 %v757
    %893 = vmatpush1.msra.mxu0 %v756
    %894 = vmatprep.subr.mxu0 %v754
    %895 = vmatpush1.msra.mxu0 %v753
    %896 = vmatprep.subr.mxu0 %v751
    %897 = vmatpush1.msra.mxu0 %v750
    %898 = vmatprep.subr.mxu0 %v748
    %899 = vmatpush1.msra.mxu0 %v747
    %900 = vmatprep.subr.mxu0 %v745
    %901 = vmatpush1.msra.mxu0 %v744
    %902 = vmatprep.subr.mxu0 %v742
    %903 = vmatpush1.msra.mxu0 %v741
    %904 = vmatprep.subr.mxu0 %v739
    %905 = vmatpush1.msra.mxu0 %v738
    %906 = vmatprep.subr.mxu0 0.0
    %907 = vmatpush2.msra.mxu0 0.0
    %908 = vmatprep.subr.mxu0 0.0
    %909 = vmatpush2.msra.mxu0 0.0
    %910 = vmatprep.subr.mxu0 0.0
    %911 = vmatpush2.msra.mxu0 0.0
    %912 = vmatprep.subr.mxu0 0.0
    %913 = vmatpush2.msra.mxu0 0.0
    %914 = vmatprep.subr.mxu0 0.0
    %915 = vmatpush2.msra.mxu0 0.0
    %916 = vmatprep.subr.mxu0 0.0
    %917 = vmatpush2.msra.mxu0 0.0
    %918 = vmatprep.subr.mxu0 0.0
    %919 = vmatpush2.msra.mxu0 0.0
    %920 = vmatprep.subr.mxu0 0.0
    %921 = vmatpush2.msra.mxu0 0.0
    %922 = vmatprep.subr.mxu0 0.0
    %923 = vmatpush2.msra.mxu0 0.0
    %924 = vmatprep.subr.mxu0 0.0
    %925 = vmatpush2.msra.mxu0 0.0
    %926 = vmatprep.subr.mxu0 0.0
    %927 = vmatpush2.msra.mxu0 0.0
    %928 = vmatprep.subr.mxu0 0.0
    %929 = vmatpush2.msra.mxu0 0.0
    %930 = vmatprep.subr.mxu0 0.0
    %931 = vmatpush2.msra.mxu0 0.0
    %932 = vmatprep.subr.mxu0 0.0
    %933 = vmatpush2.msra.mxu0 0.0
    %934 = vmatprep.subr.mxu0 0.0
    %935 = vmatpush2.msra.mxu0 0.0
    %936 = vmatprep.subr.mxu0 0.0
    %937 = vmatpush2.msra.mxu0 0.0
    %938 = vmatprep.mubr.f32.mxu0 0.0
    %939 = vmatmul.mubr.f32.gmra.mxu0 %v641
    %v940 = vpop.f32.mrf.mxu0
    %v941 = vadd.f32 %v870, %v940
    %v942 = vpop.f32.mrf.mxu0
    %v943 = vadd.f32 %v872, %v942
    %944 = vdwg.mxu0
    %945 = vmatprep.subr.mxu0 0.0
    %946 = vmatpush1.msra.mxu0 %v689
    %947 = vmatprep.subr.mxu0 0.0
    %948 = vmatpush1.msra.mxu0 %v686
    %949 = vmatprep.subr.mxu0 0.0
    %950 = vmatpush1.msra.mxu0 %v683
    %951 = vmatprep.subr.mxu0 0.0
    %952 = vmatpush1.msra.mxu0 %v680
    %953 = vmatprep.subr.mxu0 0.0
    %954 = vmatpush1.msra.mxu0 %v677
    %955 = vmatprep.subr.mxu0 0.0
    %956 = vmatpush1.msra.mxu0 %v674
    %957 = vmatprep.subr.mxu0 0.0
    %958 = vmatpush1.msra.mxu0 %v671
    %959 = vmatprep.subr.mxu0 0.0
    %960 = vmatpush1.msra.mxu0 %v668
    %961 = vmatprep.subr.mxu0 0.0
    %962 = vmatpush1.msra.mxu0 %v665
    %963 = vmatprep.subr.mxu0 0.0
    %964 = vmatpush1.msra.mxu0 %v662
    %965 = vmatprep.subr.mxu0 0.0
    %966 = vmatpush1.msra.mxu0 %v659
    %967 = vmatprep.subr.mxu0 0.0
    %968 = vmatpush1.msra.mxu0 %v656
    %969 = vmatprep.subr.mxu0 0.0
    %970 = vmatpush1.msra.mxu0 %v653
    %971 = vmatprep.subr.mxu0 0.0
    %972 = vmatpush1.msra.mxu0 %v650
    %973 = vmatprep.subr.mxu0 0.0
    %974 = vmatpush1.msra.mxu0 %v647
    %975 = vmatprep.subr.mxu0 0.0
    %976 = vmatpush1.msra.mxu0 %v644
    %977 = vmatprep.subr.mxu0 0.0
    %978 = vmatpush2.msra.mxu0 %v737
    %979 = vmatprep.subr.mxu0 0.0
    %980 = vmatpush2.msra.mxu0 %v734
    %981 = vmatprep.subr.mxu0 0.0
    %982 = vmatpush2.msra.mxu0 %v731
    %983 = vmatprep.subr.mxu0 0.0
    %984 = vmatpush2.msra.mxu0 %v728
    %985 = vmatprep.subr.mxu0 0.0
    %986 = vmatpush2.msra.mxu0 %v725
    %987 = vmatprep.subr.mxu0 0.0
    %988 = vmatpush2.msra.mxu0 %v722
    %989 = vmatprep.subr.mxu0 0.0
    %990 = vmatpush2.msra.mxu0 %v719
    %991 = vmatprep.subr.mxu0 0.0
    %992 = vmatpush2.msra.mxu0 %v716
    %993 = vmatprep.subr.mxu0 0.0
    %994 = vmatpush2.msra.mxu0 %v713
    %995 = vmatprep.subr.mxu0 0.0
    %996 = vmatpush2.msra.mxu0 %v710
    %997 = vmatprep.subr.mxu0 0.0
    %998 = vmatpush2.msra.mxu0 %v707
    %999 = vmatprep.subr.mxu0 0.0
    %1000 = vmatpush2.msra.mxu0 %v704
    %1001 = vmatprep.subr.mxu0 0.0
    %1002 = vmatpush2.msra.mxu0 %v701
    %1003 = vmatprep.subr.mxu0 0.0
    %1004 = vmatpush2.msra.mxu0 %v698
    %1005 = vmatprep.subr.mxu0 0.0
    %1006 = vmatpush2.msra.mxu0 %v695
    %1007 = vmatprep.subr.mxu0 0.0
    %1008 = vmatpush2.msra.mxu0 %v692
    %1009 = vmatprep.mubr.f32.mxu0 %v640
    %1010 = vmatmul.mubr.f32.gmra.mxu0 %v639
    %v1011 = vpop.f32.mrf.mxu0
    %v1012 = vadd.f32 %v799, %v1011
    %v1013 = vpop.f32.mrf.mxu0
    %1014 = vdwg.mxu0
    %1015 = vmatprep.subr.mxu0 0.0
    %1016 = vmatpush1.msra.mxu0 %v785
    %1017 = vmatprep.subr.mxu0 0.0
    %1018 = vmatpush1.msra.mxu0 %v782
    %1019 = vmatprep.subr.mxu0 0.0
    %1020 = vmatpush1.msra.mxu0 %v779
    %1021 = vmatprep.subr.mxu0 0.0
    %1022 = vmatpush1.msra.mxu0 %v776
    %1023 = vmatprep.subr.mxu0 0.0
    %1024 = vmatpush1.msra.mxu0 %v773
    %1025 = vmatprep.subr.mxu0 0.0
    %1026 = vmatpush1.msra.mxu0 %v770
    %1027 = vmatprep.subr.mxu0 0.0
    %1028 = vmatpush1.msra.mxu0 %v767
    %1029 = vmatprep.subr.mxu0 0.0
    %1030 = vmatpush1.msra.mxu0 %v764
    %1031 = vmatprep.subr.mxu0 0.0
    %1032 = vmatpush1.msra.mxu0 %v761
    %1033 = vmatprep.subr.mxu0 0.0
    %1034 = vmatpush1.msra.mxu0 %v758
    %1035 = vmatprep.subr.mxu0 0.0
    %1036 = vmatpush1.msra.mxu0 %v755
    %1037 = vmatprep.subr.mxu0 0.0
    %1038 = vmatpush1.msra.mxu0 %v752
    %1039 = vmatprep.subr.mxu0 0.0
    %1040 = vmatpush1.msra.mxu0 %v749
    %1041 = vmatprep.subr.mxu0 0.0
    %1042 = vmatpush1.msra.mxu0 %v746
    %1043 = vmatprep.subr.mxu0 0.0
    %1044 = vmatpush1.msra.mxu0 %v743
    %1045 = vmatprep.subr.mxu0 0.0
    %1046 = vmatpush1.msra.mxu0 %v740
    %1047 = vmatprep.subr.mxu0 0.0
    %1048 = vmatpush2.msra.mxu0 0.0
    %1049 = vmatprep.subr.mxu0 0.0
    %1050 = vmatpush2.msra.mxu0 0.0
    %1051 = vmatprep.subr.mxu0 0.0
    %1052 = vmatpush2.msra.mxu0 0.0
    %1053 = vmatprep.subr.mxu0 0.0
    %1054 = vmatpush2.msra.mxu0 0.0
    %1055 = vmatprep.subr.mxu0 0.0
    %1056 = vmatpush2.msra.mxu0 0.0
    %1057 = vmatprep.subr.mxu0 0.0
    %1058 = vmatpush2.msra.mxu0 0.0
    %1059 = vmatprep.subr.mxu0 0.0
    %1060 = vmatpush2.msra.mxu0 0.0
    %1061 = vmatprep.subr.mxu0 0.0
    %1062 = vmatpush2.msra.mxu0 0.0
    %1063 = vmatprep.subr.mxu0 0.0
    %1064 = vmatpush2.msra.mxu0 0.0
    %1065 = vmatprep.subr.mxu0 0.0
    %1066 = vmatpush2.msra.mxu0 0.0
    %1067 = vmatprep.subr.mxu0 0.0
    %1068 = vmatpush2.msra.mxu0 0.0
    %1069 = vmatprep.subr.mxu0 0.0
    %1070 = vmatpush2.msra.mxu0 0.0
    %1071 = vmatprep.subr.mxu0 0.0
    %1072 = vmatpush2.msra.mxu0 0.0
    %1073 = vmatprep.subr.mxu0 0.0
    %1074 = vmatpush2.msra.mxu0 0.0
    %1075 = vmatprep.subr.mxu0 0.0
    %1076 = vmatpush2.msra.mxu0 0.0
    %1077 = vmatprep.subr.mxu0 0.0
    %1078 = vmatpush2.msra.mxu0 0.0
    %1079 = vmatprep.mubr.f32.mxu0 0.0
    %1080 = vmatmul.mubr.f32.gmra.mxu0 %v641
    %v1081 = vpop.f32.mrf.mxu0
    %v1082 = vadd.f32 %v1012, %v1081
    %v1083 = vpop.f32.mrf.mxu0
    %1084 = vdwg.mxu0
    %v1085 = vmul.f32 %v941, %v941
    %v1086 = vmul.f32 %v943, %v943
    %v1087 = vmul.f32 %v1082, %v1082
    %v1088 = vadd.f32 %v1085, %v1086
    %v1089 = vadd.f32 %v1088, %v1087
    %1090 = vadd.xlane.f32.xlu0 %v1089
    %v1091 = vpop.xlane.xlu0 %1090
    %v1092 = vrsqrt.pop %v1091
    %v1093 = vmul.f32 %v1091, %v1092
    %vm1094 = vcmp.eq.f32.partialorder %v1091, inf
    %v1095 = vsel %vm1094, %v1091, %v1093
    %vm1096 = vcmp.eq.f32.partialorder %v1091, 0.0
    %v1097 = vand.u32 %v1091, 2147483648
    %v1098 = vsel %vm1096, %v1097, %v1095
    %v1099 = vmax.f32 %v1098, 1e-12
    %v1100 = vrcp.pop %v1099
    %v1101 = vmul.f32 %v941, %v1100
    %v1102 = vmul.f32 %v943, %v1100
    %v1103 = vmul.f32 %v1082, %v1100
    %1104 = vst [vmem:[#allocation2] sm:$0xff] %v1101
    %1105 = vst [vmem:[#allocation2 + $0x8] sm:$0xff] %v1102
    %1106 = vst [vmem:[#allocation2 + $0x10] sm:$0xff] %v1103
    %v1107 = vrsqrt.pop %v638
    %v1108 = vmul.f32 %v638, %v1107
    %vm1109 = vcmp.eq.f32.partialorder %v638, inf
    %v1110 = vsel %vm1109, %v638, %v1108
    %vm1111 = vcmp.eq.f32.partialorder %v638, 0.0
    %v1112 = vand.u32 %v638, 2147483648
    %v1113 = vsel %vm1111, %v1112, %v1110
    %v1114 = vmax.f32 %v1113, 1e-12
    %v1115 = vrcp.pop %v1114
    %v1116 = vmul.f32 1.0, %v1115
    %v1117 = vld [vmem:[%s0] sm:$0xff]
    %v1118 = vmul.f32 %v1117, %v1116
    %1119 = vst [vmem:[#allocation4] sm:$0xff] %v1118
    %v1120 = vld [vmem:[%s241] sm:$0xff]
    %v1121 = vmul.f32 %v1120, %v1116
    %1122 = vst [vmem:[#allocation4 + $0x8] sm:$0xff] %v1121
    %v1123 = vld [vmem:[%s440] sm:$0xff]
    %v1124 = vmul.f32 %v1123, %v1116
    %1125 = vst [vmem:[#allocation4 + $0x10] sm:$0xff] %v1124
    // Predicated region
    $region22: #{_forward_padded.13} parent=1 // pred_check
      _
    $region23: #{_forward_padded.13} parent=1 // pred_check_branch
      %1127 = sbr.rel (0) target = $region25
    $region24: #{_forward_padded.13} parent=1 // pred_region
      %s1129 = ssub.s32 384, 384
      %1130 = vsyncadd [#allocation3], %s1129
      %s1132 = sshll.u32 [#allocation2], 4
      %s1133 = int_to_ptr.vmem [resolvable:$true] %s1132
      %1135 = dma.vmem_to_hbm [thread:$0]  %s1133, 384, %s5, [#allocation3]
    $region25: #{_forward_padded.13} parent=1 // pred_fallthru
      _
    // Predicated region
    $region26: #{_forward_padded.13} parent=1 // pred_check
      _
    $region27: #{_forward_padded.13} parent=1 // pred_check_branch
      %1137 = sbr.rel (0) target = $region29
    $region28: #{_forward_padded.13} parent=1 // pred_region
      %s1139 = ssub.s32 384, 384
      %1140 = vsyncadd [#allocation5], %s1139
      %s1142 = sshll.u32 [#allocation4], 4
      %s1143 = int_to_ptr.vmem [resolvable:$true] %s1142
      %1145 = dma.vmem_to_hbm [thread:$0]  %s1143, 384, %s6, [#allocation5]
    $region29: #{_forward_padded.13} parent=1 // pred_fallthru
      _
    // Predicated region
    $region30: #{_forward_padded.13} parent=1 // pred_check
      _
    $region31: #{_forward_padded.13} parent=1 // pred_check_branch
      %1147 = sbr.rel (0) target = $region33
    $region32: #{_forward_padded.13} parent=1 // pred_region
      %1148 = dma.done [#allocation3], 384
    $region33: #{_forward_padded.13} parent=1 // pred_fallthru
      _
    // Predicated region
    $region34: #{_forward_padded.13} parent=1 // pred_check
      _
    $region35: #{_forward_padded.13} parent=1 // pred_check_branch
      %1150 = sbr.rel (0) target = $region37
    $region36: #{_forward_padded.13} parent=1 // pred_region
      %1151 = dma.done [#allocation5], 384
    $region37: #{_forward_padded.13} parent=1 // pred_fallthru
      _
    %1152 = vsyncpa [#allocation3], 1
    %1153 = vsyncpa [#allocation5], 1

// kernel: _forward_padded.7
$region0: #{_forward_padded.7}
  #allocation0 [shape = 'u32[]', space=smem, size = 0x4, offset = 0x4, fixed_abs, tag = 'smem constant byte address 0x4 - core index']
  #allocation1 [shape = 'u32[144,128]{1,0:T(1,128)}', space=vmem, size = 0x12000, scoped, tag = 'internal scratch']
  #allocation2 [shape = 'f32[256,128]{1,0:T(8,128)}', space=vmem, size = 0x20000, scoped, tag = 'scratch operand']
  %s0 = inlined_call_operand.vmem [shape: bf16[256,256], index: 0, kind: input, shape index: {}]
  %s1 = inlined_call_operand.vmem [shape: bf16[256,128], index: 1, kind: input, shape index: {}]
  %s2 = inlined_call_operand.vmem [shape: bf16[128,128], index: 2, kind: input, shape index: {}]
  %s3 = inlined_call_operand.vmem [shape: f32[1,128], index: 3, kind: input, shape index: {}]
  %s4 = inlined_call_operand.vmem [shape: bf16[128,128], index: 4, kind: input, shape index: {}]
  %s5 = inlined_call_operand.vmem [shape: f32[1,128], index: 5, kind: input, shape index: {}]
  %s6 = inlined_call_operand.vmem [shape: f32[256,1], index: 6, kind: input, shape index: {}]
  %s7 = inlined_call_operand.vmem [shape: f32[256,128], index: 7, kind: output, shape index: {0}]
  %s8 = inlined_call_operand.vmem [shape: f32[1,8,128], index: 8, kind: output, shape index: {1}]
  %9 = xla_tuple %s7, %s8
  %s10 = sld [smem:[#allocation0]]
  $region54: #{_forward_padded.7} parent=0
    _
  %s12 = ssub.s32 1, %s10
  %s13 = scalar_select 0, %s12, %s10
  // Predicated region
  $region2: #{_forward_padded.7} parent=0 // pred_check
    _
  $region3: #{_forward_padded.7} parent=0 // pred_check_branch
    %15 = sbr.rel (0) target = $region5
  $region4: #{_forward_padded.7} parent=0 // pred_region
    _
  $region5: #{_forward_padded.7} parent=0 // pred_fallthru
    _
  // Predicated region
  $region6: #{_forward_padded.7} parent=0 // pred_check
    _
  $region7: #{_forward_padded.7} parent=0 // pred_check_branch
    %17 = sbr.rel (0) target = $region9
  $region8: #{_forward_padded.7} parent=0 // pred_region
    _
  $region9: #{_forward_padded.7} parent=0 // pred_fallthru
    _
  // Predicated region
  $region10: #{_forward_padded.7} parent=0 // pred_check
    _
  $region11: #{_forward_padded.7} parent=0 // pred_check_branch
    %19 = sbr.rel (0) target = $region13
  $region12: #{_forward_padded.7} parent=0 // pred_region
    _
  $region13: #{_forward_padded.7} parent=0 // pred_fallthru
    _
  // Predicated region
  $region14: #{_forward_padded.7} parent=0 // pred_check
    _
  $region15: #{_forward_padded.7} parent=0 // pred_check_branch
    %21 = sbr.rel (0) target = $region17
  $region16: #{_forward_padded.7} parent=0 // pred_region
    _
  $region17: #{_forward_padded.7} parent=0 // pred_fallthru
    _
  // Predicated region
  $region18: #{_forward_padded.7} parent=0 // pred_check
    _
  $region19: #{_forward_padded.7} parent=0 // pred_check_branch
    %23 = sbr.rel (0) target = $region21
  $region20: #{_forward_padded.7} parent=0 // pred_region
    _
  $region21: #{_forward_padded.7} parent=0 // pred_fallthru
    _
  // Predicated region
  $region22: #{_forward_padded.7} parent=0 // pred_check
    _
  $region23: #{_forward_padded.7} parent=0 // pred_check_branch
    %25 = sbr.rel (0) target = $region25
  $region24: #{_forward_padded.7} parent=0 // pred_region
    _
  $region25: #{_forward_padded.7} parent=0 // pred_fallthru
    _
  // Predicated region
  $region26: #{_forward_padded.7} parent=0 // pred_check
    _
  $region27: #{_forward_padded.7} parent=0 // pred_check_branch
    %27 = sbr.rel (0) target = $region29
  $region28: #{_forward_padded.7} parent=0 // pred_region
    _
  $region29: #{_forward_padded.7} parent=0 // pred_fallthru
    _
  %p29 = scmp.eq.s32.totalorder 0, 0
  // Predicated region
  $region30: #{_forward_padded.7} parent=0 // pred_check
    %p30 = pneg %p29
  $region31: #{_forward_padded.7} parent=0 // pred_check_branch
    %32 = sbr.rel (%p30) target = $region33
  $region32: #{_forward_padded.7} parent=0 // pred_region
    %33 = vst [vmem:[#allocation2] sm:$0xff] 0.0
    %34 = vst [vmem:[#allocation2 + $0x8] sm:$0xff] 0.0
    %35 = vst [vmem:[#allocation2 + $0x10] sm:$0xff] 0.0
    %36 = vst [vmem:[#allocation2 + $0x18] sm:$0xff] 0.0
    %37 = vst [vmem:[#allocation2 + $0x20] sm:$0xff] 0.0
    %38 = vst [vmem:[#allocation2 + $0x28] sm:$0xff] 0.0
    %39 = vst [vmem:[#allocation2 + $0x30] sm:$0xff] 0.0
    %40 = vst [vmem:[#allocation2 + $0x38] sm:$0xff] 0.0
    %41 = vst [vmem:[#allocation2 + $0x40] sm:$0xff] 0.0
    %42 = vst [vmem:[#allocation2 + $0x48] sm:$0xff] 0.0
    %43 = vst [vmem:[#allocation2 + $0x50] sm:$0xff] 0.0
    %44 = vst [vmem:[#allocation2 + $0x58] sm:$0xff] 0.0
    %45 = vst [vmem:[#allocation2 + $0x60] sm:$0xff] 0.0
    %46 = vst [vmem:[#allocation2 + $0x68] sm:$0xff] 0.0
    %47 = vst [vmem:[#allocation2 + $0x70] sm:$0xff] 0.0
    %48 = vst [vmem:[#allocation2 + $0x78] sm:$0xff] 0.0
    %49 = vst [vmem:[#allocation2 + $0x80] sm:$0xff] 0.0
    %50 = vst [vmem:[#allocation2 + $0x88] sm:$0xff] 0.0
    %51 = vst [vmem:[#allocation2 + $0x90] sm:$0xff] 0.0
    %52 = vst [vmem:[#allocation2 + $0x98] sm:$0xff] 0.0
    %53 = vst [vmem:[#allocation2 + $0xa0] sm:$0xff] 0.0
    %54 = vst [vmem:[#allocation2 + $0xa8] sm:$0xff] 0.0
    %55 = vst [vmem:[#allocation2 + $0xb0] sm:$0xff] 0.0
    %56 = vst [vmem:[#allocation2 + $0xb8] sm:$0xff] 0.0
    %57 = vst [vmem:[#allocation2 + $0xc0] sm:$0xff] 0.0
    %58 = vst [vmem:[#allocation2 + $0xc8] sm:$0xff] 0.0
    %59 = vst [vmem:[#allocation2 + $0xd0] sm:$0xff] 0.0
    %60 = vst [vmem:[#allocation2 + $0xd8] sm:$0xff] 0.0
    %61 = vst [vmem:[#allocation2 + $0xe0] sm:$0xff] 0.0
    %62 = vst [vmem:[#allocation2 + $0xe8] sm:$0xff] 0.0
    %63 = vst [vmem:[#allocation2 + $0xf0] sm:$0xff] 0.0
    %64 = vst [vmem:[#allocation2 + $0xf8] sm:$0xff] 0.0
  $region33: #{_forward_padded.7} parent=0 // pred_fallthru
    _
  %v65 = vld [vmem:[#allocation2] sm:$0xff]
  %v66 = vld [vmem:[#allocation2 + $0x8] sm:$0xff]
  %v67 = vld [vmem:[#allocation2 + $0x10] sm:$0xff]
  %v68 = vld [vmem:[#allocation2 + $0x18] sm:$0xff]
  %v69 = vld [vmem:[#allocation2 + $0x20] sm:$0xff]
  %v70 = vld [vmem:[#allocation2 + $0x28] sm:$0xff]
  %v71 = vld [vmem:[#allocation2 + $0x30] sm:$0xff]
  %v72 = vld [vmem:[#allocation2 + $0x38] sm:$0xff]
  %v73 = vld [vmem:[#allocation2 + $0x40] sm:$0xff]
  %v74 = vld [vmem:[#allocation2 + $0x48] sm:$0xff]
  %v75 = vld [vmem:[#allocation2 + $0x50] sm:$0xff]
  %v76 = vld [vmem:[#allocation2 + $0x58] sm:$0xff]
  %v77 = vld [vmem:[#allocation2 + $0x60] sm:$0xff]
  %v78 = vld [vmem:[#allocation2 + $0x68] sm:$0xff]
  %v79 = vld [vmem:[#allocation2 + $0x70] sm:$0xff]
  %v80 = vld [vmem:[#allocation2 + $0x78] sm:$0xff]
  %v81 = vld [vmem:[#allocation2 + $0x80] sm:$0xff]
  %v82 = vld [vmem:[#allocation2 + $0x88] sm:$0xff]
  %v83 = vld [vmem:[#allocation2 + $0x90] sm:$0xff]
  %v84 = vld [vmem:[#allocation2 + $0x98] sm:$0xff]
  %v85 = vld [vmem:[#allocation2 + $0xa0] sm:$0xff]
  %v86 = vld [vmem:[#allocation2 + $0xa8] sm:$0xff]
  %v87 = vld [vmem:[#allocation2 + $0xb0] sm:$0xff]
  %v88 = vld [vmem:[#allocation2 + $0xb8] sm:$0xff]
  %v89 = vld [vmem:[#allocation2 + $0xc0] sm:$0xff]
  %v90 = vld [vmem:[#allocation2 + $0xc8] sm:$0xff]
  %v91 = vld [vmem:[#allocation2 + $0xd0] sm:$0xff]
  %v92 = vld [vmem:[#allocation2 + $0xd8] sm:$0xff]
  %v93 = vld [vmem:[#allocation2 + $0xe0] sm:$0xff]
  %v94 = vld [vmem:[#allocation2 + $0xe8] sm:$0xff]
  %v95 = vld [vmem:[#allocation2 + $0xf0] sm:$0xff]
  %v96 = vld [vmem:[#allocation2 + $0xf8] sm:$0xff]
  %v97 = vld [vmem:[%s0] sm:$0xff]
  %v98 = vld [vmem:[%s0 + $0x8] sm:$0xff]
  %v99 = vld [vmem:[%s0 + $0x10] sm:$0xff]
  %v100 = vld [vmem:[%s0 + $0x18] sm:$0xff]
  %v101 = vld [vmem:[%s0 + $0x20] sm:$0xff]
  %v102 = vld [vmem:[%s0 + $0x28] sm:$0xff]
  %v103 = vld [vmem:[%s0 + $0x30] sm:$0xff]
  %v104 = vld [vmem:[%s0 + $0x38] sm:$0xff]
  %v105 = vld [vmem:[%s0 + $0x40] sm:$0xff]
  %v106 = vld [vmem:[%s0 + $0x48] sm:$0xff]
  %v107 = vld [vmem:[%s0 + $0x50] sm:$0xff]
  %v108 = vld [vmem:[%s0 + $0x58] sm:$0xff]
  %v109 = vld [vmem:[%s0 + $0x60] sm:$0xff]
  %v110 = vld [vmem:[%s0 + $0x68] sm:$0xff]
  %v111 = vld [vmem:[%s0 + $0x70] sm:$0xff]
  %v112 = vld [vmem:[%s0 + $0x78] sm:$0xff]
  %v113 = vld [vmem:[%s0 + $0x80] sm:$0xff]
  %v114 = vld [vmem:[%s0 + $0x88] sm:$0xff]
  %v115 = vld [vmem:[%s0 + $0x90] sm:$0xff]
  %v116 = vld [vmem:[%s0 + $0x98] sm:$0xff]
  %v117 = vld [vmem:[%s0 + $0xa0] sm:$0xff]
  %v118 = vld [vmem:[%s0 + $0xa8] sm:$0xff]
  %v119 = vld [vmem:[%s0 + $0xb0] sm:$0xff]
  %v120 = vld [vmem:[%s0 + $0xb8] sm:$0xff]
  %v121 = vld [vmem:[%s0 + $0xc0] sm:$0xff]
  %v122 = vld [vmem:[%s0 + $0xc8] sm:$0xff]
  %v123 = vld [vmem:[%s0 + $0xd0] sm:$0xff]
  %v124 = vld [vmem:[%s0 + $0xd8] sm:$0xff]
  %v125 = vld [vmem:[%s0 + $0xe0] sm:$0xff]
  %v126 = vld [vmem:[%s0 + $0xe8] sm:$0xff]
  %v127 = vld [vmem:[%s0 + $0xf0] sm:$0xff]
  %v128 = vld [vmem:[%s0 + $0xf8] sm:$0xff]
  %v129 = vld [vmem:[%s1] sm:$0xf]
  %v130 = vld [vmem:[%s1 + $0x4] sm:$0xf]
  %v131 = vld [vmem:[%s1 + $0x8] sm:$0xf]
  %v132 = vld [vmem:[%s1 + $0xc] sm:$0xf]
  %v133 = vld [vmem:[%s1 + $0x10] sm:$0xf]
  %v134 = vld [vmem:[%s1 + $0x14] sm:$0xf]
  %v135 = vld [vmem:[%s1 + $0x18] sm:$0xf]
  %v136 = vld [vmem:[%s1 + $0x1c] sm:$0xf]
  %v137 = vld [vmem:[%s1 + $0x20] sm:$0xf]
  %v138 = vld [vmem:[%s1 + $0x24] sm:$0xf]
  %v139 = vld [vmem:[%s1 + $0x28] sm:$0xf]
  %v140 = vld [vmem:[%s1 + $0x2c] sm:$0xf]
  %v141 = vld [vmem:[%s1 + $0x30] sm:$0xf]
  %v142 = vld [vmem:[%s1 + $0x34] sm:$0xf]
  %v143 = vld [vmem:[%s1 + $0x38] sm:$0xf]
  %v144 = vld [vmem:[%s1 + $0x3c] sm:$0xf]
  %v145 = vld [vmem:[%s1 + $0x40] sm:$0xf]
  %v146 = vld [vmem:[%s1 + $0x44] sm:$0xf]
  %v147 = vld [vmem:[%s1 + $0x48] sm:$0xf]
  %v148 = vld [vmem:[%s1 + $0x4c] sm:$0xf]
  %v149 = vld [vmem:[%s1 + $0x50] sm:$0xf]
  %v150 = vld [vmem:[%s1 + $0x54] sm:$0xf]
  %v151 = vld [vmem:[%s1 + $0x58] sm:$0xf]
  %v152 = vld [vmem:[%s1 + $0x5c] sm:$0xf]
  %v153 = vld [vmem:[%s1 + $0x60] sm:$0xf]
  %v154 = vld [vmem:[%s1 + $0x64] sm:$0xf]
  %v155 = vld [vmem:[%s1 + $0x68] sm:$0xf]
  %v156 = vld [vmem:[%s1 + $0x6c] sm:$0xf]
  %v157 = vld [vmem:[%s1 + $0x70] sm:$0xf]
  %v158 = vld [vmem:[%s1 + $0x74] sm:$0xf]
  %v159 = vld [vmem:[%s1 + $0x78] sm:$0xf]
  %v160 = vld [vmem:[%s1 + $0x7c] sm:$0xf]
  %v193 = vunpack.c.l.b16 %v97
  %v194 = vunpack.c.h.b16 %v97
  %v195 = vunpack.c.l.b16 %v98
  %v196 = vunpack.c.h.b16 %v98
  %v197 = vunpack.c.l.b16 %v99
  %v198 = vunpack.c.h.b16 %v99
  %v199 = vunpack.c.l.b16 %v100
  %v200 = vunpack.c.h.b16 %v100
  %v201 = vunpack.c.l.b16 %v101
  %v202 = vunpack.c.h.b16 %v101
  %v203 = vunpack.c.l.b16 %v102
  %v204 = vunpack.c.h.b16 %v102
  %v205 = vunpack.c.l.b16 %v103
  %v206 = vunpack.c.h.b16 %v103
  %v207 = vunpack.c.l.b16 %v104
  %v208 = vunpack.c.h.b16 %v104
  %v209 = vunpack.c.l.b16 %v105
  %v210 = vunpack.c.h.b16 %v105
  %v211 = vunpack.c.l.b16 %v106
  %v212 = vunpack.c.h.b16 %v106
  %v213 = vunpack.c.l.b16 %v107
  %v214 = vunpack.c.h.b16 %v107
  %v215 = vunpack.c.l.b16 %v108
  %v216 = vunpack.c.h.b16 %v108
  %v217 = vunpack.c.l.b16 %v109
  %v218 = vunpack.c.h.b16 %v109
  %v219 = vunpack.c.l.b16 %v110
  %v220 = vunpack.c.h.b16 %v110
  %v221 = vunpack.c.l.b16 %v111
  %v222 = vunpack.c.h.b16 %v111
  %v223 = vunpack.c.l.b16 %v112
  %v224 = vunpack.c.h.b16 %v112
  %v225 = vunpack.c.l.b16 %v113
  %v226 = vunpack.c.h.b16 %v113
  %v227 = vunpack.c.l.b16 %v114
  %v228 = vunpack.c.h.b16 %v114
  %v229 = vunpack.c.l.b16 %v115
  %v230 = vunpack.c.h.b16 %v115
  %v231 = vunpack.c.l.b16 %v116
  %v232 = vunpack.c.h.b16 %v116
  %v233 = vunpack.c.l.b16 %v117
  %v234 = vunpack.c.h.b16 %v117
  %v235 = vunpack.c.l.b16 %v118
  %v236 = vunpack.c.h.b16 %v118
  %v237 = vunpack.c.l.b16 %v119
  %v238 = vunpack.c.h.b16 %v119
  %v239 = vunpack.c.l.b16 %v120
  %v240 = vunpack.c.h.b16 %v120
  %v241 = vunpack.c.l.b16 %v121
  %v242 = vunpack.c.h.b16 %v121
  %v243 = vunpack.c.l.b16 %v122
  %v244 = vunpack.c.h.b16 %v122
  %v245 = vunpack.c.l.b16 %v123
  %v246 = vunpack.c.h.b16 %v123
  %v247 = vunpack.c.l.b16 %v124
  %v248 = vunpack.c.h.b16 %v124
  %v249 = vunpack.c.l.b16 %v125
  %v250 = vunpack.c.h.b16 %v125
  %v251 = vunpack.c.l.b16 %v126
  %v252 = vunpack.c.h.b16 %v126
  %v253 = vunpack.c.l.b16 %v127
  %v254 = vunpack.c.h.b16 %v127
  %v255 = vunpack.c.l.b16 %v128
  %v256 = vunpack.c.h.b16 %v128
  %v257 = vpack.c.b16 %v195, %v193
  %v258 = vpack.c.b16 %v196, %v194
  %v259 = vpack.c.b16 %v199, %v197
  %v260 = vpack.c.b16 %v200, %v198
  %v261 = vpack.c.b16 %v203, %v201
  %v262 = vpack.c.b16 %v204, %v202
  %v263 = vpack.c.b16 %v207, %v205
  %v264 = vpack.c.b16 %v208, %v206
  %v265 = vpack.c.b16 %v211, %v209
  %v266 = vpack.c.b16 %v212, %v210
  %v267 = vpack.c.b16 %v215, %v213
  %v268 = vpack.c.b16 %v216, %v214
  %v269 = vpack.c.b16 %v219, %v217
  %v270 = vpack.c.b16 %v220, %v218
  %v271 = vpack.c.b16 %v223, %v221
  %v272 = vpack.c.b16 %v224, %v222
  %v273 = vpack.c.b16 %v227, %v225
  %v274 = vpack.c.b16 %v228, %v226
  %v275 = vpack.c.b16 %v231, %v229
  %v276 = vpack.c.b16 %v232, %v230
  %v277 = vpack.c.b16 %v235, %v233
  %v278 = vpack.c.b16 %v236, %v234
  %v279 = vpack.c.b16 %v239, %v237
  %v280 = vpack.c.b16 %v240, %v238
  %v281 = vpack.c.b16 %v243, %v241
  %v282 = vpack.c.b16 %v244, %v242
  %v283 = vpack.c.b16 %v247, %v245
  %v284 = vpack.c.b16 %v248, %v246
  %v285 = vpack.c.b16 %v251, %v249
  %v286 = vpack.c.b16 %v252, %v250
  %v287 = vpack.c.b16 %v255, %v253
  %v288 = vpack.c.b16 %v256, %v254
  %v353 = vunpack.c.l.b16 %v129
  %v354 = vunpack.c.l.b16 %v130
  %v355 = vunpack.c.l.b16 %v131
  %v356 = vunpack.c.l.b16 %v132
  %v357 = vunpack.c.l.b16 %v133
  %v358 = vunpack.c.l.b16 %v134
  %v359 = vunpack.c.l.b16 %v135
  %v360 = vunpack.c.l.b16 %v136
  %v361 = vunpack.c.l.b16 %v137
  %v362 = vunpack.c.l.b16 %v138
  %v363 = vunpack.c.l.b16 %v139
  %v364 = vunpack.c.l.b16 %v140
  %v365 = vunpack.c.l.b16 %v141
  %v366 = vunpack.c.l.b16 %v142
  %v367 = vunpack.c.l.b16 %v143
  %v368 = vunpack.c.l.b16 %v144
  %v369 = vunpack.c.l.b16 %v145
  %v370 = vunpack.c.l.b16 %v146
  %v371 = vunpack.c.l.b16 %v147
  %v372 = vunpack.c.l.b16 %v148
  %v373 = vunpack.c.l.b16 %v149
  %v374 = vunpack.c.l.b16 %v150
  %v375 = vunpack.c.l.b16 %v151
  %v376 = vunpack.c.l.b16 %v152
  %v377 = vunpack.c.l.b16 %v153
  %v378 = vunpack.c.l.b16 %v154
  %v379 = vunpack.c.l.b16 %v155
  %v380 = vunpack.c.l.b16 %v156
  %v381 = vunpack.c.l.b16 %v157
  %v382 = vunpack.c.l.b16 %v158
  %v383 = vunpack.c.l.b16 %v159
  %v384 = vunpack.c.l.b16 %v160
  %v385 = vpack.c.b16 %v354, %v353
  %v386 = vpack.c.b16 %v356, %v355
  %v387 = vpack.c.b16 %v358, %v357
  %v388 = vpack.c.b16 %v360, %v359
  %v389 = vpack.c.b16 %v362, %v361
  %v390 = vpack.c.b16 %v364, %v363
  %v391 = vpack.c.b16 %v366, %v365
  %v392 = vpack.c.b16 %v368, %v367
  %v393 = vpack.c.b16 %v370, %v369
  %v394 = vpack.c.b16 %v372, %v371
  %v395 = vpack.c.b16 %v374, %v373
  %v396 = vpack.c.b16 %v376, %v375
  %v397 = vpack.c.b16 %v378, %v377
  %v398 = vpack.c.b16 %v380, %v379
  %v399 = vpack.c.b16 %v382, %v381
  %v400 = vpack.c.b16 %v384, %v383
  %417 = vmatprep.subr.bf16.mxu0 0
  %418 = vmatpush1.bf16.msra.mxu0 %v392
  %419 = vmatprep.subr.bf16.mxu0 0
  %420 = vmatpush1.bf16.msra.mxu0 %v391
  %421 = vmatprep.subr.bf16.mxu0 0
  %422 = vmatpush1.bf16.msra.mxu0 %v390
  %423 = vmatprep.subr.bf16.mxu0 0
  %424 = vmatpush1.bf16.msra.mxu0 %v389
  %425 = vmatprep.subr.bf16.mxu0 0
  %426 = vmatpush1.bf16.msra.mxu0 %v388
  %427 = vmatprep.subr.bf16.mxu0 0
  %428 = vmatpush1.bf16.msra.mxu0 %v387
  %429 = vmatprep.subr.bf16.mxu0 0
  %430 = vmatpush1.bf16.msra.mxu0 %v386
  %431 = vmatprep.subr.bf16.mxu0 0
  %432 = vmatpush1.bf16.msra.mxu0 %v385
  %433 = vmatprep.subr.bf16.mxu0 0
  %434 = vmatpush2.bf16.msra.mxu0 %v400
  %435 = vmatprep.subr.bf16.mxu0 0
  %436 = vmatpush2.bf16.msra.mxu0 %v399
  %437 = vmatprep.subr.bf16.mxu0 0
  %438 = vmatpush2.bf16.msra.mxu0 %v398
  %439 = vmatprep.subr.bf16.mxu0 0
  %440 = vmatpush2.bf16.msra.mxu0 %v397
  %441 = vmatprep.subr.bf16.mxu0 0
  %442 = vmatpush2.bf16.msra.mxu0 %v396
  %443 = vmatprep.subr.bf16.mxu0 0
  %444 = vmatpush2.bf16.msra.mxu0 %v395
  %445 = vmatprep.subr.bf16.mxu0 0
  %446 = vmatpush2.bf16.msra.mxu0 %v394
  %447 = vmatprep.subr.bf16.mxu0 0
  %448 = vmatpush2.bf16.msra.mxu0 %v393
  %449 = vmatprep.mubr.bf16.mxu0 %v258
  %450 = vmatmul.mubr.bf16.gmra.mxu0 %v257
  %v451 = vpop.f32.mrf.mxu0
  %v452 = vadd.f32 0.0, %v451
  %v453 = vpop.f32.mrf.mxu0
  %v454 = vpop.f32.mrf.mxu0
  %v455 = vadd.f32 0.0, %v454
  %v456 = vpop.f32.mrf.mxu0
  %457 = vmatprep.mubr.bf16.mxu0 %v260
  %458 = vmatmul.mubr.bf16.gmra.mxu0 %v259
  %v459 = vpop.f32.mrf.mxu0
  %v460 = vadd.f32 0.0, %v459
  %v461 = vpop.f32.mrf.mxu0
  %v462 = vpop.f32.mrf.mxu0
  %v463 = vadd.f32 0.0, %v462
  %v464 = vpop.f32.mrf.mxu0
  %465 = vmatprep.mubr.bf16.mxu0 %v262
  %466 = vmatmul.mubr.bf16.gmra.mxu0 %v261
  %v467 = vpop.f32.mrf.mxu0
  %v468 = vadd.f32 0.0, %v467
  %v469 = vpop.f32.mrf.mxu0
  %v470 = vpop.f32.mrf.mxu0
  %v471 = vadd.f32 0.0, %v470
  %v472 = vpop.f32.mrf.mxu0
  %473 = vmatprep.mubr.bf16.mxu0 %v264
  %474 = vmatmul.mubr.bf16.gmra.mxu0 %v263
  %v475 = vpop.f32.mrf.mxu0
  %v476 = vadd.f32 0.0, %v475
  %v477 = vpop.f32.mrf.mxu0
  %v478 = vpop.f32.mrf.mxu0
  %v479 = vadd.f32 0.0, %v478
  %v480 = vpop.f32.mrf.mxu0
  %481 = vmatprep.mubr.bf16.mxu0 %v266
  %482 = vmatmul.mubr.bf16.gmra.mxu0 %v265
  %v483 = vpop.f32.mrf.mxu0
  %v484 = vadd.f32 0.0, %v483
  %v485 = vpop.f32.mrf.mxu0
  %v486 = vpop.f32.mrf.mxu0
  %v487 = vadd.f32 0.0, %v486
  %v488 = vpop.f32.mrf.mxu0
  %489 = vmatprep.mubr.bf16.mxu0 %v268
  %490 = vmatmul.mubr.bf16.gmra.mxu0 %v267
  %v491 = vpop.f32.mrf.mxu0
  %v492 = vadd.f32 0.0, %v491
  %v493 = vpop.f32.mrf.mxu0
  %v494 = vpop.f32.mrf.mxu0
  %v495 = vadd.f32 0.0, %v494
  %v496 = vpop.f32.mrf.mxu0
  %497 = vmatprep.mubr.bf16.mxu0 %v270
  %498 = vmatmul.mubr.bf16.gmra.mxu0 %v269
  %v499 = vpop.f32.mrf.mxu0
  %v500 = vadd.f32 0.0, %v499
  %v501 = vpop.f32.mrf.mxu0
  %v502 = vpop.f32.mrf.mxu0
  %v503 = vadd.f32 0.0, %v502
  %v504 = vpop.f32.mrf.mxu0
  %505 = vmatprep.mubr.bf16.mxu0 %v272
  %506 = vmatmul.mubr.bf16.gmra.mxu0 %v271
  %v507 = vpop.f32.mrf.mxu0
  %v508 = vadd.f32 0.0, %v507
  %v509 = vpop.f32.mrf.mxu0
  %v510 = vpop.f32.mrf.mxu0
  %v511 = vadd.f32 0.0, %v510
  %v512 = vpop.f32.mrf.mxu0
  %513 = vmatprep.mubr.bf16.mxu0 %v274
  %514 = vmatmul.mubr.bf16.gmra.mxu0 %v273
  %v515 = vpop.f32.mrf.mxu0
  %v516 = vadd.f32 0.0, %v515
  %v517 = vpop.f32.mrf.mxu0
  %v518 = vpop.f32.mrf.mxu0
  %v519 = vadd.f32 0.0, %v518
  %v520 = vpop.f32.mrf.mxu0
  %521 = vmatprep.mubr.bf16.mxu0 %v276
  %522 = vmatmul.mubr.bf16.gmra.mxu0 %v275
  %v523 = vpop.f32.mrf.mxu0
  %v524 = vadd.f32 0.0, %v523
  %v525 = vpop.f32.mrf.mxu0
  %v526 = vpop.f32.mrf.mxu0
  %v527 = vadd.f32 0.0, %v526
  %v528 = vpop.f32.mrf.mxu0
  %529 = vmatprep.mubr.bf16.mxu0 %v278
  %530 = vmatmul.mubr.bf16.gmra.mxu0 %v277
  %v531 = vpop.f32.mrf.mxu0
  %v532 = vadd.f32 0.0, %v531
  %v533 = vpop.f32.mrf.mxu0
  %v534 = vpop.f32.mrf.mxu0
  %v535 = vadd.f32 0.0, %v534
  %v536 = vpop.f32.mrf.mxu0
  %537 = vmatprep.mubr.bf16.mxu0 %v280
  %538 = vmatmul.mubr.bf16.gmra.mxu0 %v279
  %v539 = vpop.f32.mrf.mxu0
  %v540 = vadd.f32 0.0, %v539
  %v541 = vpop.f32.mrf.mxu0
  %v542 = vpop.f32.mrf.mxu0
  %v543 = vadd.f32 0.0, %v542
  %v544 = vpop.f32.mrf.mxu0
  %545 = vmatprep.mubr.bf16.mxu0 %v282
  %546 = vmatmul.mubr.bf16.gmra.mxu0 %v281
  %v547 = vpop.f32.mrf.mxu0
  %v548 = vadd.f32 0.0, %v547
  %v549 = vpop.f32.mrf.mxu0
  %v550 = vpop.f32.mrf.mxu0
  %v551 = vadd.f32 0.0, %v550
  %v552 = vpop.f32.mrf.mxu0
  %553 = vmatprep.mubr.bf16.mxu0 %v284
  %554 = vmatmul.mubr.bf16.gmra.mxu0 %v283
  %v555 = vpop.f32.mrf.mxu0
  %v556 = vadd.f32 0.0, %v555
  %v557 = vpop.f32.mrf.mxu0
  %v558 = vpop.f32.mrf.mxu0
  %v559 = vadd.f32 0.0, %v558
  %v560 = vpop.f32.mrf.mxu0
  %561 = vmatprep.mubr.bf16.mxu0 %v286
  %562 = vmatmul.mubr.bf16.gmra.mxu0 %v285
  %v563 = vpop.f32.mrf.mxu0
  %v564 = vadd.f32 0.0, %v563
  %v565 = vpop.f32.mrf.mxu0
  %v566 = vpop.f32.mrf.mxu0
  %v567 = vadd.f32 0.0, %v566
  %v568 = vpop.f32.mrf.mxu0
  %569 = vmatprep.mubr.bf16.mxu0 %v288
  %570 = vmatmul.mubr.bf16.gmra.mxu0 %v287
  %v571 = vpop.f32.mrf.mxu0
  %v572 = vadd.f32 0.0, %v571
  %v573 = vpop.f32.mrf.mxu0
  %v574 = vpop.f32.mrf.mxu0
  %v575 = vadd.f32 0.0, %v574
  %v576 = vpop.f32.mrf.mxu0
  %577 = vdwg.mxu0
  %v578 = vadd.f32 %v65, %v452
  %v579 = vadd.f32 %v66, %v455
  %v580 = vadd.f32 %v67, %v460
  %v581 = vadd.f32 %v68, %v463
  %v582 = vadd.f32 %v69, %v468
  %v583 = vadd.f32 %v70, %v471
  %v584 = vadd.f32 %v71, %v476
  %v585 = vadd.f32 %v72, %v479
  %v586 = vadd.f32 %v73, %v484
  %v587 = vadd.f32 %v74, %v487
  %v588 = vadd.f32 %v75, %v492
  %v589 = vadd.f32 %v76, %v495
  %v590 = vadd.f32 %v77, %v500
  %v591 = vadd.f32 %v78, %v503
  %v592 = vadd.f32 %v79, %v508
  %v593 = vadd.f32 %v80, %v511
  %v594 = vadd.f32 %v81, %v516
  %v595 = vadd.f32 %v82, %v519
  %v596 = vadd.f32 %v83, %v524
  %v597 = vadd.f32 %v84, %v527
  %v598 = vadd.f32 %v85, %v532
  %v599 = vadd.f32 %v86, %v535
  %v600 = vadd.f32 %v87, %v540
  %v601 = vadd.f32 %v88, %v543
  %v602 = vadd.f32 %v89, %v548
  %v603 = vadd.f32 %v90, %v551
  %v604 = vadd.f32 %v91, %v556
  %v605 = vadd.f32 %v92, %v559
  %v606 = vadd.f32 %v93, %v564
  %v607 = vadd.f32 %v94, %v567
  %v608 = vadd.f32 %v95, %v572
  %v609 = vadd.f32 %v96, %v575
  %610 = vst [vmem:[#allocation2] sm:$0xff] %v578
  %611 = vst [vmem:[#allocation2 + $0x8] sm:$0xff] %v579
  %612 = vst [vmem:[#allocation2 + $0x10] sm:$0xff] %v580
  %613 = vst [vmem:[#allocation2 + $0x18] sm:$0xff] %v581
  %614 = vst [vmem:[#allocation2 + $0x20] sm:$0xff] %v582
  %615 = vst [vmem:[#allocation2 + $0x28] sm:$0xff] %v583
  %616 = vst [vmem:[#allocation2 + $0x30] sm:$0xff] %v584
  %617 = vst [vmem:[#allocation2 + $0x38] sm:$0xff] %v585
  %618 = vst [vmem:[#allocation2 + $0x40] sm:$0xff] %v586
  %619 = vst [vmem:[#allocation2 + $0x48] sm:$0xff] %v587
  %620 = vst [vmem:[#allocation2 + $0x50] sm:$0xff] %v588
  %621 = vst [vmem:[#allocation2 + $0x58] sm:$0xff] %v589
  %622 = vst [vmem:[#allocation2 + $0x60] sm:$0xff] %v590
  %623 = vst [vmem:[#allocation2 + $0x68] sm:$0xff] %v591
  %624 = vst [vmem:[#allocation2 + $0x70] sm:$0xff] %v592
  %625 = vst [vmem:[#allocation2 + $0x78] sm:$0xff] %v593
  %626 = vst [vmem:[#allocation2 + $0x80] sm:$0xff] %v594
  %627 = vst [vmem:[#allocation2 + $0x88] sm:$0xff] %v595
  %628 = vst [vmem:[#allocation2 + $0x90] sm:$0xff] %v596
  %629 = vst [vmem:[#allocation2 + $0x98] sm:$0xff] %v597
  %630 = vst [vmem:[#allocation2 + $0xa0] sm:$0xff] %v598
  %631 = vst [vmem:[#allocation2 + $0xa8] sm:$0xff] %v599
  %632 = vst [vmem:[#allocation2 + $0xb0] sm:$0xff] %v600
  %633 = vst [vmem:[#allocation2 + $0xb8] sm:$0xff] %v601
  %634 = vst [vmem:[#allocation2 + $0xc0] sm:$0xff] %v602
  %635 = vst [vmem:[#allocation2 + $0xc8] sm:$0xff] %v603
  %636 = vst [vmem:[#allocation2 + $0xd0] sm:$0xff] %v604
  %637 = vst [vmem:[#allocation2 + $0xd8] sm:$0xff] %v605
  %638 = vst [vmem:[#allocation2 + $0xe0] sm:$0xff] %v606
  %639 = vst [vmem:[#allocation2 + $0xe8] sm:$0xff] %v607
  %640 = vst [vmem:[#allocation2 + $0xf0] sm:$0xff] %v608
  %641 = vst [vmem:[#allocation2 + $0xf8] sm:$0xff] %v609
  // Predicated region
  $region34: #{_forward_padded.7} parent=0 // pred_check
    %p642 = pneg %p29
  $region35: #{_forward_padded.7} parent=0 // pred_check_branch
    %644 = sbr.rel (%p642) target = $region37
  $region36: #{_forward_padded.7} parent=0 // pred_region
    %v645 = vld [vmem:[#allocation2] sm:$0xff]
    %v646 = vld [vmem:[#allocation2 + $0x8] sm:$0xff]
    %v647 = vld [vmem:[#allocation2 + $0x10] sm:$0xff]
    %v648 = vld [vmem:[#allocation2 + $0x18] sm:$0xff]
    %v649 = vld [vmem:[#allocation2 + $0x20] sm:$0xff]
    %v650 = vld [vmem:[#allocation2 + $0x28] sm:$0xff]
    %v651 = vld [vmem:[#allocation2 + $0x30] sm:$0xff]
    %v652 = vld [vmem:[#allocation2 + $0x38] sm:$0xff]
    %v653 = vld [vmem:[#allocation2 + $0x40] sm:$0xff]
    %v654 = vld [vmem:[#allocation2 + $0x48] sm:$0xff]
    %v655 = vld [vmem:[#allocation2 + $0x50] sm:$0xff]
    %v656 = vld [vmem:[#allocation2 + $0x58] sm:$0xff]
    %v657 = vld [vmem:[#allocation2 + $0x60] sm:$0xff]
    %v658 = vld [vmem:[#allocation2 + $0x68] sm:$0xff]
    %v659 = vld [vmem:[#allocation2 + $0x70] sm:$0xff]
    %v660 = vld [vmem:[#allocation2 + $0x78] sm:$0xff]
    %v661 = vld [vmem:[#allocation2 + $0x80] sm:$0xff]
    %v662 = vld [vmem:[#allocation2 + $0x88] sm:$0xff]
    %v663 = vld [vmem:[#allocation2 + $0x90] sm:$0xff]
    %v664 = vld [vmem:[#allocation2 + $0x98] sm:$0xff]
    %v665 = vld [vmem:[#allocation2 + $0xa0] sm:$0xff]
    %v666 = vld [vmem:[#allocation2 + $0xa8] sm:$0xff]
    %v667 = vld [vmem:[#allocation2 + $0xb0] sm:$0xff]
    %v668 = vld [vmem:[#allocation2 + $0xb8] sm:$0xff]
    %v669 = vld [vmem:[#allocation2 + $0xc0] sm:$0xff]
    %v670 = vld [vmem:[#allocation2 + $0xc8] sm:$0xff]
    %v671 = vld [vmem:[#allocation2 + $0xd0] sm:$0xff]
    %v672 = vld [vmem:[#allocation2 + $0xd8] sm:$0xff]
    %v673 = vld [vmem:[#allocation2 + $0xe0] sm:$0xff]
    %v674 = vld [vmem:[#allocation2 + $0xe8] sm:$0xff]
    %v675 = vld [vmem:[#allocation2 + $0xf0] sm:$0xff]
    %v676 = vld [vmem:[#allocation2 + $0xf8] sm:$0xff]
    %v677 = vpack.c.bf16 %v646, %v645
    %v678 = vpack.c.bf16 %v648, %v647
    %v679 = vpack.c.bf16 %v650, %v649
    %v680 = vpack.c.bf16 %v652, %v651
    %v681 = vpack.c.bf16 %v654, %v653
    %v682 = vpack.c.bf16 %v656, %v655
    %v683 = vpack.c.bf16 %v658, %v657
    %v684 = vpack.c.bf16 %v660, %v659
    %v685 = vpack.c.bf16 %v662, %v661
    %v686 = vpack.c.bf16 %v664, %v663
    %v687 = vpack.c.bf16 %v666, %v665
    %v688 = vpack.c.bf16 %v668, %v667
    %v689 = vpack.c.bf16 %v670, %v669
    %v690 = vpack.c.bf16 %v672, %v671
    %v691 = vpack.c.bf16 %v674, %v673
    %v692 = vpack.c.bf16 %v676, %v675
    %v693 = vld [vmem:[%s2] sm:$0xf]
    %v694 = vld [vmem:[%s2 + $0x4] sm:$0xf]
    %v695 = vld [vmem:[%s2 + $0x8] sm:$0xf]
    %v696 = vld [vmem:[%s2 + $0xc] sm:$0xf]
    %v697 = vld [vmem:[%s2 + $0x10] sm:$0xf]
    %v698 = vld [vmem:[%s2 + $0x14] sm:$0xf]
    %v699 = vld [vmem:[%s2 + $0x18] sm:$0xf]
    %v700 = vld [vmem:[%s2 + $0x1c] sm:$0xf]
    %v701 = vld [vmem:[%s2 + $0x20] sm:$0xf]
    %v702 = vld [vmem:[%s2 + $0x24] sm:$0xf]
    %v703 = vld [vmem:[%s2 + $0x28] sm:$0xf]
    %v704 = vld [vmem:[%s2 + $0x2c] sm:$0xf]
    %v705 = vld [vmem:[%s2 + $0x30] sm:$0xf]
    %v706 = vld [vmem:[%s2 + $0x34] sm:$0xf]
    %v707 = vld [vmem:[%s2 + $0x38] sm:$0xf]
    %v708 = vld [vmem:[%s2 + $0x3c] sm:$0xf]
    %v709 = vld [vmem:[%s3] sm:$0x1]
    %v711 = vlaneseq
    %v712 = vshrl.u32 %v711, 7
    %v713 = vsub.s32 0, %v712
    %v714 = vrot.slane %v709, %v713
    %v732 = vunpack.c.l.b16 %v693
    %v733 = vunpack.c.l.b16 %v694
    %v734 = vunpack.c.l.b16 %v695
    %v735 = vunpack.c.l.b16 %v696
    %v736 = vunpack.c.l.b16 %v697
    %v737 = vunpack.c.l.b16 %v698
    %v738 = vunpack.c.l.b16 %v699
    %v739 = vunpack.c.l.b16 %v700
    %v740 = vunpack.c.l.b16 %v701
    %v741 = vunpack.c.l.b16 %v702
    %v742 = vunpack.c.l.b16 %v703
    %v743 = vunpack.c.l.b16 %v704
    %v744 = vunpack.c.l.b16 %v705
    %v745 = vunpack.c.l.b16 %v706
    %v746 = vunpack.c.l.b16 %v707
    %v747 = vunpack.c.l.b16 %v708
    %v748 = vpack.c.b16 %v733, %v732
    %v749 = vpack.c.b16 %v735, %v734
    %v750 = vpack.c.b16 %v737, %v736
    %v751 = vpack.c.b16 %v739, %v738
    %v752 = vpack.c.b16 %v741, %v740
    %v753 = vpack.c.b16 %v743, %v742
    %v754 = vpack.c.b16 %v745, %v744
    %v755 = vpack.c.b16 %v747, %v746
    %764 = vmatprep.subr.bf16.mxu0 0
    %765 = vmatpush1.bf16.msra.mxu0 %v755
    %766 = vmatprep.subr.bf16.mxu0 0
    %767 = vmatpush1.bf16.msra.mxu0 %v754
    %768 = vmatprep.subr.bf16.mxu0 0
    %769 = vmatpush1.bf16.msra.mxu0 %v753
    %770 = vmatprep.subr.bf16.mxu0 0
    %771 = vmatpush1.bf16.msra.mxu0 %v752
    %772 = vmatprep.subr.bf16.mxu0 0
    %773 = vmatpush1.bf16.msra.mxu0 %v751
    %774 = vmatprep.subr.bf16.mxu0 0
    %775 = vmatpush1.bf16.msra.mxu0 %v750
    %776 = vmatprep.subr.bf16.mxu0 0
    %777 = vmatpush1.bf16.msra.mxu0 %v749
    %778 = vmatprep.subr.bf16.mxu0 0
    %779 = vmatpush1.bf16.msra.mxu0 %v748
    %780 = vmatprep.subr.bf16.mxu0 0
    %781 = vmatpush2.bf16.msra.mxu0 0
    %782 = vmatprep.subr.bf16.mxu0 0
    %783 = vmatpush2.bf16.msra.mxu0 0
    %784 = vmatprep.subr.bf16.mxu0 0
    %785 = vmatpush2.bf16.msra.mxu0 0
    %786 = vmatprep.subr.bf16.mxu0 0
    %787 = vmatpush2.bf16.msra.mxu0 0
    %788 = vmatprep.subr.bf16.mxu0 0
    %789 = vmatpush2.bf16.msra.mxu0 0
    %790 = vmatprep.subr.bf16.mxu0 0
    %791 = vmatpush2.bf16.msra.mxu0 0
    %792 = vmatprep.subr.bf16.mxu0 0
    %793 = vmatpush2.bf16.msra.mxu0 0
    %794 = vmatprep.subr.bf16.mxu0 0
    %795 = vmatpush2.bf16.msra.mxu0 0
    %796 = vmatprep.mubr.bf16.mxu0 0
    %797 = vmatmul.mubr.bf16.gmra.mxu0 %v677
    %v798 = vpop.f32.mrf.mxu0
    %v799 = vadd.f32 %v714, %v798
    %v800 = vpop.f32.mrf.mxu0
    %v801 = vpop.f32.mrf.mxu0
    %v802 = vadd.f32 %v714, %v801
    %v803 = vpop.f32.mrf.mxu0
    %804 = vmatprep.mubr.bf16.mxu0 0
    %805 = vmatmul.mubr.bf16.gmra.mxu0 %v678
    %v806 = vpop.f32.mrf.mxu0
    %v807 = vadd.f32 %v714, %v806
    %v808 = vpop.f32.mrf.mxu0
    %v809 = vpop.f32.mrf.mxu0
    %v810 = vadd.f32 %v714, %v809
    %v811 = vpop.f32.mrf.mxu0
    %812 = vmatprep.mubr.bf16.mxu0 0
    %813 = vmatmul.mubr.bf16.gmra.mxu0 %v679
    %v814 = vpop.f32.mrf.mxu0
    %v815 = vadd.f32 %v714, %v814
    %v816 = vpop.f32.mrf.mxu0
    %v817 = vpop.f32.mrf.mxu0
    %v818 = vadd.f32 %v714, %v817
    %v819 = vpop.f32.mrf.mxu0
    %820 = vmatprep.mubr.bf16.mxu0 0
    %821 = vmatmul.mubr.bf16.gmra.mxu0 %v680
    %v822 = vpop.f32.mrf.mxu0
    %v823 = vadd.f32 %v714, %v822
    %v824 = vpop.f32.mrf.mxu0
    %v825 = vpop.f32.mrf.mxu0
    %v826 = vadd.f32 %v714, %v825
    %v827 = vpop.f32.mrf.mxu0
    %828 = vmatprep.mubr.bf16.mxu0 0
    %829 = vmatmul.mubr.bf16.gmra.mxu0 %v681
    %v830 = vpop.f32.mrf.mxu0
    %v831 = vadd.f32 %v714, %v830
    %v832 = vpop.f32.mrf.mxu0
    %v833 = vpop.f32.mrf.mxu0
    %v834 = vadd.f32 %v714, %v833
    %v835 = vpop.f32.mrf.mxu0
    %836 = vmatprep.mubr.bf16.mxu0 0
    %837 = vmatmul.mubr.bf16.gmra.mxu0 %v682
    %v838 = vpop.f32.mrf.mxu0
    %v839 = vadd.f32 %v714, %v838
    %v840 = vpop.f32.mrf.mxu0
    %v841 = vpop.f32.mrf.mxu0
    %v842 = vadd.f32 %v714, %v841
    %v843 = vpop.f32.mrf.mxu0
    %844 = vmatprep.mubr.bf16.mxu0 0
    %845 = vmatmul.mubr.bf16.gmra.mxu0 %v683
    %v846 = vpop.f32.mrf.mxu0
    %v847 = vadd.f32 %v714, %v846
    %v848 = vpop.f32.mrf.mxu0
    %v849 = vpop.f32.mrf.mxu0
    %v850 = vadd.f32 %v714, %v849
    %v851 = vpop.f32.mrf.mxu0
    %852 = vmatprep.mubr.bf16.mxu0 0
    %853 = vmatmul.mubr.bf16.gmra.mxu0 %v684
    %v854 = vpop.f32.mrf.mxu0
    %v855 = vadd.f32 %v714, %v854
    %v856 = vpop.f32.mrf.mxu0
    %v857 = vpop.f32.mrf.mxu0
    %v858 = vadd.f32 %v714, %v857
    %v859 = vpop.f32.mrf.mxu0
    %860 = vmatprep.mubr.bf16.mxu0 0
    %861 = vmatmul.mubr.bf16.gmra.mxu0 %v685
    %v862 = vpop.f32.mrf.mxu0
    %v863 = vadd.f32 %v714, %v862
    %v864 = vpop.f32.mrf.mxu0
    %v865 = vpop.f32.mrf.mxu0
    %v866 = vadd.f32 %v714, %v865
    %v867 = vpop.f32.mrf.mxu0
    %868 = vmatprep.mubr.bf16.mxu0 0
    %869 = vmatmul.mubr.bf16.gmra.mxu0 %v686
    %v870 = vpop.f32.mrf.mxu0
    %v871 = vadd.f32 %v714, %v870
    %v872 = vpop.f32.mrf.mxu0
    %v873 = vpop.f32.mrf.mxu0
    %v874 = vadd.f32 %v714, %v873
    %v875 = vpop.f32.mrf.mxu0
    %876 = vmatprep.mubr.bf16.mxu0 0
    %877 = vmatmul.mubr.bf16.gmra.mxu0 %v687
    %v878 = vpop.f32.mrf.mxu0
    %v879 = vadd.f32 %v714, %v878
    %v880 = vpop.f32.mrf.mxu0
    %v881 = vpop.f32.mrf.mxu0
    %v882 = vadd.f32 %v714, %v881
    %v883 = vpop.f32.mrf.mxu0
    %884 = vmatprep.mubr.bf16.mxu0 0
    %885 = vmatmul.mubr.bf16.gmra.mxu0 %v688
    %v886 = vpop.f32.mrf.mxu0
    %v887 = vadd.f32 %v714, %v886
    %v888 = vpop.f32.mrf.mxu0
    %v889 = vpop.f32.mrf.mxu0
    %v890 = vadd.f32 %v714, %v889
    %v891 = vpop.f32.mrf.mxu0
    %892 = vmatprep.mubr.bf16.mxu0 0
    %893 = vmatmul.mubr.bf16.gmra.mxu0 %v689
    %v894 = vpop.f32.mrf.mxu0
    %v895 = vadd.f32 %v714, %v894
    %v896 = vpop.f32.mrf.mxu0
    %v897 = vpop.f32.mrf.mxu0
    %v898 = vadd.f32 %v714, %v897
    %v899 = vpop.f32.mrf.mxu0
    %900 = vmatprep.mubr.bf16.mxu0 0
    %901 = vmatmul.mubr.bf16.gmra.mxu0 %v690
    %v902 = vpop.f32.mrf.mxu0
    %v903 = vadd.f32 %v714, %v902
    %v904 = vpop.f32.mrf.mxu0
    %v905 = vpop.f32.mrf.mxu0
    %v906 = vadd.f32 %v714, %v905
    %v907 = vpop.f32.mrf.mxu0
    %908 = vmatprep.mubr.bf16.mxu0 0
    %909 = vmatmul.mubr.bf16.gmra.mxu0 %v691
    %v910 = vpop.f32.mrf.mxu0
    %v911 = vadd.f32 %v714, %v910
    %v912 = vpop.f32.mrf.mxu0
    %v913 = vpop.f32.mrf.mxu0
    %v914 = vadd.f32 %v714, %v913
    %v915 = vpop.f32.mrf.mxu0
    %916 = vmatprep.mubr.bf16.mxu0 0
    %917 = vmatmul.mubr.bf16.gmra.mxu0 %v692
    %v918 = vpop.f32.mrf.mxu0
    %v919 = vadd.f32 %v714, %v918
    %v920 = vpop.f32.mrf.mxu0
    %v921 = vpop.f32.mrf.mxu0
    %v922 = vadd.f32 %v714, %v921
    %v923 = vpop.f32.mrf.mxu0
    %924 = vdwg.mxu0
    %v925 = vmax.f32 %v799, 0.0
    %v926 = vmax.f32 %v802, 0.0
    %v927 = vmax.f32 %v807, 0.0
    %v928 = vmax.f32 %v810, 0.0
    %v929 = vmax.f32 %v815, 0.0
    %v930 = vmax.f32 %v818, 0.0
    %v931 = vmax.f32 %v823, 0.0
    %v932 = vmax.f32 %v826, 0.0
    %v933 = vmax.f32 %v831, 0.0
    %v934 = vmax.f32 %v834, 0.0
    %v935 = vmax.f32 %v839, 0.0
    %v936 = vmax.f32 %v842, 0.0
    %v937 = vmax.f32 %v847, 0.0
    %v938 = vmax.f32 %v850, 0.0
    %v939 = vmax.f32 %v855, 0.0
    %v940 = vmax.f32 %v858, 0.0
    %v941 = vmax.f32 %v863, 0.0
    %v942 = vmax.f32 %v866, 0.0
    %v943 = vmax.f32 %v871, 0.0
    %v944 = vmax.f32 %v874, 0.0
    %v945 = vmax.f32 %v879, 0.0
    %v946 = vmax.f32 %v882, 0.0
    %v947 = vmax.f32 %v887, 0.0
    %v948 = vmax.f32 %v890, 0.0
    %v949 = vmax.f32 %v895, 0.0
    %v950 = vmax.f32 %v898, 0.0
    %v951 = vmax.f32 %v903, 0.0
    %v952 = vmax.f32 %v906, 0.0
    %v953 = vmax.f32 %v911, 0.0
    %v954 = vmax.f32 %v914, 0.0
    %v955 = vmax.f32 %v919, 0.0
    %v956 = vmax.f32 %v922, 0.0
    %v957 = vpack.c.bf16 %v926, %v925
    %v958 = vpack.c.bf16 %v928, %v927
    %v959 = vpack.c.bf16 %v930, %v929
    %v960 = vpack.c.bf16 %v932, %v931
    %v961 = vpack.c.bf16 %v934, %v933
    %v962 = vpack.c.bf16 %v936, %v935
    %v963 = vpack.c.bf16 %v938, %v937
    %v964 = vpack.c.bf16 %v940, %v939
    %v965 = vpack.c.bf16 %v942, %v941
    %v966 = vpack.c.bf16 %v944, %v943
    %v967 = vpack.c.bf16 %v946, %v945
    %v968 = vpack.c.bf16 %v948, %v947
    %v969 = vpack.c.bf16 %v950, %v949
    %v970 = vpack.c.bf16 %v952, %v951
    %v971 = vpack.c.bf16 %v954, %v953
    %v972 = vpack.c.bf16 %v956, %v955
    %v973 = vld [vmem:[%s4] sm:$0xf]
    %v974 = vld [vmem:[%s4 + $0x4] sm:$0xf]
    %v975 = vld [vmem:[%s4 + $0x8] sm:$0xf]
    %v976 = vld [vmem:[%s4 + $0xc] sm:$0xf]
    %v977 = vld [vmem:[%s4 + $0x10] sm:$0xf]
    %v978 = vld [vmem:[%s4 + $0x14] sm:$0xf]
    %v979 = vld [vmem:[%s4 + $0x18] sm:$0xf]
    %v980 = vld [vmem:[%s4 + $0x1c] sm:$0xf]
    %v981 = vld [vmem:[%s4 + $0x20] sm:$0xf]
    %v982 = vld [vmem:[%s4 + $0x24] sm:$0xf]
    %v983 = vld [vmem:[%s4 + $0x28] sm:$0xf]
    %v984 = vld [vmem:[%s4 + $0x2c] sm:$0xf]
    %v985 = vld [vmem:[%s4 + $0x30] sm:$0xf]
    %v986 = vld [vmem:[%s4 + $0x34] sm:$0xf]
    %v987 = vld [vmem:[%s4 + $0x38] sm:$0xf]
    %v988 = vld [vmem:[%s4 + $0x3c] sm:$0xf]
    %v989 = vld [vmem:[%s5] sm:$0x1]
    %v991 = vlaneseq
    %v992 = vshrl.u32 %v991, 7
    %v993 = vsub.s32 0, %v992
    %v994 = vrot.slane %v989, %v993
    %v1012 = vunpack.c.l.b16 %v973
    %v1013 = vunpack.c.l.b16 %v974
    %v1014 = vunpack.c.l.b16 %v975
    %v1015 = vunpack.c.l.b16 %v976
    %v1016 = vunpack.c.l.b16 %v977
    %v1017 = vunpack.c.l.b16 %v978
    %v1018 = vunpack.c.l.b16 %v979
    %v1019 = vunpack.c.l.b16 %v980
    %v1020 = vunpack.c.l.b16 %v981
    %v1021 = vunpack.c.l.b16 %v982
    %v1022 = vunpack.c.l.b16 %v983
    %v1023 = vunpack.c.l.b16 %v984
    %v1024 = vunpack.c.l.b16 %v985
    %v1025 = vunpack.c.l.b16 %v986
    %v1026 = vunpack.c.l.b16 %v987
    %v1027 = vunpack.c.l.b16 %v988
    %v1028 = vpack.c.b16 %v1013, %v1012
    %v1029 = vpack.c.b16 %v1015, %v1014
    %v1030 = vpack.c.b16 %v1017, %v1016
    %v1031 = vpack.c.b16 %v1019, %v1018
    %v1032 = vpack.c.b16 %v1021, %v1020
    %v1033 = vpack.c.b16 %v1023, %v1022
    %v1034 = vpack.c.b16 %v1025, %v1024
    %v1035 = vpack.c.b16 %v1027, %v1026
    %1044 = vmatprep.subr.bf16.mxu0 0
    %1045 = vmatpush1.bf16.msra.mxu0 %v1035
    %1046 = vmatprep.subr.bf16.mxu0 0
    %1047 = vmatpush1.bf16.msra.mxu0 %v1034
    %1048 = vmatprep.subr.bf16.mxu0 0
    %1049 = vmatpush1.bf16.msra.mxu0 %v1033
    %1050 = vmatprep.subr.bf16.mxu0 0
    %1051 = vmatpush1.bf16.msra.mxu0 %v1032
    %1052 = vmatprep.subr.bf16.mxu0 0
    %1053 = vmatpush1.bf16.msra.mxu0 %v1031
    %1054 = vmatprep.subr.bf16.mxu0 0
    %1055 = vmatpush1.bf16.msra.mxu0 %v1030
    %1056 = vmatprep.subr.bf16.mxu0 0
    %1057 = vmatpush1.bf16.msra.mxu0 %v1029
    %1058 = vmatprep.subr.bf16.mxu0 0
    %1059 = vmatpush1.bf16.msra.mxu0 %v1028
    %1060 = vmatprep.subr.bf16.mxu0 0
    %1061 = vmatpush2.bf16.msra.mxu0 0
    %1062 = vmatprep.subr.bf16.mxu0 0
    %1063 = vmatpush2.bf16.msra.mxu0 0
    %1064 = vmatprep.subr.bf16.mxu0 0
    %1065 = vmatpush2.bf16.msra.mxu0 0
    %1066 = vmatprep.subr.bf16.mxu0 0
    %1067 = vmatpush2.bf16.msra.mxu0 0
    %1068 = vmatprep.subr.bf16.mxu0 0
    %1069 = vmatpush2.bf16.msra.mxu0 0
    %1070 = vmatprep.subr.bf16.mxu0 0
    %1071 = vmatpush2.bf16.msra.mxu0 0
    %1072 = vmatprep.subr.bf16.mxu0 0
    %1073 = vmatpush2.bf16.msra.mxu0 0
    %1074 = vmatprep.subr.bf16.mxu0 0
    %1075 = vmatpush2.bf16.msra.mxu0 0
    %1076 = vmatprep.mubr.bf16.mxu0 0
    %1077 = vmatmul.mubr.bf16.gmra.mxu0 %v957
    %v1078 = vpop.f32.mrf.mxu0
    %v1079 = vadd.f32 %v994, %v1078
    %v1080 = vpop.f32.mrf.mxu0
    %v1081 = vpop.f32.mrf.mxu0
    %v1082 = vadd.f32 %v994, %v1081
    %v1083 = vpop.f32.mrf.mxu0
    %1084 = vmatprep.mubr.bf16.mxu0 0
    %1085 = vmatmul.mubr.bf16.gmra.mxu0 %v958
    %v1086 = vpop.f32.mrf.mxu0
    %v1087 = vadd.f32 %v994, %v1086
    %v1088 = vpop.f32.mrf.mxu0
    %v1089 = vpop.f32.mrf.mxu0
    %v1090 = vadd.f32 %v994, %v1089
    %v1091 = vpop.f32.mrf.mxu0
    %1092 = vmatprep.mubr.bf16.mxu0 0
    %1093 = vmatmul.mubr.bf16.gmra.mxu0 %v959
    %v1094 = vpop.f32.mrf.mxu0
    %v1095 = vadd.f32 %v994, %v1094
    %v1096 = vpop.f32.mrf.mxu0
    %v1097 = vpop.f32.mrf.mxu0
    %v1098 = vadd.f32 %v994, %v1097
    %v1099 = vpop.f32.mrf.mxu0
    %1100 = vmatprep.mubr.bf16.mxu0 0
    %1101 = vmatmul.mubr.bf16.gmra.mxu0 %v960
    %v1102 = vpop.f32.mrf.mxu0
    %v1103 = vadd.f32 %v994, %v1102
    %v1104 = vpop.f32.mrf.mxu0
    %v1105 = vpop.f32.mrf.mxu0
    %v1106 = vadd.f32 %v994, %v1105
    %v1107 = vpop.f32.mrf.mxu0
    %1108 = vmatprep.mubr.bf16.mxu0 0
    %1109 = vmatmul.mubr.bf16.gmra.mxu0 %v961
    %v1110 = vpop.f32.mrf.mxu0
    %v1111 = vadd.f32 %v994, %v1110
    %v1112 = vpop.f32.mrf.mxu0
    %v1113 = vpop.f32.mrf.mxu0
    %v1114 = vadd.f32 %v994, %v1113
    %v1115 = vpop.f32.mrf.mxu0
    %1116 = vmatprep.mubr.bf16.mxu0 0
    %1117 = vmatmul.mubr.bf16.gmra.mxu0 %v962
    %v1118 = vpop.f32.mrf.mxu0
    %v1119 = vadd.f32 %v994, %v1118
    %v1120 = vpop.f32.mrf.mxu0
    %v1121 = vpop.f32.mrf.mxu0
    %v1122 = vadd.f32 %v994, %v1121
    %v1123 = vpop.f32.mrf.mxu0
    %1124 = vmatprep.mubr.bf16.mxu0 0
    %1125 = vmatmul.mubr.bf16.gmra.mxu0 %v963
    %v1126 = vpop.f32.mrf.mxu0
    %v1127 = vadd.f32 %v994, %v1126
    %v1128 = vpop.f32.mrf.mxu0
    %v1129 = vpop.f32.mrf.mxu0
    %v1130 = vadd.f32 %v994, %v1129
    %v1131 = vpop.f32.mrf.mxu0
    %1132 = vmatprep.mubr.bf16.mxu0 0
    %1133 = vmatmul.mubr.bf16.gmra.mxu0 %v964
    %v1134 = vpop.f32.mrf.mxu0
    %v1135 = vadd.f32 %v994, %v1134
    %v1136 = vpop.f32.mrf.mxu0
    %v1137 = vpop.f32.mrf.mxu0
    %v1138 = vadd.f32 %v994, %v1137
    %v1139 = vpop.f32.mrf.mxu0
    %1140 = vmatprep.mubr.bf16.mxu0 0
    %1141 = vmatmul.mubr.bf16.gmra.mxu0 %v965
    %v1142 = vpop.f32.mrf.mxu0
    %v1143 = vadd.f32 %v994, %v1142
    %v1144 = vpop.f32.mrf.mxu0
    %v1145 = vpop.f32.mrf.mxu0
    %v1146 = vadd.f32 %v994, %v1145
    %v1147 = vpop.f32.mrf.mxu0
    %1148 = vmatprep.mubr.bf16.mxu0 0
    %1149 = vmatmul.mubr.bf16.gmra.mxu0 %v966
    %v1150 = vpop.f32.mrf.mxu0
    %v1151 = vadd.f32 %v994, %v1150
    %v1152 = vpop.f32.mrf.mxu0
    %v1153 = vpop.f32.mrf.mxu0
    %v1154 = vadd.f32 %v994, %v1153
    %v1155 = vpop.f32.mrf.mxu0
    %1156 = vmatprep.mubr.bf16.mxu0 0
    %1157 = vmatmul.mubr.bf16.gmra.mxu0 %v967
    %v1158 = vpop.f32.mrf.mxu0
    %v1159 = vadd.f32 %v994, %v1158
    %v1160 = vpop.f32.mrf.mxu0
    %v1161 = vpop.f32.mrf.mxu0
    %v1162 = vadd.f32 %v994, %v1161
    %v1163 = vpop.f32.mrf.mxu0
    %1164 = vmatprep.mubr.bf16.mxu0 0
    %1165 = vmatmul.mubr.bf16.gmra.mxu0 %v968
    %v1166 = vpop.f32.mrf.mxu0
    %v1167 = vadd.f32 %v994, %v1166
    %v1168 = vpop.f32.mrf.mxu0
    %v1169 = vpop.f32.mrf.mxu0
    %v1170 = vadd.f32 %v994, %v1169
    %v1171 = vpop.f32.mrf.mxu0
    %1172 = vmatprep.mubr.bf16.mxu0 0
    %1173 = vmatmul.mubr.bf16.gmra.mxu0 %v969
    %v1174 = vpop.f32.mrf.mxu0
    %v1175 = vadd.f32 %v994, %v1174
    %v1176 = vpop.f32.mrf.mxu0
    %v1177 = vpop.f32.mrf.mxu0
    %v1178 = vadd.f32 %v994, %v1177
    %v1179 = vpop.f32.mrf.mxu0
    %1180 = vmatprep.mubr.bf16.mxu0 0
    %1181 = vmatmul.mubr.bf16.gmra.mxu0 %v970
    %v1182 = vpop.f32.mrf.mxu0
    %v1183 = vadd.f32 %v994, %v1182
    %v1184 = vpop.f32.mrf.mxu0
    %v1185 = vpop.f32.mrf.mxu0
    %v1186 = vadd.f32 %v994, %v1185
    %v1187 = vpop.f32.mrf.mxu0
    %1188 = vmatprep.mubr.bf16.mxu0 0
    %1189 = vmatmul.mubr.bf16.gmra.mxu0 %v971
    %v1190 = vpop.f32.mrf.mxu0
    %v1191 = vadd.f32 %v994, %v1190
    %v1192 = vpop.f32.mrf.mxu0
    %v1193 = vpop.f32.mrf.mxu0
    %v1194 = vadd.f32 %v994, %v1193
    %v1195 = vpop.f32.mrf.mxu0
    %1196 = vmatprep.mubr.bf16.mxu0 0
    %1197 = vmatmul.mubr.bf16.gmra.mxu0 %v972
    %v1198 = vpop.f32.mrf.mxu0
    %v1199 = vadd.f32 %v994, %v1198
    %v1200 = vpop.f32.mrf.mxu0
    %v1201 = vpop.f32.mrf.mxu0
    %v1202 = vadd.f32 %v994, %v1201
    %v1203 = vpop.f32.mrf.mxu0
    %1204 = vdwg.mxu0
    %v1205 = vmax.f32 %v1079, 0.0
    %v1206 = vmax.f32 %v1082, 0.0
    %v1207 = vmax.f32 %v1087, 0.0
    %v1208 = vmax.f32 %v1090, 0.0
    %v1209 = vmax.f32 %v1095, 0.0
    %v1210 = vmax.f32 %v1098, 0.0
    %v1211 = vmax.f32 %v1103, 0.0
    %v1212 = vmax.f32 %v1106, 0.0
    %v1213 = vmax.f32 %v1111, 0.0
    %v1214 = vmax.f32 %v1114, 0.0
    %v1215 = vmax.f32 %v1119, 0.0
    %v1216 = vmax.f32 %v1122, 0.0
    %v1217 = vmax.f32 %v1127, 0.0
    %v1218 = vmax.f32 %v1130, 0.0
    %v1219 = vmax.f32 %v1135, 0.0
    %v1220 = vmax.f32 %v1138, 0.0
    %v1221 = vmax.f32 %v1143, 0.0
    %v1222 = vmax.f32 %v1146, 0.0
    %v1223 = vmax.f32 %v1151, 0.0
    %v1224 = vmax.f32 %v1154, 0.0
    %v1225 = vmax.f32 %v1159, 0.0
    %v1226 = vmax.f32 %v1162, 0.0
    %v1227 = vmax.f32 %v1167, 0.0
    %v1228 = vmax.f32 %v1170, 0.0
    %v1229 = vmax.f32 %v1175, 0.0
    %v1230 = vmax.f32 %v1178, 0.0
    %v1231 = vmax.f32 %v1183, 0.0
    %v1232 = vmax.f32 %v1186, 0.0
    %v1233 = vmax.f32 %v1191, 0.0
    %v1234 = vmax.f32 %v1194, 0.0
    %v1235 = vmax.f32 %v1199, 0.0
    %v1236 = vmax.f32 %v1202, 0.0
    %1237 = vst [vmem:[%s7] sm:$0xff] %v1205
    %1238 = vst [vmem:[%s7 + $0x8] sm:$0xff] %v1206
    %1239 = vst [vmem:[%s7 + $0x10] sm:$0xff] %v1207
    %1240 = vst [vmem:[%s7 + $0x18] sm:$0xff] %v1208
    %1241 = vst [vmem:[%s7 + $0x20] sm:$0xff] %v1209
    %1242 = vst [vmem:[%s7 + $0x28] sm:$0xff] %v1210
    %1243 = vst [vmem:[%s7 + $0x30] sm:$0xff] %v1211
    %1244 = vst [vmem:[%s7 + $0x38] sm:$0xff] %v1212
    %1245 = vst [vmem:[%s7 + $0x40] sm:$0xff] %v1213
    %1246 = vst [vmem:[%s7 + $0x48] sm:$0xff] %v1214
    %1247 = vst [vmem:[%s7 + $0x50] sm:$0xff] %v1215
    %1248 = vst [vmem:[%s7 + $0x58] sm:$0xff] %v1216
    %1249 = vst [vmem:[%s7 + $0x60] sm:$0xff] %v1217
    %1250 = vst [vmem:[%s7 + $0x68] sm:$0xff] %v1218
    %1251 = vst [vmem:[%s7 + $0x70] sm:$0xff] %v1219
    %1252 = vst [vmem:[%s7 + $0x78] sm:$0xff] %v1220
    %1253 = vst [vmem:[%s7 + $0x80] sm:$0xff] %v1221
    %1254 = vst [vmem:[%s7 + $0x88] sm:$0xff] %v1222
    %1255 = vst [vmem:[%s7 + $0x90] sm:$0xff] %v1223
    %1256 = vst [vmem:[%s7 + $0x98] sm:$0xff] %v1224
    %1257 = vst [vmem:[%s7 + $0xa0] sm:$0xff] %v1225
    %1258 = vst [vmem:[%s7 + $0xa8] sm:$0xff] %v1226
    %1259 = vst [vmem:[%s7 + $0xb0] sm:$0xff] %v1227
    %1260 = vst [vmem:[%s7 + $0xb8] sm:$0xff] %v1228
    %1261 = vst [vmem:[%s7 + $0xc0] sm:$0xff] %v1229
    %1262 = vst [vmem:[%s7 + $0xc8] sm:$0xff] %v1230
    %1263 = vst [vmem:[%s7 + $0xd0] sm:$0xff] %v1231
    %1264 = vst [vmem:[%s7 + $0xd8] sm:$0xff] %v1232
    %1265 = vst [vmem:[%s7 + $0xe0] sm:$0xff] %v1233
    %1266 = vst [vmem:[%s7 + $0xe8] sm:$0xff] %v1234
    %1267 = vst [vmem:[%s7 + $0xf0] sm:$0xff] %v1235
    %1268 = vst [vmem:[%s7 + $0xf8] sm:$0xff] %v1236
    %v1269 = vld [vmem:[%s6] sm:$0xff]
    %v1270 = vld [vmem:[%s6 + $0x8] sm:$0xff]
    %v1271 = vld [vmem:[%s6 + $0x10] sm:$0xff]
    %v1272 = vld [vmem:[%s6 + $0x18] sm:$0xff]
    %v1273 = vld [vmem:[%s6 + $0x20] sm:$0xff]
    %v1274 = vld [vmem:[%s6 + $0x28] sm:$0xff]
    %v1275 = vld [vmem:[%s6 + $0x30] sm:$0xff]
    %v1276 = vld [vmem:[%s6 + $0x38] sm:$0xff]
    %v1277 = vld [vmem:[%s6 + $0x40] sm:$0xff]
    %v1278 = vld [vmem:[%s6 + $0x48] sm:$0xff]
    %v1279 = vld [vmem:[%s6 + $0x50] sm:$0xff]
    %v1280 = vld [vmem:[%s6 + $0x58] sm:$0xff]
    %v1281 = vld [vmem:[%s6 + $0x60] sm:$0xff]
    %v1282 = vld [vmem:[%s6 + $0x68] sm:$0xff]
    %v1283 = vld [vmem:[%s6 + $0x70] sm:$0xff]
    %v1284 = vld [vmem:[%s6 + $0x78] sm:$0xff]
    %v1285 = vld [vmem:[%s6 + $0x80] sm:$0xff]
    %v1286 = vld [vmem:[%s6 + $0x88] sm:$0xff]
    %v1287 = vld [vmem:[%s6 + $0x90] sm:$0xff]
    %v1288 = vld [vmem:[%s6 + $0x98] sm:$0xff]
    %v1289 = vld [vmem:[%s6 + $0xa0] sm:$0xff]
    %v1290 = vld [vmem:[%s6 + $0xa8] sm:$0xff]
    %v1291 = vld [vmem:[%s6 + $0xb0] sm:$0xff]
    %v1292 = vld [vmem:[%s6 + $0xb8] sm:$0xff]
    %v1293 = vld [vmem:[%s6 + $0xc0] sm:$0xff]
    %v1294 = vld [vmem:[%s6 + $0xc8] sm:$0xff]
    %v1295 = vld [vmem:[%s6 + $0xd0] sm:$0xff]
    %v1296 = vld [vmem:[%s6 + $0xd8] sm:$0xff]
    %v1297 = vld [vmem:[%s6 + $0xe0] sm:$0xff]
    %v1298 = vld [vmem:[%s6 + $0xe8] sm:$0xff]
    %v1299 = vld [vmem:[%s6 + $0xf0] sm:$0xff]
    %v1300 = vld [vmem:[%s6 + $0xf8] sm:$0xff]
    %1302 = vset.pattern.permute.xlu0 0
    %1303 = vperm.xlu0 %1302, %v1269
    %v1304 = vpop.permute.xlu0 %1303
    %1307 = vset.pattern.permute.xlu0 0
    %1308 = vperm.xlu0 %1307, %v1270
    %v1309 = vpop.permute.xlu0 %1308
    %1312 = vset.pattern.permute.xlu0 0
    %1313 = vperm.xlu0 %1312, %v1271
    %v1314 = vpop.permute.xlu0 %1313
    %1317 = vset.pattern.permute.xlu0 0
    %1318 = vperm.xlu0 %1317, %v1272
    %v1319 = vpop.permute.xlu0 %1318
    %1322 = vset.pattern.permute.xlu0 0
    %1323 = vperm.xlu0 %1322, %v1273
    %v1324 = vpop.permute.xlu0 %1323
    %1327 = vset.pattern.permute.xlu0 0
    %1328 = vperm.xlu0 %1327, %v1274
    %v1329 = vpop.permute.xlu0 %1328
    %1332 = vset.pattern.permute.xlu0 0
    %1333 = vperm.xlu0 %1332, %v1275
    %v1334 = vpop.permute.xlu0 %1333
    %1337 = vset.pattern.permute.xlu0 0
    %1338 = vperm.xlu0 %1337, %v1276
    %v1339 = vpop.permute.xlu0 %1338
    %1342 = vset.pattern.permute.xlu0 0
    %1343 = vperm.xlu0 %1342, %v1277
    %v1344 = vpop.permute.xlu0 %1343
    %1347 = vset.pattern.permute.xlu0 0
    %1348 = vperm.xlu0 %1347, %v1278
    %v1349 = vpop.permute.xlu0 %1348
    %1352 = vset.pattern.permute.xlu0 0
    %1353 = vperm.xlu0 %1352, %v1279
    %v1354 = vpop.permute.xlu0 %1353
    %1357 = vset.pattern.permute.xlu0 0
    %1358 = vperm.xlu0 %1357, %v1280
    %v1359 = vpop.permute.xlu0 %1358
    %1362 = vset.pattern.permute.xlu0 0
    %1363 = vperm.xlu0 %1362, %v1281
    %v1364 = vpop.permute.xlu0 %1363
    %1367 = vset.pattern.permute.xlu0 0
    %1368 = vperm.xlu0 %1367, %v1282
    %v1369 = vpop.permute.xlu0 %1368
    %1372 = vset.pattern.permute.xlu0 0
    %1373 = vperm.xlu0 %1372, %v1283
    %v1374 = vpop.permute.xlu0 %1373
    %1377 = vset.pattern.permute.xlu0 0
    %1378 = vperm.xlu0 %1377, %v1284
    %v1379 = vpop.permute.xlu0 %1378
    %1382 = vset.pattern.permute.xlu0 0
    %1383 = vperm.xlu0 %1382, %v1285
    %v1384 = vpop.permute.xlu0 %1383
    %1387 = vset.pattern.permute.xlu0 0
    %1388 = vperm.xlu0 %1387, %v1286
    %v1389 = vpop.permute.xlu0 %1388
    %1392 = vset.pattern.permute.xlu0 0
    %1393 = vperm.xlu0 %1392, %v1287
    %v1394 = vpop.permute.xlu0 %1393
    %1397 = vset.pattern.permute.xlu0 0
    %1398 = vperm.xlu0 %1397, %v1288
    %v1399 = vpop.permute.xlu0 %1398
    %1402 = vset.pattern.permute.xlu0 0
    %1403 = vperm.xlu0 %1402, %v1289
    %v1404 = vpop.permute.xlu0 %1403
    %1407 = vset.pattern.permute.xlu0 0
    %1408 = vperm.xlu0 %1407, %v1290
    %v1409 = vpop.permute.xlu0 %1408
    %1412 = vset.pattern.permute.xlu0 0
    %1413 = vperm.xlu0 %1412, %v1291
    %v1414 = vpop.permute.xlu0 %1413
    %1417 = vset.pattern.permute.xlu0 0
    %1418 = vperm.xlu0 %1417, %v1292
    %v1419 = vpop.permute.xlu0 %1418
    %1422 = vset.pattern.permute.xlu0 0
    %1423 = vperm.xlu0 %1422, %v1293
    %v1424 = vpop.permute.xlu0 %1423
    %1427 = vset.pattern.permute.xlu0 0
    %1428 = vperm.xlu0 %1427, %v1294
    %v1429 = vpop.permute.xlu0 %1428
    %1432 = vset.pattern.permute.xlu0 0
    %1433 = vperm.xlu0 %1432, %v1295
    %v1434 = vpop.permute.xlu0 %1433
    %1437 = vset.pattern.permute.xlu0 0
    %1438 = vperm.xlu0 %1437, %v1296
    %v1439 = vpop.permute.xlu0 %1438
    %1442 = vset.pattern.permute.xlu0 0
    %1443 = vperm.xlu0 %1442, %v1297
    %v1444 = vpop.permute.xlu0 %1443
    %1447 = vset.pattern.permute.xlu0 0
    %1448 = vperm.xlu0 %1447, %v1298
    %v1449 = vpop.permute.xlu0 %1448
    %1452 = vset.pattern.permute.xlu0 0
    %1453 = vperm.xlu0 %1452, %v1299
    %v1454 = vpop.permute.xlu0 %1453
    %1457 = vset.pattern.permute.xlu0 0
    %1458 = vperm.xlu0 %1457, %v1300
    %v1459 = vpop.permute.xlu0 %1458
    %v1461 = vmul.f32 %v1205, %v1304
    %v1462 = vmul.f32 %v1206, %v1309
    %v1463 = vmul.f32 %v1207, %v1314
    %v1464 = vmul.f32 %v1208, %v1319
    %v1465 = vmul.f32 %v1209, %v1324
    %v1466 = vmul.f32 %v1210, %v1329
    %v1467 = vmul.f32 %v1211, %v1334
    %v1468 = vmul.f32 %v1212, %v1339
    %v1469 = vmul.f32 %v1213, %v1344
    %v1470 = vmul.f32 %v1214, %v1349
    %v1471 = vmul.f32 %v1215, %v1354
    %v1472 = vmul.f32 %v1216, %v1359
    %v1473 = vmul.f32 %v1217, %v1364
    %v1474 = vmul.f32 %v1218, %v1369
    %v1475 = vmul.f32 %v1219, %v1374
    %v1476 = vmul.f32 %v1220, %v1379
    %v1477 = vmul.f32 %v1221, %v1384
    %v1478 = vmul.f32 %v1222, %v1389
    %v1479 = vmul.f32 %v1223, %v1394
    %v1480 = vmul.f32 %v1224, %v1399
    %v1481 = vmul.f32 %v1225, %v1404
    %v1482 = vmul.f32 %v1226, %v1409
    %v1483 = vmul.f32 %v1227, %v1414
    %v1484 = vmul.f32 %v1228, %v1419
    %v1485 = vmul.f32 %v1229, %v1424
    %v1486 = vmul.f32 %v1230, %v1429
    %v1487 = vmul.f32 %v1231, %v1434
    %v1488 = vmul.f32 %v1232, %v1439
    %v1489 = vmul.f32 %v1233, %v1444
    %v1490 = vmul.f32 %v1234, %v1449
    %v1491 = vmul.f32 %v1235, %v1454
    %v1492 = vmul.f32 %v1236, %v1459
    %v1493 = vadd.f32 %v1461, %v1462
    %v1494 = vadd.f32 %v1493, %v1463
    %v1495 = vadd.f32 %v1494, %v1464
    %v1496 = vadd.f32 %v1495, %v1465
    %v1497 = vadd.f32 %v1496, %v1466
    %v1498 = vadd.f32 %v1497, %v1467
    %v1499 = vadd.f32 %v1498, %v1468
    %v1500 = vadd.f32 %v1499, %v1469
    %v1501 = vadd.f32 %v1500, %v1470
    %v1502 = vadd.f32 %v1501, %v1471
    %v1503 = vadd.f32 %v1502, %v1472
    %v1504 = vadd.f32 %v1503, %v1473
    %v1505 = vadd.f32 %v1504, %v1474
    %v1506 = vadd.f32 %v1505, %v1475
    %v1507 = vadd.f32 %v1506, %v1476
    %v1508 = vadd.f32 %v1507, %v1477
    %v1509 = vadd.f32 %v1508, %v1478
    %v1510 = vadd.f32 %v1509, %v1479
    %v1511 = vadd.f32 %v1510, %v1480
    %v1512 = vadd.f32 %v1511, %v1481
    %v1513 = vadd.f32 %v1512, %v1482
    %v1514 = vadd.f32 %v1513, %v1483
    %v1515 = vadd.f32 %v1514, %v1484
    %v1516 = vadd.f32 %v1515, %v1485
    %v1517 = vadd.f32 %v1516, %v1486
    %v1518 = vadd.f32 %v1517, %v1487
    %v1519 = vadd.f32 %v1518, %v1488
    %v1520 = vadd.f32 %v1519, %v1489
    %v1521 = vadd.f32 %v1520, %v1490
    %v1522 = vadd.f32 %v1521, %v1491
    %v1523 = vadd.f32 %v1522, %v1492
    %v1524 = vrot.slane %v1523, 4
    %v1525 = vadd.f32 %v1523, %v1524
    %v1526 = vrot.slane %v1525, 2
    %v1527 = vadd.f32 %v1525, %v1526
    %v1528 = vrot.slane %v1527, 1
    %v1529 = vadd.f32 %v1527, %v1528
    %v1530 = vmul.f32 %v1205, %v1205
    %v1531 = vmul.f32 %v1206, %v1206
    %v1532 = vmul.f32 %v1207, %v1207
    %v1533 = vmul.f32 %v1208, %v1208
    %v1534 = vmul.f32 %v1209, %v1209
    %v1535 = vmul.f32 %v1210, %v1210
    %v1536 = vmul.f32 %v1211, %v1211
    %v1537 = vmul.f32 %v1212, %v1212
    %v1538 = vmul.f32 %v1213, %v1213
    %v1539 = vmul.f32 %v1214, %v1214
    %v1540 = vmul.f32 %v1215, %v1215
    %v1541 = vmul.f32 %v1216, %v1216
    %v1542 = vmul.f32 %v1217, %v1217
    %v1543 = vmul.f32 %v1218, %v1218
    %v1544 = vmul.f32 %v1219, %v1219
    %v1545 = vmul.f32 %v1220, %v1220
    %v1546 = vmul.f32 %v1221, %v1221
    %v1547 = vmul.f32 %v1222, %v1222
    %v1548 = vmul.f32 %v1223, %v1223
    %v1549 = vmul.f32 %v1224, %v1224
    %v1550 = vmul.f32 %v1225, %v1225
    %v1551 = vmul.f32 %v1226, %v1226
    %v1552 = vmul.f32 %v1227, %v1227
    %v1553 = vmul.f32 %v1228, %v1228
    %v1554 = vmul.f32 %v1229, %v1229
    %v1555 = vmul.f32 %v1230, %v1230
    %v1556 = vmul.f32 %v1231, %v1231
    %v1557 = vmul.f32 %v1232, %v1232
    %v1558 = vmul.f32 %v1233, %v1233
    %v1559 = vmul.f32 %v1234, %v1234
    %v1560 = vmul.f32 %v1235, %v1235
    %v1561 = vmul.f32 %v1236, %v1236
    %v1562 = vmul.f32 %v1530, %v1304
    %v1563 = vmul.f32 %v1531, %v1309
    %v1564 = vmul.f32 %v1532, %v1314
    %v1565 = vmul.f32 %v1533, %v1319
    %v1566 = vmul.f32 %v1534, %v1324
    %v1567 = vmul.f32 %v1535, %v1329
    %v1568 = vmul.f32 %v1536, %v1334
    %v1569 = vmul.f32 %v1537, %v1339
    %v1570 = vmul.f32 %v1538, %v1344
    %v1571 = vmul.f32 %v1539, %v1349
    %v1572 = vmul.f32 %v1540, %v1354
    %v1573 = vmul.f32 %v1541, %v1359
    %v1574 = vmul.f32 %v1542, %v1364
    %v1575 = vmul.f32 %v1543, %v1369
    %v1576 = vmul.f32 %v1544, %v1374
    %v1577 = vmul.f32 %v1545, %v1379
    %v1578 = vmul.f32 %v1546, %v1384
    %v1579 = vmul.f32 %v1547, %v1389
    %v1580 = vmul.f32 %v1548, %v1394
    %v1581 = vmul.f32 %v1549, %v1399
    %v1582 = vmul.f32 %v1550, %v1404
    %v1583 = vmul.f32 %v1551, %v1409
    %v1584 = vmul.f32 %v1552, %v1414
    %v1585 = vmul.f32 %v1553, %v1419
    %v1586 = vmul.f32 %v1554, %v1424
    %v1587 = vmul.f32 %v1555, %v1429
    %v1588 = vmul.f32 %v1556, %v1434
    %v1589 = vmul.f32 %v1557, %v1439
    %v1590 = vmul.f32 %v1558, %v1444
    %v1591 = vmul.f32 %v1559, %v1449
    %v1592 = vmul.f32 %v1560, %v1454
    %v1593 = vmul.f32 %v1561, %v1459
    %v1594 = vadd.f32 %v1562, %v1563
    %v1595 = vadd.f32 %v1594, %v1564
    %v1596 = vadd.f32 %v1595, %v1565
    %v1597 = vadd.f32 %v1596, %v1566
    %v1598 = vadd.f32 %v1597, %v1567
    %v1599 = vadd.f32 %v1598, %v1568
    %v1600 = vadd.f32 %v1599, %v1569
    %v1601 = vadd.f32 %v1600, %v1570
    %v1602 = vadd.f32 %v1601, %v1571
    %v1603 = vadd.f32 %v1602, %v1572
    %v1604 = vadd.f32 %v1603, %v1573
    %v1605 = vadd.f32 %v1604, %v1574
    %v1606 = vadd.f32 %v1605, %v1575
    %v1607 = vadd.f32 %v1606, %v1576
    %v1608 = vadd.f32 %v1607, %v1577
    %v1609 = vadd.f32 %v1608, %v1578
    %v1610 = vadd.f32 %v1609, %v1579
    %v1611 = vadd.f32 %v1610, %v1580
    %v1612 = vadd.f32 %v1611, %v1581
    %v1613 = vadd.f32 %v1612, %v1582
    %v1614 = vadd.f32 %v1613, %v1583
    %v1615 = vadd.f32 %v1614, %v1584
    %v1616 = vadd.f32 %v1615, %v1585
    %v1617 = vadd.f32 %v1616, %v1586
    %v1618 = vadd.f32 %v1617, %v1587
    %v1619 = vadd.f32 %v1618, %v1588
    %v1620 = vadd.f32 %v1619, %v1589
    %v1621 = vadd.f32 %v1620, %v1590
    %v1622 = vadd.f32 %v1621, %v1591
    %v1623 = vadd.f32 %v1622, %v1592
    %v1624 = vadd.f32 %v1623, %v1593
    %v1625 = vrot.slane %v1624, 4
    %v1626 = vadd.f32 %v1624, %v1625
    %v1627 = vrot.slane %v1626, 2
    %v1628 = vadd.f32 %v1626, %v1627
    %v1629 = vrot.slane %v1628, 1
    %v1630 = vadd.f32 %v1628, %v1629
    %vm1631 = vcmask 1040384
    %v1632 = vsel %vm1631, %v1529, %v1630
    %vm1633 = vcmask 1041408
    %v1634 = vsel %vm1633, %v1632, 0.0
    %1635 = vst [vmem:[%s8] sm:$0xff] %v1634
  $region37: #{_forward_padded.7} parent=0 // pred_fallthru
    _
  // Predicated region
  $region38: #{_forward_padded.7} parent=0 // pred_check
    _
  $region39: #{_forward_padded.7} parent=0 // pred_check_branch
    %1637 = sbr.rel (0) target = $region41
  $region40: #{_forward_padded.7} parent=0 // pred_region
    _
  $region41: #{_forward_padded.7} parent=0 // pred_fallthru
    _
  // Predicated region
  $region42: #{_forward_padded.7} parent=0 // pred_check
    _
  $region43: #{_forward_padded.7} parent=0 // pred_check_branch
    %1639 = sbr.rel (0) target = $region45
  $region44: #{_forward_padded.7} parent=0 // pred_region
    _
  $region45: #{_forward_padded.7} parent=0 // pred_fallthru
    _
  // Predicated region
  $region46: #{_forward_padded.7} parent=0 // pred_check
    _
  $region47: #{_forward_padded.7} parent=0 // pred_check_branch
    %1641 = sbr.rel (0) target = $region49
  $region48: #{_forward_padded.7} parent=0 // pred_region
    _
  $region49: #{_forward_padded.7} parent=0 // pred_fallthru
    _
  // Predicated region
  $region50: #{_forward_padded.7} parent=0 // pred_check
    _
  $region51: #{_forward_padded.7} parent=0 // pred_check_branch
    %1643 = sbr.rel (0) target = $region53
  $region52: #{_forward_padded.7} parent=0 // pred_region
    _
  $region53: #{_forward_padded.7} parent=0 // pred_fallthru
    _

</llo_original>
